<compile_context>
chip_gen: v5e
topology: v5e:2x2
jax: 0.10.0
libtpu: 0.0.40
codegen_flags: <defaults>
</compile_context>

<pallas_src>
import functools

import jax
import jax.numpy as jnp
from jax import lax
from jax.experimental import pallas as pl
from jax.experimental.pallas import tpu as pltpu

LANE = 128   # TPU lane width
BPB = 8      # batch rows per grid block (one f32 sublane tile)


# -----------------------------------------------------------------------------
# Fused Pallas kernel (one batch block of 8 per grid step)
# -----------------------------------------------------------------------------
def _lenet5_kernel(rows1_ref, w1_ref, w2_ref, w3_ref, w4_ref, b_ref, out_ref,
                   *, NP1B, Hp1, Wp1, Ho2, Wo2, Hp2, Wp2, k2h, k2w, NP2):
    f32 = jnp.float32
    C = LANE
    b = b_ref[...]                                     # (8, 128) merged biases

    # ---- conv1 over the 4 pool-1 window members, fused with the 2x2 max ----
    w1 = w1_ref[...]
    m1 = jnp.dot(rows1_ref[pl.ds(0, NP1B), :], w1, preferred_element_type=f32)
    for c in range(1, 4):
        part = jnp.dot(rows1_ref[pl.ds(c * NP1B, NP1B), :], w1,
                       preferred_element_type=f32)
        m1 = jnp.maximum(m1, part)
    # bias + ReLU hoisted out of the pool max (both are monotone).
    p1 = jnp.maximum(m1 + b[0:1, :], 0.0)              # rows (hp1, wp1, b)
    p1 = p1.reshape(Hp1, Wp1, BPB, C)                  # f32; BPB=8 keeps tiles

    # ---- conv2: sum over kernel offsets; LHS = static window slices of p1 ---
    NB = Ho2 * Wo2 * BPB
    acc2 = None
    for k in range(k2h * k2w):
        ki, kj = k // k2w, k % k2w
        lhs = p1[ki:ki + Ho2, kj:kj + Wo2].reshape(NB, C).astype(jnp.bfloat16)
        d = jnp.dot(lhs, w2_ref[k], preferred_element_type=f32)
        acc2 = d if acc2 is None else acc2 + d         # rows (ho2, wo2, b)

    # ---- 2x2 max-pool #2 (bias + ReLU hoisted after the max) ----------------
    a2 = acc2.reshape(Ho2 * Wp2, 2, BPB, C)            # (.., d2w, b, c)
    m2 = jnp.maximum(a2[:, 0], a2[:, 1])               # max over d2w
    m2 = m2.reshape(Hp2, 2, Wp2 * BPB, C)              # (hp2, d2h, wp2*b, c)
    m2 = jnp.maximum(m2[:, 0], m2[:, 1]).reshape(NP2 * BPB, C)   # max over d2h
    feat = jnp.maximum(m2 + b[1:2, :], 0.0)            # rows (hp2, wp2, b)
    feat = feat.reshape(NP2, BPB, C)

    # ---- flatten + fc1 + ReLU: sum over pool-2 spatial positions ------------
    acc3 = None
    for s in range(NP2):
        d = jnp.dot(feat[s].astype(jnp.bfloat16), w3_ref[s],
                    preferred_element_type=f32)
        acc3 = d if acc3 is None else acc3 + d
    h3 = jnp.maximum(acc3 + b[2:3, :], 0.0).astype(jnp.bfloat16)

    # ---- fc2 logits: lane-dense (8, 128) unmasked f32 store -----------------
    out_ref[...] = (jnp.dot(h3, w4_ref[...], preferred_element_type=f32)
                    + b[3:4, :])


# -----------------------------------------------------------------------------
# One-time parameter preparation (gates, packing, padding, bf16 casts)
# -----------------------------------------------------------------------------
def hard_concrete_test_gate(log_alpha, gamma=-0.1, zeta=1.1):
    """Deterministic (test-time) hard-concrete gate."""
    return jnp.clip(jax.nn.sigmoid(log_alpha) * (zeta - gamma) + gamma, 0.0, 1.0)


def prepare_params(params, *, input_shape):
    """Apply test-time gates and pack/pad/cast the weights once (inference)."""
    Cin, H, W = input_shape
    w1 = params["conv1_w"] * hard_concrete_test_gate(params["conv1_la"])
    w2 = params["conv2_w"] * hard_concrete_test_gate(params["conv2_la"])
    w3 = params["fc1_w"] * hard_concrete_test_gate(params["fc1_la"])
    w4 = params["fc2_w"] * hard_concrete_test_gate(params["fc2_la"])
    b1, b2, b3, b4 = (params["conv1_b"], params["conv2_b"],
                      params["fc1_b"], params["fc2_b"])

    C1, _, k1h, k1w = w1.shape
    C2, _, k2h, k2w = w2.shape
    F1, NC = w3.shape[0], w4.shape[0]
    K1 = Cin * k1h * k1w

    Ho1, Wo1 = H - k1h + 1, W - k1w + 1                # conv1 output
    assert Ho1 % 2 == 0 and Wo1 % 2 == 0, "pool1 must tile evenly"
    Hp1, Wp1 = Ho1 // 2, Wo1 // 2                      # pool1 output
    Ho2, Wo2 = Hp1 - k2h + 1, Wp1 - k2w + 1            # conv2 output
    assert Ho2 % 2 == 0 and Wo2 % 2 == 0, "pool2 must tile evenly"
    Hp2, Wp2 = Ho2 // 2, Wo2 // 2                      # pool2 output
    NP2 = Hp2 * Wp2
    assert w3.shape[1] == C2 * NP2, "fc1 in_features mismatch"
    for d in (K1, C1, C2, F1, NC):
        assert d <= LANE, "channel/feature dims must fit in 128 lanes"

    K1P = max(16, -(-K1 // 16) * 16)                   # bf16 sublane multiple

    def pad2(a, rows, cols):
        return jnp.pad(a, ((0, rows - a.shape[0]), (0, cols - a.shape[1])))

    # K ordered (ci, i, j) to match torch weight.reshape(Cout, -1)
    w1p = pad2(w1.reshape(C1, K1).T, K1P, LANE).astype(jnp.bfloat16)
    w2blk = w2.transpose(2, 3, 1, 0).reshape(k2h * k2w, C1, C2)
    w2p = jnp.pad(w2blk, ((0, 0), (0, LANE - C1), (0, LANE - C2))).astype(jnp.bfloat16)
    w3blk = w3.reshape(F1, C2, Hp2, Wp2).transpose(2, 3, 1, 0).reshape(NP2, C2, F1)
    w3p = jnp.pad(w3blk, ((0, 0), (0, LANE - C2), (0, LANE - F1))).astype(jnp.bfloat16)
    w4p = pad2(w4.T, LANE, LANE).astype(jnp.bfloat16)

    # Merge the four biases into one (8, 128) f32 operand (one aligned DMA).
    b_all = jnp.zeros((8, LANE), jnp.float32)
    b_all = b_all.at[0, :C1].set(b1).at[1, :C2].set(b2)
    b_all = b_all.at[2, :F1].set(b3).at[3, :NC].set(b4)

    arrays = {"w1p": w1p, "w2p": w2p, "w3p": w3p, "w4p": w4p, "b": b_all}
    meta = dict(Cin=int(Cin), H=int(H), W=int(W),
                k1h=int(k1h), k1w=int(k1w), k2h=int(k2h), k2w=int(k2w),
                K1=int(K1), K1P=int(K1P),
                Ho1=int(Ho1), Wo1=int(Wo1), Hp1=int(Hp1), Wp1=int(Wp1),
                Ho2=int(Ho2), Wo2=int(Wo2), Hp2=int(Hp2), Wp2=int(Wp2),
                NP2=int(NP2), NC=int(NC))
    return arrays, meta


# -----------------------------------------------------------------------------
# Forward wrapper (reshape/transpose-only im2col, no gather, no duplication)
# -----------------------------------------------------------------------------
def l0_lenet5_forward(x, prepped, *, meta):
    B, Cin, H, W = x.shape
    assert (Cin, H, W) == (meta["Cin"], meta["H"], meta["W"])
    k1h, k1w = meta["k1h"], meta["k1w"]
    Ho1, Wo1 = meta["Ho1"], meta["Wo1"]
    Hp1, Wp1 = meta["Hp1"], meta["Wp1"]
    K1, K1P = meta["K1"], meta["K1P"]
    K2SP = meta["k2h"] * meta["k2w"]
    NP2 = meta["NP2"]

    BB = -(-B // BPB)                                  # batch blocks of 8
    Bp = BB * BPB
    NP1B = Hp1 * Wp1 * BPB                             # rows per pool-1 chunk

    # conv1 im2col via shifted slices only; then a pure reshape/transpose to
    # the pool-ordered row layout (bblk, d1h, d1w, hp1, wp1, b).  No gather,
    # no duplication, 32-lane bf16.
    xp = jnp.pad(x.astype(jnp.float32), ((0, Bp - B), (0, 0), (0, 0), (0, 0)))
    patches = jnp.stack(
        [xp[:, ci, i:i + Ho1, j:j + Wo1]
         for ci in range(Cin) for i in range(k1h) for j in range(k1w)],
        axis=-1)                                       # (Bp, Ho1, Wo1, K1)
    p = patches.reshape(BB, BPB, Hp1, 2, Wp1, 2, K1)
    p = p.transpose(0, 3, 5, 2, 4, 1, 6)               # (BB, d1h, d1w, hp1, wp1, b, K1)
    rows1 = p.reshape(BB * 4 * NP1B, K1)
    rows1 = jnp.pad(rows1, ((0, 0), (0, K1P - K1))).astype(jnp.bfloat16)

    kernel = functools.partial(
        _lenet5_kernel, NP1B=NP1B, Hp1=Hp1, Wp1=Wp1,
        Ho2=meta["Ho2"], Wo2=meta["Wo2"], Hp2=meta["Hp2"], Wp2=meta["Wp2"],
        k2h=meta["k2h"], k2w=meta["k2w"], NP2=NP2)

    out = pl.pallas_call(
        kernel,
        out_shape=jax.ShapeDtypeStruct((Bp, LANE), jnp.float32),
        grid=(BB,),
        in_specs=[
            pl.BlockSpec((4 * NP1B, K1P), lambda g: (g, 0)),        # im2col rows
            pl.BlockSpec((K1P, LANE), lambda g: (0, 0)),            # w1
            pl.BlockSpec((K2SP, LANE, LANE), lambda g: (0, 0, 0)),  # w2 blocks
            pl.BlockSpec((NP2, LANE, LANE), lambda g: (0, 0, 0)),   # w3 blocks
            pl.BlockSpec((LANE, LANE), lambda g: (0, 0)),           # w4
            pl.BlockSpec((8, LANE), lambda g: (0, 0)),              # merged biases
        ],
        out_specs=pl.BlockSpec((BPB, LANE), lambda g: (g, 0)),
        compiler_params=pltpu.CompilerParams(
            dimension_semantics=("parallel",),          # v7x: split batch on 2 TCs
        ),
    )(rows1, prepped["w1p"], prepped["w2p"], prepped["w3p"], prepped["w4p"],
      prepped["b"])
    return out[:B, :meta["NC"]]


# -----------------------------------------------------------------------------
# Plain-JAX reference (for a loose correctness check of the fused kernel)
# -----------------------------------------------------------------------------
def _maxpool2x2_ref(y):
    B, C, H, W = y.shape
    y = y[:, :, :(H // 2) * 2, :(W // 2) * 2]
    return y.reshape(B, C, H // 2, 2, W // 2, 2).max(axis=(3, 5))


def _reference_forward(x, params):
    w1 = params["conv1_w"] * hard_concrete_test_gate(params["conv1_la"])
    w2 = params["conv2_w"] * hard_concrete_test_gate(params["conv2_la"])
    w3 = params["fc1_w"] * hard_concrete_test_gate(params["fc1_la"])
    w4 = params["fc2_w"] * hard_concrete_test_gate(params["fc2_la"])
    dn = ("NCHW", "OIHW", "NCHW")
    y = lax.conv_general_dilated(x, w1, (1, 1), "VALID", dimension_numbers=dn)
    y = jnp.maximum(y + params["conv1_b"][None, :, None, None], 0.0)
    y = _maxpool2x2_ref(y)
    y = lax.conv_general_dilated(y, w2, (1, 1), "VALID", dimension_numbers=dn)
    y = jnp.maximum(y + params["conv2_b"][None, :, None, None], 0.0)
    y = _maxpool2x2_ref(y)
    y = y.reshape(y.shape[0], -1)
    y = jnp.maximum(y @ w3.T + params["fc1_b"], 0.0)
    return y @ w4.T + params["fc2_b"]


# -----------------------------------------------------------------------------
# Parameter init (PyTorch layouts)
# -----------------------------------------------------------------------------
def init_params(key, *, in_ch, conv_dims, kernel_sizes, flat_fts, fc_dims,
                num_classes):
    ks = jax.random.split(key, 12)
    k1, k2 = kernel_sizes

    def w_init(k, shape, fan_in):
        scale = (2.0 / fan_in) ** 0.5
        return scale * jax.random.normal(k, shape, dtype=jnp.float32)

    return {
        "conv1_w": w_init(ks[0], (conv_dims[0], in_ch, k1, k1), in_ch * k1 * k1),
        "conv1_b": 0.01 * jax.random.normal(ks[1], (conv_dims[0],), jnp.float32),
        "conv1_la": 0.01 * jax.random.normal(ks[2], (conv_dims[0], in_ch, k1, k1), dtype=jnp.float32),
        "conv2_w": w_init(ks[3], (conv_dims[1], conv_dims[0], k2, k2), conv_dims[0] * k2 * k2),
        "conv2_b": 0.01 * jax.random.normal(ks[4], (conv_dims[1],), jnp.float32),
        "conv2_la": 0.01 * jax.random.normal(ks[5], (conv_dims[1], conv_dims[0], k2, k2), dtype=jnp.float32),
        "fc1_w": w_init(ks[6], (fc_dims, flat_fts), flat_fts),
        "fc1_b": 0.01 * jax.random.normal(ks[7], (fc_dims,), jnp.float32),
        "fc1_la": 0.01 * jax.random.normal(ks[8], (fc_dims, flat_fts), dtype=jnp.float32),
        "fc2_w": w_init(ks[9], (num_classes, fc_dims), fc_dims),
        "fc2_b": 0.01 * jax.random.normal(ks[10], (num_classes,), jnp.float32),
        "fc2_la": 0.01 * jax.random.normal(ks[11], (num_classes, fc_dims), dtype=jnp.float32),
    }


if __name__ == "__main__":
    # Small shapes consistent with L0LeNet5 (kernel=5, two conv+pool stages,
    # two fc layers): (1,16,16) -> conv5 -> 12 -> pool -> 6 -> conv5 -> 2
    # -> pool -> 1  =>  flat_fts = conv_dims[1].
    batch = 2
    in_ch, H, W = 1, 16, 16
    conv_dims = (8, 16)
    kernel_sizes = (5, 5)
    fc_dims = 32
    num_classes = 10
    flat_fts = conv_dims[1] * 1 * 1

    key = jax.random.PRNGKey(0)
    kx, kp = jax.random.split(key)
    x = jax.random.normal(kx, (batch, in_ch, H, W), dtype=jnp.float32)
    params = init_params(kp, in_ch=in_ch, conv_dims=conv_dims,
                         kernel_sizes=kernel_sizes, flat_fts=flat_fts,
                         fc_dims=fc_dims, num_classes=num_classes)

    # One-time weight preparation (gates, packing, padding, bf16 casts).
    prepped, meta = prepare_params(params, input_shape=(in_ch, H, W))
    prepped = jax.block_until_ready(prepped)

    fwd = jax.jit(functools.partial(l0_lenet5_forward, meta=meta))
    out = jax.block_until_ready(fwd(x, prepped))
    assert out.shape == (batch, num_classes), out.shape
    assert bool(jnp.all(jnp.isfinite(out)))

    # Loose check vs. f32 XLA reference (kernel uses bf16 MXU operands).
    ref = _reference_forward(x, params)
    err = float(jnp.max(jnp.abs(out - ref)))
    assert err < 0.1, f"max abs diff vs reference too large: {err}"

    print("KERNEL_OK")
</pallas_src>

<mosaic_0001>
module attributes {stable_mosaic.version = 11 : i64} {
  func.func @_lenet5_kernel(%arg0: i32, %arg1: memref<1152x32xbf16, #tpu.memory_space<vmem>>, %arg2: memref<32x128xbf16, #tpu.memory_space<vmem>>, %arg3: memref<25x128x128xbf16, #tpu.memory_space<vmem>>, %arg4: memref<1x128x128xbf16, #tpu.memory_space<vmem>>, %arg5: memref<128x128xbf16, #tpu.memory_space<vmem>>, %arg6: memref<8x128xf32, #tpu.memory_space<vmem>>, %arg7: memref<8x128xf32, #tpu.memory_space<vmem>>) attributes {dimension_semantics = [#tpu.dimension_semantics<parallel>], iteration_bounds = array<i64: 1>, scalar_prefetch = 0 : i64, scratch_operands = 0 : i64, tpu.core_type = #tpu.core_type<tc>, window_params = [{transform_indices = @transform_0, window_bounds = array<i64: 1152, 32>}, {pipeline_mode = #tpu.pipeline_mode<synchronous>, transform_indices = @transform_1, window_bounds = array<i64: 32, 128>}, {pipeline_mode = #tpu.pipeline_mode<synchronous>, transform_indices = @transform_2, window_bounds = array<i64: 25, 128, 128>}, {pipeline_mode = #tpu.pipeline_mode<synchronous>, transform_indices = @transform_3, window_bounds = array<i64: 1, 128, 128>}, {pipeline_mode = #tpu.pipeline_mode<synchronous>, transform_indices = @transform_4, window_bounds = array<i64: 128, 128>}, {pipeline_mode = #tpu.pipeline_mode<synchronous>, transform_indices = @transform_5, window_bounds = array<i64: 8, 128>}, {transform_indices = @transform_6, window_bounds = array<i64: 8, 128>}]} {
    %c0 = arith.constant 0 : index
    %c0_0 = arith.constant 0 : index
    %0 = vector.load %arg6[%c0, %c0_0] : memref<8x128xf32, #tpu.memory_space<vmem>>, vector<8x128xf32>
    %c0_1 = arith.constant 0 : index
    %c0_2 = arith.constant 0 : index
    %1 = vector.load %arg2[%c0_1, %c0_2] : memref<32x128xbf16, #tpu.memory_space<vmem>>, vector<32x128xbf16>
    %c0_3 = arith.constant 0 : index
    %c0_4 = arith.constant 0 : index
    %2 = vector.load %arg1[%c0_3, %c0_4] : memref<1152x32xbf16, #tpu.memory_space<vmem>>, vector<288x32xbf16>
    %cst = arith.constant dense<0.000000e+00> : vector<288x128xf32>
    %3 = tpu.matmul %2, %1, %cst {dimension_numbers = #tpu.dot_dimension_numbers<[1], [0], [0], [1], [0, 0, 1, 1], [], []>} : vector<288x32xbf16>, vector<32x128xbf16>, vector<288x128xf32> -> vector<288x128xf32>
    %c288 = arith.constant 288 : index
    %c0_5 = arith.constant 0 : index
    %4 = vector.load %arg1[%c288, %c0_5] : memref<1152x32xbf16, #tpu.memory_space<vmem>>, vector<288x32xbf16>
    %cst_6 = arith.constant dense<0.000000e+00> : vector<288x128xf32>
    %5 = tpu.matmul %4, %1, %cst_6 {dimension_numbers = #tpu.dot_dimension_numbers<[1], [0], [0], [1], [0, 0, 1, 1], [], []>} : vector<288x32xbf16>, vector<32x128xbf16>, vector<288x128xf32> -> vector<288x128xf32>
    %6 = arith.maximumf %3, %5 : vector<288x128xf32>
    %c576 = arith.constant 576 : index
    %c0_7 = arith.constant 0 : index
    %7 = vector.load %arg1[%c576, %c0_7] : memref<1152x32xbf16, #tpu.memory_space<vmem>>, vector<288x32xbf16>
    %cst_8 = arith.constant dense<0.000000e+00> : vector<288x128xf32>
    %8 = tpu.matmul %7, %1, %cst_8 {dimension_numbers = #tpu.dot_dimension_numbers<[1], [0], [0], [1], [0, 0, 1, 1], [], []>} : vector<288x32xbf16>, vector<32x128xbf16>, vector<288x128xf32> -> vector<288x128xf32>
    %9 = arith.maximumf %6, %8 : vector<288x128xf32>
    %c864 = arith.constant 864 : index
    %c0_9 = arith.constant 0 : index
    %10 = vector.load %arg1[%c864, %c0_9] : memref<1152x32xbf16, #tpu.memory_space<vmem>>, vector<288x32xbf16>
    %cst_10 = arith.constant dense<0.000000e+00> : vector<288x128xf32>
    %11 = tpu.matmul %10, %1, %cst_10 {dimension_numbers = #tpu.dot_dimension_numbers<[1], [0], [0], [1], [0, 0, 1, 1], [], []>} : vector<288x32xbf16>, vector<32x128xbf16>, vector<288x128xf32> -> vector<288x128xf32>
    %12 = arith.maximumf %9, %11 : vector<288x128xf32>
    %13 = vector.extract_strided_slice %0 {offsets = [0, 0], sizes = [1, 128], strides = [1, 1]} : vector<8x128xf32> to vector<1x128xf32>
    %14 = vector.broadcast %13 : vector<1x128xf32> to vector<288x128xf32>
    %15 = arith.addf %12, %14 : vector<288x128xf32>
    %cst_11 = arith.constant 0.000000e+00 : f32
    %16 = vector.broadcast %cst_11 : f32 to vector<288x128xf32>
    %17 = arith.maximumf %15, %16 : vector<288x128xf32>
    %18 = vector.shape_cast %17 : vector<288x128xf32> to vector<6x6x8x128xf32>
    %19 = vector.extract_strided_slice %18 {offsets = [0, 0, 0, 0], sizes = [2, 2, 8, 128], strides = [1, 1, 1, 1]} : vector<6x6x8x128xf32> to vector<2x2x8x128xf32>
    %20 = vector.shape_cast %19 : vector<2x2x8x128xf32> to vector<32x128xf32>
    %21 = arith.truncf %20 : vector<32x128xf32> to vector<32x128xbf16>
    %c0_12 = arith.constant 0 : index
    %c0_13 = arith.constant 0 : index
    %c0_14 = arith.constant 0 : index
    %22 = vector.load %arg3[%c0_12, %c0_13, %c0_14] : memref<25x128x128xbf16, #tpu.memory_space<vmem>>, vector<1x128x128xbf16>
    %23 = vector.shape_cast %22 : vector<1x128x128xbf16> to vector<128x128xbf16>
    %cst_15 = arith.constant dense<0.000000e+00> : vector<32x128xf32>
    %24 = tpu.matmul %21, %23, %cst_15 {dimension_numbers = #tpu.dot_dimension_numbers<[1], [0], [0], [1], [0, 0, 1, 1], [], []>} : vector<32x128xbf16>, vector<128x128xbf16>, vector<32x128xf32> -> vector<32x128xf32>
    %25 = vector.extract_strided_slice %18 {offsets = [0, 1, 0, 0], sizes = [2, 2, 8, 128], strides = [1, 1, 1, 1]} : vector<6x6x8x128xf32> to vector<2x2x8x128xf32>
    %26 = vector.shape_cast %25 : vector<2x2x8x128xf32> to vector<32x128xf32>
    %27 = arith.truncf %26 : vector<32x128xf32> to vector<32x128xbf16>
    %c1 = arith.constant 1 : index
    %c0_16 = arith.constant 0 : index
    %c0_17 = arith.constant 0 : index
    %28 = vector.load %arg3[%c1, %c0_16, %c0_17] : memref<25x128x128xbf16, #tpu.memory_space<vmem>>, vector<1x128x128xbf16>
    %29 = vector.shape_cast %28 : vector<1x128x128xbf16> to vector<128x128xbf16>
    %cst_18 = arith.constant dense<0.000000e+00> : vector<32x128xf32>
    %30 = tpu.matmul %27, %29, %cst_18 {dimension_numbers = #tpu.dot_dimension_numbers<[1], [0], [0], [1], [0, 0, 1, 1], [], []>} : vector<32x128xbf16>, vector<128x128xbf16>, vector<32x128xf32> -> vector<32x128xf32>
    %31 = arith.addf %24, %30 : vector<32x128xf32>
    %32 = vector.extract_strided_slice %18 {offsets = [0, 2, 0, 0], sizes = [2, 2, 8, 128], strides = [1, 1, 1, 1]} : vector<6x6x8x128xf32> to vector<2x2x8x128xf32>
    %33 = vector.shape_cast %32 : vector<2x2x8x128xf32> to vector<32x128xf32>
    %34 = arith.truncf %33 : vector<32x128xf32> to vector<32x128xbf16>
    %c2 = arith.constant 2 : index
    %c0_19 = arith.constant 0 : index
    %c0_20 = arith.constant 0 : index
    %35 = vector.load %arg3[%c2, %c0_19, %c0_20] : memref<25x128x128xbf16, #tpu.memory_space<vmem>>, vector<1x128x128xbf16>
    %36 = vector.shape_cast %35 : vector<1x128x128xbf16> to vector<128x128xbf16>
    %cst_21 = arith.constant dense<0.000000e+00> : vector<32x128xf32>
    %37 = tpu.matmul %34, %36, %cst_21 {dimension_numbers = #tpu.dot_dimension_numbers<[1], [0], [0], [1], [0, 0, 1, 1], [], []>} : vector<32x128xbf16>, vector<128x128xbf16>, vector<32x128xf32> -> vector<32x128xf32>
    %38 = arith.addf %31, %37 : vector<32x128xf32>
    %39 = vector.extract_strided_slice %18 {offsets = [0, 3, 0, 0], sizes = [2, 2, 8, 128], strides = [1, 1, 1, 1]} : vector<6x6x8x128xf32> to vector<2x2x8x128xf32>
    %40 = vector.shape_cast %39 : vector<2x2x8x128xf32> to vector<32x128xf32>
    %41 = arith.truncf %40 : vector<32x128xf32> to vector<32x128xbf16>
    %c3 = arith.constant 3 : index
    %c0_22 = arith.constant 0 : index
    %c0_23 = arith.constant 0 : index
    %42 = vector.load %arg3[%c3, %c0_22, %c0_23] : memref<25x128x128xbf16, #tpu.memory_space<vmem>>, vector<1x128x128xbf16>
    %43 = vector.shape_cast %42 : vector<1x128x128xbf16> to vector<128x128xbf16>
    %cst_24 = arith.constant dense<0.000000e+00> : vector<32x128xf32>
    %44 = tpu.matmul %41, %43, %cst_24 {dimension_numbers = #tpu.dot_dimension_numbers<[1], [0], [0], [1], [0, 0, 1, 1], [], []>} : vector<32x128xbf16>, vector<128x128xbf16>, vector<32x128xf32> -> vector<32x128xf32>
    %45 = arith.addf %38, %44 : vector<32x128xf32>
    %46 = vector.extract_strided_slice %18 {offsets = [0, 4, 0, 0], sizes = [2, 2, 8, 128], strides = [1, 1, 1, 1]} : vector<6x6x8x128xf32> to vector<2x2x8x128xf32>
    %47 = vector.shape_cast %46 : vector<2x2x8x128xf32> to vector<32x128xf32>
    %48 = arith.truncf %47 : vector<32x128xf32> to vector<32x128xbf16>
    %c4 = arith.constant 4 : index
    %c0_25 = arith.constant 0 : index
    %c0_26 = arith.constant 0 : index
    %49 = vector.load %arg3[%c4, %c0_25, %c0_26] : memref<25x128x128xbf16, #tpu.memory_space<vmem>>, vector<1x128x128xbf16>
    %50 = vector.shape_cast %49 : vector<1x128x128xbf16> to vector<128x128xbf16>
    %cst_27 = arith.constant dense<0.000000e+00> : vector<32x128xf32>
    %51 = tpu.matmul %48, %50, %cst_27 {dimension_numbers = #tpu.dot_dimension_numbers<[1], [0], [0], [1], [0, 0, 1, 1], [], []>} : vector<32x128xbf16>, vector<128x128xbf16>, vector<32x128xf32> -> vector<32x128xf32>
    %52 = arith.addf %45, %51 : vector<32x128xf32>
    %53 = vector.extract_strided_slice %18 {offsets = [1, 0, 0, 0], sizes = [2, 2, 8, 128], strides = [1, 1, 1, 1]} : vector<6x6x8x128xf32> to vector<2x2x8x128xf32>
    %54 = vector.shape_cast %53 : vector<2x2x8x128xf32> to vector<32x128xf32>
    %55 = arith.truncf %54 : vector<32x128xf32> to vector<32x128xbf16>
    %c5 = arith.constant 5 : index
    %c0_28 = arith.constant 0 : index
    %c0_29 = arith.constant 0 : index
    %56 = vector.load %arg3[%c5, %c0_28, %c0_29] : memref<25x128x128xbf16, #tpu.memory_space<vmem>>, vector<1x128x128xbf16>
    %57 = vector.shape_cast %56 : vector<1x128x128xbf16> to vector<128x128xbf16>
    %cst_30 = arith.constant dense<0.000000e+00> : vector<32x128xf32>
    %58 = tpu.matmul %55, %57, %cst_30 {dimension_numbers = #tpu.dot_dimension_numbers<[1], [0], [0], [1], [0, 0, 1, 1], [], []>} : vector<32x128xbf16>, vector<128x128xbf16>, vector<32x128xf32> -> vector<32x128xf32>
    %59 = arith.addf %52, %58 : vector<32x128xf32>
    %60 = vector.extract_strided_slice %18 {offsets = [1, 1, 0, 0], sizes = [2, 2, 8, 128], strides = [1, 1, 1, 1]} : vector<6x6x8x128xf32> to vector<2x2x8x128xf32>
    %61 = vector.shape_cast %60 : vector<2x2x8x128xf32> to vector<32x128xf32>
    %62 = arith.truncf %61 : vector<32x128xf32> to vector<32x128xbf16>
    %c6 = arith.constant 6 : index
    %c0_31 = arith.constant 0 : index
    %c0_32 = arith.constant 0 : index
    %63 = vector.load %arg3[%c6, %c0_31, %c0_32] : memref<25x128x128xbf16, #tpu.memory_space<vmem>>, vector<1x128x128xbf16>
    %64 = vector.shape_cast %63 : vector<1x128x128xbf16> to vector<128x128xbf16>
    %cst_33 = arith.constant dense<0.000000e+00> : vector<32x128xf32>
    %65 = tpu.matmul %62, %64, %cst_33 {dimension_numbers = #tpu.dot_dimension_numbers<[1], [0], [0], [1], [0, 0, 1, 1], [], []>} : vector<32x128xbf16>, vector<128x128xbf16>, vector<32x128xf32> -> vector<32x128xf32>
    %66 = arith.addf %59, %65 : vector<32x128xf32>
    %67 = vector.extract_strided_slice %18 {offsets = [1, 2, 0, 0], sizes = [2, 2, 8, 128], strides = [1, 1, 1, 1]} : vector<6x6x8x128xf32> to vector<2x2x8x128xf32>
    %68 = vector.shape_cast %67 : vector<2x2x8x128xf32> to vector<32x128xf32>
    %69 = arith.truncf %68 : vector<32x128xf32> to vector<32x128xbf16>
    %c7 = arith.constant 7 : index
    %c0_34 = arith.constant 0 : index
    %c0_35 = arith.constant 0 : index
    %70 = vector.load %arg3[%c7, %c0_34, %c0_35] : memref<25x128x128xbf16, #tpu.memory_space<vmem>>, vector<1x128x128xbf16>
    %71 = vector.shape_cast %70 : vector<1x128x128xbf16> to vector<128x128xbf16>
    %cst_36 = arith.constant dense<0.000000e+00> : vector<32x128xf32>
    %72 = tpu.matmul %69, %71, %cst_36 {dimension_numbers = #tpu.dot_dimension_numbers<[1], [0], [0], [1], [0, 0, 1, 1], [], []>} : vector<32x128xbf16>, vector<128x128xbf16>, vector<32x128xf32> -> vector<32x128xf32>
    %73 = arith.addf %66, %72 : vector<32x128xf32>
    %74 = vector.extract_strided_slice %18 {offsets = [1, 3, 0, 0], sizes = [2, 2, 8, 128], strides = [1, 1, 1, 1]} : vector<6x6x8x128xf32> to vector<2x2x8x128xf32>
    %75 = vector.shape_cast %74 : vector<2x2x8x128xf32> to vector<32x128xf32>
    %76 = arith.truncf %75 : vector<32x128xf32> to vector<32x128xbf16>
    %c8 = arith.constant 8 : index
    %c0_37 = arith.constant 0 : index
    %c0_38 = arith.constant 0 : index
    %77 = vector.load %arg3[%c8, %c0_37, %c0_38] : memref<25x128x128xbf16, #tpu.memory_space<vmem>>, vector<1x128x128xbf16>
    %78 = vector.shape_cast %77 : vector<1x128x128xbf16> to vector<128x128xbf16>
    %cst_39 = arith.constant dense<0.000000e+00> : vector<32x128xf32>
    %79 = tpu.matmul %76, %78, %cst_39 {dimension_numbers = #tpu.dot_dimension_numbers<[1], [0], [0], [1], [0, 0, 1, 1], [], []>} : vector<32x128xbf16>, vector<128x128xbf16>, vector<32x128xf32> -> vector<32x128xf32>
    %80 = arith.addf %73, %79 : vector<32x128xf32>
    %81 = vector.extract_strided_slice %18 {offsets = [1, 4, 0, 0], sizes = [2, 2, 8, 128], strides = [1, 1, 1, 1]} : vector<6x6x8x128xf32> to vector<2x2x8x128xf32>
    %82 = vector.shape_cast %81 : vector<2x2x8x128xf32> to vector<32x128xf32>
    %83 = arith.truncf %82 : vector<32x128xf32> to vector<32x128xbf16>
    %c9 = arith.constant 9 : index
    %c0_40 = arith.constant 0 : index
    %c0_41 = arith.constant 0 : index
    %84 = vector.load %arg3[%c9, %c0_40, %c0_41] : memref<25x128x128xbf16, #tpu.memory_space<vmem>>, vector<1x128x128xbf16>
    %85 = vector.shape_cast %84 : vector<1x128x128xbf16> to vector<128x128xbf16>
    %cst_42 = arith.constant dense<0.000000e+00> : vector<32x128xf32>
    %86 = tpu.matmul %83, %85, %cst_42 {dimension_numbers = #tpu.dot_dimension_numbers<[1], [0], [0], [1], [0, 0, 1, 1], [], []>} : vector<32x128xbf16>, vector<128x128xbf16>, vector<32x128xf32> -> vector<32x128xf32>
    %87 = arith.addf %80, %86 : vector<32x128xf32>
    %88 = vector.extract_strided_slice %18 {offsets = [2, 0, 0, 0], sizes = [2, 2, 8, 128], strides = [1, 1, 1, 1]} : vector<6x6x8x128xf32> to vector<2x2x8x128xf32>
    %89 = vector.shape_cast %88 : vector<2x2x8x128xf32> to vector<32x128xf32>
    %90 = arith.truncf %89 : vector<32x128xf32> to vector<32x128xbf16>
    %c10 = arith.constant 10 : index
    %c0_43 = arith.constant 0 : index
    %c0_44 = arith.constant 0 : index
    %91 = vector.load %arg3[%c10, %c0_43, %c0_44] : memref<25x128x128xbf16, #tpu.memory_space<vmem>>, vector<1x128x128xbf16>
    %92 = vector.shape_cast %91 : vector<1x128x128xbf16> to vector<128x128xbf16>
    %cst_45 = arith.constant dense<0.000000e+00> : vector<32x128xf32>
    %93 = tpu.matmul %90, %92, %cst_45 {dimension_numbers = #tpu.dot_dimension_numbers<[1], [0], [0], [1], [0, 0, 1, 1], [], []>} : vector<32x128xbf16>, vector<128x128xbf16>, vector<32x128xf32> -> vector<32x128xf32>
    %94 = arith.addf %87, %93 : vector<32x128xf32>
    %95 = vector.extract_strided_slice %18 {offsets = [2, 1, 0, 0], sizes = [2, 2, 8, 128], strides = [1, 1, 1, 1]} : vector<6x6x8x128xf32> to vector<2x2x8x128xf32>
    %96 = vector.shape_cast %95 : vector<2x2x8x128xf32> to vector<32x128xf32>
    %97 = arith.truncf %96 : vector<32x128xf32> to vector<32x128xbf16>
    %c11 = arith.constant 11 : index
    %c0_46 = arith.constant 0 : index
    %c0_47 = arith.constant 0 : index
    %98 = vector.load %arg3[%c11, %c0_46, %c0_47] : memref<25x128x128xbf16, #tpu.memory_space<vmem>>, vector<1x128x128xbf16>
    %99 = vector.shape_cast %98 : vector<1x128x128xbf16> to vector<128x128xbf16>
    %cst_48 = arith.constant dense<0.000000e+00> : vector<32x128xf32>
    %100 = tpu.matmul %97, %99, %cst_48 {dimension_numbers = #tpu.dot_dimension_numbers<[1], [0], [0], [1], [0, 0, 1, 1], [], []>} : vector<32x128xbf16>, vector<128x128xbf16>, vector<32x128xf32> -> vector<32x128xf32>
    %101 = arith.addf %94, %100 : vector<32x128xf32>
    %102 = vector.extract_strided_slice %18 {offsets = [2, 2, 0, 0], sizes = [2, 2, 8, 128], strides = [1, 1, 1, 1]} : vector<6x6x8x128xf32> to vector<2x2x8x128xf32>
    %103 = vector.shape_cast %102 : vector<2x2x8x128xf32> to vector<32x128xf32>
    %104 = arith.truncf %103 : vector<32x128xf32> to vector<32x128xbf16>
    %c12 = arith.constant 12 : index
    %c0_49 = arith.constant 0 : index
    %c0_50 = arith.constant 0 : index
    %105 = vector.load %arg3[%c12, %c0_49, %c0_50] : memref<25x128x128xbf16, #tpu.memory_space<vmem>>, vector<1x128x128xbf16>
    %106 = vector.shape_cast %105 : vector<1x128x128xbf16> to vector<128x128xbf16>
    %cst_51 = arith.constant dense<0.000000e+00> : vector<32x128xf32>
    %107 = tpu.matmul %104, %106, %cst_51 {dimension_numbers = #tpu.dot_dimension_numbers<[1], [0], [0], [1], [0, 0, 1, 1], [], []>} : vector<32x128xbf16>, vector<128x128xbf16>, vector<32x128xf32> -> vector<32x128xf32>
    %108 = arith.addf %101, %107 : vector<32x128xf32>
    %109 = vector.extract_strided_slice %18 {offsets = [2, 3, 0, 0], sizes = [2, 2, 8, 128], strides = [1, 1, 1, 1]} : vector<6x6x8x128xf32> to vector<2x2x8x128xf32>
    %110 = vector.shape_cast %109 : vector<2x2x8x128xf32> to vector<32x128xf32>
    %111 = arith.truncf %110 : vector<32x128xf32> to vector<32x128xbf16>
    %c13 = arith.constant 13 : index
    %c0_52 = arith.constant 0 : index
    %c0_53 = arith.constant 0 : index
    %112 = vector.load %arg3[%c13, %c0_52, %c0_53] : memref<25x128x128xbf16, #tpu.memory_space<vmem>>, vector<1x128x128xbf16>
    %113 = vector.shape_cast %112 : vector<1x128x128xbf16> to vector<128x128xbf16>
    %cst_54 = arith.constant dense<0.000000e+00> : vector<32x128xf32>
    %114 = tpu.matmul %111, %113, %cst_54 {dimension_numbers = #tpu.dot_dimension_numbers<[1], [0], [0], [1], [0, 0, 1, 1], [], []>} : vector<32x128xbf16>, vector<128x128xbf16>, vector<32x128xf32> -> vector<32x128xf32>
    %115 = arith.addf %108, %114 : vector<32x128xf32>
    %116 = vector.extract_strided_slice %18 {offsets = [2, 4, 0, 0], sizes = [2, 2, 8, 128], strides = [1, 1, 1, 1]} : vector<6x6x8x128xf32> to vector<2x2x8x128xf32>
    %117 = vector.shape_cast %116 : vector<2x2x8x128xf32> to vector<32x128xf32>
    %118 = arith.truncf %117 : vector<32x128xf32> to vector<32x128xbf16>
    %c14 = arith.constant 14 : index
    %c0_55 = arith.constant 0 : index
    %c0_56 = arith.constant 0 : index
    %119 = vector.load %arg3[%c14, %c0_55, %c0_56] : memref<25x128x128xbf16, #tpu.memory_space<vmem>>, vector<1x128x128xbf16>
    %120 = vector.shape_cast %119 : vector<1x128x128xbf16> to vector<128x128xbf16>
    %cst_57 = arith.constant dense<0.000000e+00> : vector<32x128xf32>
    %121 = tpu.matmul %118, %120, %cst_57 {dimension_numbers = #tpu.dot_dimension_numbers<[1], [0], [0], [1], [0, 0, 1, 1], [], []>} : vector<32x128xbf16>, vector<128x128xbf16>, vector<32x128xf32> -> vector<32x128xf32>
    %122 = arith.addf %115, %121 : vector<32x128xf32>
    %123 = vector.extract_strided_slice %18 {offsets = [3, 0, 0, 0], sizes = [2, 2, 8, 128], strides = [1, 1, 1, 1]} : vector<6x6x8x128xf32> to vector<2x2x8x128xf32>
    %124 = vector.shape_cast %123 : vector<2x2x8x128xf32> to vector<32x128xf32>
    %125 = arith.truncf %124 : vector<32x128xf32> to vector<32x128xbf16>
    %c15 = arith.constant 15 : index
    %c0_58 = arith.constant 0 : index
    %c0_59 = arith.constant 0 : index
    %126 = vector.load %arg3[%c15, %c0_58, %c0_59] : memref<25x128x128xbf16, #tpu.memory_space<vmem>>, vector<1x128x128xbf16>
    %127 = vector.shape_cast %126 : vector<1x128x128xbf16> to vector<128x128xbf16>
    %cst_60 = arith.constant dense<0.000000e+00> : vector<32x128xf32>
    %128 = tpu.matmul %125, %127, %cst_60 {dimension_numbers = #tpu.dot_dimension_numbers<[1], [0], [0], [1], [0, 0, 1, 1], [], []>} : vector<32x128xbf16>, vector<128x128xbf16>, vector<32x128xf32> -> vector<32x128xf32>
    %129 = arith.addf %122, %128 : vector<32x128xf32>
    %130 = vector.extract_strided_slice %18 {offsets = [3, 1, 0, 0], sizes = [2, 2, 8, 128], strides = [1, 1, 1, 1]} : vector<6x6x8x128xf32> to vector<2x2x8x128xf32>
    %131 = vector.shape_cast %130 : vector<2x2x8x128xf32> to vector<32x128xf32>
    %132 = arith.truncf %131 : vector<32x128xf32> to vector<32x128xbf16>
    %c16 = arith.constant 16 : index
    %c0_61 = arith.constant 0 : index
    %c0_62 = arith.constant 0 : index
    %133 = vector.load %arg3[%c16, %c0_61, %c0_62] : memref<25x128x128xbf16, #tpu.memory_space<vmem>>, vector<1x128x128xbf16>
    %134 = vector.shape_cast %133 : vector<1x128x128xbf16> to vector<128x128xbf16>
    %cst_63 = arith.constant dense<0.000000e+00> : vector<32x128xf32>
    %135 = tpu.matmul %132, %134, %cst_63 {dimension_numbers = #tpu.dot_dimension_numbers<[1], [0], [0], [1], [0, 0, 1, 1], [], []>} : vector<32x128xbf16>, vector<128x128xbf16>, vector<32x128xf32> -> vector<32x128xf32>
    %136 = arith.addf %129, %135 : vector<32x128xf32>
    %137 = vector.extract_strided_slice %18 {offsets = [3, 2, 0, 0], sizes = [2, 2, 8, 128], strides = [1, 1, 1, 1]} : vector<6x6x8x128xf32> to vector<2x2x8x128xf32>
    %138 = vector.shape_cast %137 : vector<2x2x8x128xf32> to vector<32x128xf32>
    %139 = arith.truncf %138 : vector<32x128xf32> to vector<32x128xbf16>
    %c17 = arith.constant 17 : index
    %c0_64 = arith.constant 0 : index
    %c0_65 = arith.constant 0 : index
    %140 = vector.load %arg3[%c17, %c0_64, %c0_65] : memref<25x128x128xbf16, #tpu.memory_space<vmem>>, vector<1x128x128xbf16>
    %141 = vector.shape_cast %140 : vector<1x128x128xbf16> to vector<128x128xbf16>
    %cst_66 = arith.constant dense<0.000000e+00> : vector<32x128xf32>
    %142 = tpu.matmul %139, %141, %cst_66 {dimension_numbers = #tpu.dot_dimension_numbers<[1], [0], [0], [1], [0, 0, 1, 1], [], []>} : vector<32x128xbf16>, vector<128x128xbf16>, vector<32x128xf32> -> vector<32x128xf32>
    %143 = arith.addf %136, %142 : vector<32x128xf32>
    %144 = vector.extract_strided_slice %18 {offsets = [3, 3, 0, 0], sizes = [2, 2, 8, 128], strides = [1, 1, 1, 1]} : vector<6x6x8x128xf32> to vector<2x2x8x128xf32>
    %145 = vector.shape_cast %144 : vector<2x2x8x128xf32> to vector<32x128xf32>
    %146 = arith.truncf %145 : vector<32x128xf32> to vector<32x128xbf16>
    %c18 = arith.constant 18 : index
    %c0_67 = arith.constant 0 : index
    %c0_68 = arith.constant 0 : index
    %147 = vector.load %arg3[%c18, %c0_67, %c0_68] : memref<25x128x128xbf16, #tpu.memory_space<vmem>>, vector<1x128x128xbf16>
    %148 = vector.shape_cast %147 : vector<1x128x128xbf16> to vector<128x128xbf16>
    %cst_69 = arith.constant dense<0.000000e+00> : vector<32x128xf32>
    %149 = tpu.matmul %146, %148, %cst_69 {dimension_numbers = #tpu.dot_dimension_numbers<[1], [0], [0], [1], [0, 0, 1, 1], [], []>} : vector<32x128xbf16>, vector<128x128xbf16>, vector<32x128xf32> -> vector<32x128xf32>
    %150 = arith.addf %143, %149 : vector<32x128xf32>
    %151 = vector.extract_strided_slice %18 {offsets = [3, 4, 0, 0], sizes = [2, 2, 8, 128], strides = [1, 1, 1, 1]} : vector<6x6x8x128xf32> to vector<2x2x8x128xf32>
    %152 = vector.shape_cast %151 : vector<2x2x8x128xf32> to vector<32x128xf32>
    %153 = arith.truncf %152 : vector<32x128xf32> to vector<32x128xbf16>
    %c19 = arith.constant 19 : index
    %c0_70 = arith.constant 0 : index
    %c0_71 = arith.constant 0 : index
    %154 = vector.load %arg3[%c19, %c0_70, %c0_71] : memref<25x128x128xbf16, #tpu.memory_space<vmem>>, vector<1x128x128xbf16>
    %155 = vector.shape_cast %154 : vector<1x128x128xbf16> to vector<128x128xbf16>
    %cst_72 = arith.constant dense<0.000000e+00> : vector<32x128xf32>
    %156 = tpu.matmul %153, %155, %cst_72 {dimension_numbers = #tpu.dot_dimension_numbers<[1], [0], [0], [1], [0, 0, 1, 1], [], []>} : vector<32x128xbf16>, vector<128x128xbf16>, vector<32x128xf32> -> vector<32x128xf32>
    %157 = arith.addf %150, %156 : vector<32x128xf32>
    %158 = vector.extract_strided_slice %18 {offsets = [4, 0, 0, 0], sizes = [2, 2, 8, 128], strides = [1, 1, 1, 1]} : vector<6x6x8x128xf32> to vector<2x2x8x128xf32>
    %159 = vector.shape_cast %158 : vector<2x2x8x128xf32> to vector<32x128xf32>
    %160 = arith.truncf %159 : vector<32x128xf32> to vector<32x128xbf16>
    %c20 = arith.constant 20 : index
    %c0_73 = arith.constant 0 : index
    %c0_74 = arith.constant 0 : index
    %161 = vector.load %arg3[%c20, %c0_73, %c0_74] : memref<25x128x128xbf16, #tpu.memory_space<vmem>>, vector<1x128x128xbf16>
    %162 = vector.shape_cast %161 : vector<1x128x128xbf16> to vector<128x128xbf16>
    %cst_75 = arith.constant dense<0.000000e+00> : vector<32x128xf32>
    %163 = tpu.matmul %160, %162, %cst_75 {dimension_numbers = #tpu.dot_dimension_numbers<[1], [0], [0], [1], [0, 0, 1, 1], [], []>} : vector<32x128xbf16>, vector<128x128xbf16>, vector<32x128xf32> -> vector<32x128xf32>
    %164 = arith.addf %157, %163 : vector<32x128xf32>
    %165 = vector.extract_strided_slice %18 {offsets = [4, 1, 0, 0], sizes = [2, 2, 8, 128], strides = [1, 1, 1, 1]} : vector<6x6x8x128xf32> to vector<2x2x8x128xf32>
    %166 = vector.shape_cast %165 : vector<2x2x8x128xf32> to vector<32x128xf32>
    %167 = arith.truncf %166 : vector<32x128xf32> to vector<32x128xbf16>
    %c21 = arith.constant 21 : index
    %c0_76 = arith.constant 0 : index
    %c0_77 = arith.constant 0 : index
    %168 = vector.load %arg3[%c21, %c0_76, %c0_77] : memref<25x128x128xbf16, #tpu.memory_space<vmem>>, vector<1x128x128xbf16>
    %169 = vector.shape_cast %168 : vector<1x128x128xbf16> to vector<128x128xbf16>
    %cst_78 = arith.constant dense<0.000000e+00> : vector<32x128xf32>
    %170 = tpu.matmul %167, %169, %cst_78 {dimension_numbers = #tpu.dot_dimension_numbers<[1], [0], [0], [1], [0, 0, 1, 1], [], []>} : vector<32x128xbf16>, vector<128x128xbf16>, vector<32x128xf32> -> vector<32x128xf32>
    %171 = arith.addf %164, %170 : vector<32x128xf32>
    %172 = vector.extract_strided_slice %18 {offsets = [4, 2, 0, 0], sizes = [2, 2, 8, 128], strides = [1, 1, 1, 1]} : vector<6x6x8x128xf32> to vector<2x2x8x128xf32>
    %173 = vector.shape_cast %172 : vector<2x2x8x128xf32> to vector<32x128xf32>
    %174 = arith.truncf %173 : vector<32x128xf32> to vector<32x128xbf16>
    %c22 = arith.constant 22 : index
    %c0_79 = arith.constant 0 : index
    %c0_80 = arith.constant 0 : index
    %175 = vector.load %arg3[%c22, %c0_79, %c0_80] : memref<25x128x128xbf16, #tpu.memory_space<vmem>>, vector<1x128x128xbf16>
    %176 = vector.shape_cast %175 : vector<1x128x128xbf16> to vector<128x128xbf16>
    %cst_81 = arith.constant dense<0.000000e+00> : vector<32x128xf32>
    %177 = tpu.matmul %174, %176, %cst_81 {dimension_numbers = #tpu.dot_dimension_numbers<[1], [0], [0], [1], [0, 0, 1, 1], [], []>} : vector<32x128xbf16>, vector<128x128xbf16>, vector<32x128xf32> -> vector<32x128xf32>
    %178 = arith.addf %171, %177 : vector<32x128xf32>
    %179 = vector.extract_strided_slice %18 {offsets = [4, 3, 0, 0], sizes = [2, 2, 8, 128], strides = [1, 1, 1, 1]} : vector<6x6x8x128xf32> to vector<2x2x8x128xf32>
    %180 = vector.shape_cast %179 : vector<2x2x8x128xf32> to vector<32x128xf32>
    %181 = arith.truncf %180 : vector<32x128xf32> to vector<32x128xbf16>
    %c23 = arith.constant 23 : index
    %c0_82 = arith.constant 0 : index
    %c0_83 = arith.constant 0 : index
    %182 = vector.load %arg3[%c23, %c0_82, %c0_83] : memref<25x128x128xbf16, #tpu.memory_space<vmem>>, vector<1x128x128xbf16>
    %183 = vector.shape_cast %182 : vector<1x128x128xbf16> to vector<128x128xbf16>
    %cst_84 = arith.constant dense<0.000000e+00> : vector<32x128xf32>
    %184 = tpu.matmul %181, %183, %cst_84 {dimension_numbers = #tpu.dot_dimension_numbers<[1], [0], [0], [1], [0, 0, 1, 1], [], []>} : vector<32x128xbf16>, vector<128x128xbf16>, vector<32x128xf32> -> vector<32x128xf32>
    %185 = arith.addf %178, %184 : vector<32x128xf32>
    %186 = vector.extract_strided_slice %18 {offsets = [4, 4, 0, 0], sizes = [2, 2, 8, 128], strides = [1, 1, 1, 1]} : vector<6x6x8x128xf32> to vector<2x2x8x128xf32>
    %187 = vector.shape_cast %186 : vector<2x2x8x128xf32> to vector<32x128xf32>
    %188 = arith.truncf %187 : vector<32x128xf32> to vector<32x128xbf16>
    %c24 = arith.constant 24 : index
    %c0_85 = arith.constant 0 : index
    %c0_86 = arith.constant 0 : index
    %189 = vector.load %arg3[%c24, %c0_85, %c0_86] : memref<25x128x128xbf16, #tpu.memory_space<vmem>>, vector<1x128x128xbf16>
    %190 = vector.shape_cast %189 : vector<1x128x128xbf16> to vector<128x128xbf16>
    %cst_87 = arith.constant dense<0.000000e+00> : vector<32x128xf32>
    %191 = tpu.matmul %188, %190, %cst_87 {dimension_numbers = #tpu.dot_dimension_numbers<[1], [0], [0], [1], [0, 0, 1, 1], [], []>} : vector<32x128xbf16>, vector<128x128xbf16>, vector<32x128xf32> -> vector<32x128xf32>
    %192 = arith.addf %185, %191 : vector<32x128xf32>
    %193 = vector.shape_cast %192 : vector<32x128xf32> to vector<2x2x8x128xf32>
    %194 = vector.extract_strided_slice %193 {offsets = [0, 0, 0, 0], sizes = [2, 1, 8, 128], strides = [1, 1, 1, 1]} : vector<2x2x8x128xf32> to vector<2x1x8x128xf32>
    %195 = vector.shape_cast %194 : vector<2x1x8x128xf32> to vector<2x8x128xf32>
    %196 = vector.extract_strided_slice %193 {offsets = [0, 1, 0, 0], sizes = [2, 1, 8, 128], strides = [1, 1, 1, 1]} : vector<2x2x8x128xf32> to vector<2x1x8x128xf32>
    %197 = vector.shape_cast %196 : vector<2x1x8x128xf32> to vector<2x8x128xf32>
    %198 = arith.maximumf %195, %197 : vector<2x8x128xf32>
    %199 = vector.shape_cast %198 : vector<2x8x128xf32> to vector<1x2x8x128xf32>
    %200 = vector.extract_strided_slice %199 {offsets = [0, 0, 0, 0], sizes = [1, 1, 8, 128], strides = [1, 1, 1, 1]} : vector<1x2x8x128xf32> to vector<1x1x8x128xf32>
    %201 = vector.shape_cast %200 : vector<1x1x8x128xf32> to vector<1x8x128xf32>
    %202 = vector.extract_strided_slice %199 {offsets = [0, 1, 0, 0], sizes = [1, 1, 8, 128], strides = [1, 1, 1, 1]} : vector<1x2x8x128xf32> to vector<1x1x8x128xf32>
    %203 = vector.shape_cast %202 : vector<1x1x8x128xf32> to vector<1x8x128xf32>
    %204 = arith.maximumf %201, %203 : vector<1x8x128xf32>
    %205 = vector.shape_cast %204 : vector<1x8x128xf32> to vector<8x128xf32>
    %206 = vector.extract_strided_slice %0 {offsets = [1, 0], sizes = [1, 128], strides = [1, 1]} : vector<8x128xf32> to vector<1x128xf32>
    %207 = vector.broadcast %206 : vector<1x128xf32> to vector<8x128xf32>
    %208 = arith.addf %205, %207 : vector<8x128xf32>
    %cst_88 = arith.constant 0.000000e+00 : f32
    %209 = vector.broadcast %cst_88 : f32 to vector<8x128xf32>
    %210 = arith.maximumf %208, %209 : vector<8x128xf32>
    %211 = vector.shape_cast %210 : vector<8x128xf32> to vector<1x8x128xf32>
    %212 = vector.shape_cast %211 : vector<1x8x128xf32> to vector<8x128xf32>
    %213 = arith.truncf %212 : vector<8x128xf32> to vector<8x128xbf16>
    %c0_89 = arith.constant 0 : index
    %c0_90 = arith.constant 0 : index
    %c0_91 = arith.constant 0 : index
    %214 = vector.load %arg4[%c0_89, %c0_90, %c0_91] : memref<1x128x128xbf16, #tpu.memory_space<vmem>>, vector<1x128x128xbf16>
    %215 = vector.shape_cast %214 : vector<1x128x128xbf16> to vector<128x128xbf16>
    %cst_92 = arith.constant dense<0.000000e+00> : vector<8x128xf32>
    %216 = tpu.matmul %213, %215, %cst_92 {dimension_numbers = #tpu.dot_dimension_numbers<[1], [0], [0], [1], [0, 0, 1, 1], [], []>} : vector<8x128xbf16>, vector<128x128xbf16>, vector<8x128xf32> -> vector<8x128xf32>
    %217 = vector.extract_strided_slice %0 {offsets = [2, 0], sizes = [1, 128], strides = [1, 1]} : vector<8x128xf32> to vector<1x128xf32>
    %218 = vector.broadcast %217 : vector<1x128xf32> to vector<8x128xf32>
    %219 = arith.addf %216, %218 : vector<8x128xf32>
    %cst_93 = arith.constant 0.000000e+00 : f32
    %220 = vector.broadcast %cst_93 : f32 to vector<8x128xf32>
    %221 = arith.maximumf %219, %220 : vector<8x128xf32>
    %222 = arith.truncf %221 : vector<8x128xf32> to vector<8x128xbf16>
    %c0_94 = arith.constant 0 : index
    %c0_95 = arith.constant 0 : index
    %223 = vector.load %arg5[%c0_94, %c0_95] : memref<128x128xbf16, #tpu.memory_space<vmem>>, vector<128x128xbf16>
    %cst_96 = arith.constant dense<0.000000e+00> : vector<8x128xf32>
    %224 = tpu.matmul %222, %223, %cst_96 {dimension_numbers = #tpu.dot_dimension_numbers<[1], [0], [0], [1], [0, 0, 1, 1], [], []>} : vector<8x128xbf16>, vector<128x128xbf16>, vector<8x128xf32> -> vector<8x128xf32>
    %225 = vector.extract_strided_slice %0 {offsets = [3, 0], sizes = [1, 128], strides = [1, 1]} : vector<8x128xf32> to vector<1x128xf32>
    %226 = vector.broadcast %225 : vector<1x128xf32> to vector<8x128xf32>
    %227 = arith.addf %224, %226 : vector<8x128xf32>
    %c0_97 = arith.constant 0 : index
    %c0_98 = arith.constant 0 : index
    %228 = vector.load %arg7[%c0_97, %c0_98] : memref<8x128xf32, #tpu.memory_space<vmem>>, vector<8x128xf32>
    tpu.vector_store %arg7[%c0_97, %c0_98], %227 {strides = array<i32>} : memref<8x128xf32, #tpu.memory_space<vmem>>, vector<8x128xf32>,
    return
  }
  func.func @transform_0(%arg0: i32) -> (i32, i32) {
    %c0_i32 = arith.constant 0 : i32
    %c0_i32_0 = arith.constant 0 : i32
    return %arg0, %c0_i32 : i32, i32
  }
  func.func @transform_1(%arg0: i32) -> (i32, i32) {
    %c0_i32 = arith.constant 0 : i32
    %c0_i32_0 = arith.constant 0 : i32
    %c0_i32_1 = arith.constant 0 : i32
    return %c0_i32, %c0_i32_0 : i32, i32
  }
  func.func @transform_2(%arg0: i32) -> (i32, i32, i32) {
    %c0_i32 = arith.constant 0 : i32
    %c0_i32_0 = arith.constant 0 : i32
    %c0_i32_1 = arith.constant 0 : i32
    %c0_i32_2 = arith.constant 0 : i32
    return %c0_i32, %c0_i32_0, %c0_i32_1 : i32, i32, i32
  }
  func.func @transform_3(%arg0: i32) -> (i32, i32, i32) {
    %c0_i32 = arith.constant 0 : i32
    %c0_i32_0 = arith.constant 0 : i32
    %c0_i32_1 = arith.constant 0 : i32
    %c0_i32_2 = arith.constant 0 : i32
    return %c0_i32, %c0_i32_0, %c0_i32_1 : i32, i32, i32
  }
  func.func @transform_4(%arg0: i32) -> (i32, i32) {
    %c0_i32 = arith.constant 0 : i32
    %c0_i32_0 = arith.constant 0 : i32
    %c0_i32_1 = arith.constant 0 : i32
    return %c0_i32, %c0_i32_0 : i32, i32
  }
  func.func @transform_5(%arg0: i32) -> (i32, i32) {
    %c0_i32 = arith.constant 0 : i32
    %c0_i32_0 = arith.constant 0 : i32
    %c0_i32_1 = arith.constant 0 : i32
    return %c0_i32, %c0_i32_0 : i32, i32
  }
  func.func @transform_6(%arg0: i32) -> (i32, i32) {
    %c0_i32 = arith.constant 0 : i32
    %c0_i32_0 = arith.constant 0 : i32
    return %arg0, %c0_i32 : i32, i32
  }
}

</mosaic_0001>

<llo_original>
// kernel: l0_lenet5_forward.1
$region0: #{l0_lenet5_forward.1}
  #allocation0 [shape = 'u32[]', space=smem, size = 0x4, offset = 0x4, fixed_abs, tag = 'smem constant byte address 0x4 - core index']
  #allocation1 [shape = 'u32[72,128]{1,0:T(1,128)}', space=vmem, size = 0x9000, scoped, tag = 'internal scratch']
  %s0 = inlined_call_operand.vmem [shape: bf16[1152,32], index: 0, kind: input, shape index: {}]
  %s1 = inlined_call_operand.vmem [shape: bf16[32,128], index: 1, kind: input, shape index: {}]
  %s2 = inlined_call_operand.vmem [shape: bf16[25,128,128], index: 2, kind: input, shape index: {}]
  %s3 = inlined_call_operand.vmem [shape: bf16[1,128,128], index: 3, kind: input, shape index: {}]
  %s4 = inlined_call_operand.vmem [shape: bf16[128,128], index: 4, kind: input, shape index: {}]
  %s5 = inlined_call_operand.vmem [shape: f32[8,128], index: 5, kind: input, shape index: {}]
  %s6 = inlined_call_operand.vmem [shape: f32[8,128], index: 6, kind: output, shape index: {}]
  %s7 = sld [smem:[#allocation0]]
  $region34: #{l0_lenet5_forward.1} parent=0
    _
  %s9 = ssub.s32 1, %s7
  %s10 = scalar_select 0, %s9, %s7
  // Predicated region
  $region2: #{l0_lenet5_forward.1} parent=0 // pred_check
    _
  $region3: #{l0_lenet5_forward.1} parent=0 // pred_check_branch
    %12 = sbr.rel (0) target = $region5
  $region4: #{l0_lenet5_forward.1} parent=0 // pred_region
    _
  $region5: #{l0_lenet5_forward.1} parent=0 // pred_fallthru
    _
  // Predicated region
  $region6: #{l0_lenet5_forward.1} parent=0 // pred_check
    _
  $region7: #{l0_lenet5_forward.1} parent=0 // pred_check_branch
    %14 = sbr.rel (0) target = $region9
  $region8: #{l0_lenet5_forward.1} parent=0 // pred_region
    _
  $region9: #{l0_lenet5_forward.1} parent=0 // pred_fallthru
    _
  // Predicated region
  $region10: #{l0_lenet5_forward.1} parent=0 // pred_check
    _
  $region11: #{l0_lenet5_forward.1} parent=0 // pred_check_branch
    %16 = sbr.rel (0) target = $region13
  $region12: #{l0_lenet5_forward.1} parent=0 // pred_region
    _
  $region13: #{l0_lenet5_forward.1} parent=0 // pred_fallthru
    _
  // Predicated region
  $region14: #{l0_lenet5_forward.1} parent=0 // pred_check
    _
  $region15: #{l0_lenet5_forward.1} parent=0 // pred_check_branch
    %18 = sbr.rel (0) target = $region17
  $region16: #{l0_lenet5_forward.1} parent=0 // pred_region
    _
  $region17: #{l0_lenet5_forward.1} parent=0 // pred_fallthru
    _
  // Predicated region
  $region18: #{l0_lenet5_forward.1} parent=0 // pred_check
    _
  $region19: #{l0_lenet5_forward.1} parent=0 // pred_check_branch
    %20 = sbr.rel (0) target = $region21
  $region20: #{l0_lenet5_forward.1} parent=0 // pred_region
    _
  $region21: #{l0_lenet5_forward.1} parent=0 // pred_fallthru
    _
  // Predicated region
  $region22: #{l0_lenet5_forward.1} parent=0 // pred_check
    _
  $region23: #{l0_lenet5_forward.1} parent=0 // pred_check_branch
    %22 = sbr.rel (0) target = $region25
  $region24: #{l0_lenet5_forward.1} parent=0 // pred_region
    _
  $region25: #{l0_lenet5_forward.1} parent=0 // pred_fallthru
    _
  %v24 = vld [vmem:[%s5] sm:$0xff]
  %v25 = vld [vmem:[%s1] sm:$0xf]
  %v26 = vld [vmem:[%s1 + $0x4] sm:$0xf]
  %v27 = vld [vmem:[%s1 + $0x8] sm:$0xf]
  %v28 = vld [vmem:[%s1 + $0xc] sm:$0xf]
  %v29 = vld [vmem:[%s0] sm:$0xf]
  %v30 = vld [vmem:[%s0 + $0x4] sm:$0xf]
  %v31 = vld [vmem:[%s0 + $0x8] sm:$0xf]
  %v32 = vld [vmem:[%s0 + $0xc] sm:$0xf]
  %v33 = vld [vmem:[%s0 + $0x10] sm:$0xf]
  %v34 = vld [vmem:[%s0 + $0x14] sm:$0xf]
  %v35 = vld [vmem:[%s0 + $0x18] sm:$0xf]
  %v36 = vld [vmem:[%s0 + $0x1c] sm:$0xf]
  %v37 = vld [vmem:[%s0 + $0x20] sm:$0xf]
  %v38 = vld [vmem:[%s0 + $0x24] sm:$0xf]
  %v39 = vld [vmem:[%s0 + $0x28] sm:$0xf]
  %v40 = vld [vmem:[%s0 + $0x2c] sm:$0xf]
  %v41 = vld [vmem:[%s0 + $0x30] sm:$0xf]
  %v42 = vld [vmem:[%s0 + $0x34] sm:$0xf]
  %v43 = vld [vmem:[%s0 + $0x38] sm:$0xf]
  %v44 = vld [vmem:[%s0 + $0x3c] sm:$0xf]
  %v45 = vld [vmem:[%s0 + $0x40] sm:$0xf]
  %v46 = vld [vmem:[%s0 + $0x44] sm:$0xf]
  %v47 = vld [vmem:[%s0 + $0x48] sm:$0xf]
  %v48 = vld [vmem:[%s0 + $0x4c] sm:$0xf]
  %v49 = vld [vmem:[%s0 + $0x50] sm:$0xf]
  %v50 = vld [vmem:[%s0 + $0x54] sm:$0xf]
  %v51 = vld [vmem:[%s0 + $0x58] sm:$0xf]
  %v52 = vld [vmem:[%s0 + $0x5c] sm:$0xf]
  %v53 = vld [vmem:[%s0 + $0x60] sm:$0xf]
  %v54 = vld [vmem:[%s0 + $0x64] sm:$0xf]
  %v55 = vld [vmem:[%s0 + $0x68] sm:$0xf]
  %v56 = vld [vmem:[%s0 + $0x6c] sm:$0xf]
  %v57 = vld [vmem:[%s0 + $0x70] sm:$0xf]
  %v58 = vld [vmem:[%s0 + $0x74] sm:$0xf]
  %v59 = vld [vmem:[%s0 + $0x78] sm:$0xf]
  %v60 = vld [vmem:[%s0 + $0x7c] sm:$0xf]
  %v61 = vld [vmem:[%s0 + $0x80] sm:$0xf]
  %v62 = vld [vmem:[%s0 + $0x84] sm:$0xf]
  %v63 = vld [vmem:[%s0 + $0x88] sm:$0xf]
  %v64 = vld [vmem:[%s0 + $0x8c] sm:$0xf]
  %v101 = vunpack.c.l.b16 %v29
  %v102 = vunpack.c.l.b16 %v30
  %v103 = vunpack.c.l.b16 %v31
  %v104 = vunpack.c.l.b16 %v32
  %v105 = vunpack.c.l.b16 %v33
  %v106 = vunpack.c.l.b16 %v34
  %v107 = vunpack.c.l.b16 %v35
  %v108 = vunpack.c.l.b16 %v36
  %v109 = vunpack.c.l.b16 %v37
  %v110 = vunpack.c.l.b16 %v38
  %v111 = vunpack.c.l.b16 %v39
  %v112 = vunpack.c.l.b16 %v40
  %v113 = vunpack.c.l.b16 %v41
  %v114 = vunpack.c.l.b16 %v42
  %v115 = vunpack.c.l.b16 %v43
  %v116 = vunpack.c.l.b16 %v44
  %v117 = vunpack.c.l.b16 %v45
  %v118 = vunpack.c.l.b16 %v46
  %v119 = vunpack.c.l.b16 %v47
  %v120 = vunpack.c.l.b16 %v48
  %v121 = vunpack.c.l.b16 %v49
  %v122 = vunpack.c.l.b16 %v50
  %v123 = vunpack.c.l.b16 %v51
  %v124 = vunpack.c.l.b16 %v52
  %v125 = vunpack.c.l.b16 %v53
  %v126 = vunpack.c.l.b16 %v54
  %v127 = vunpack.c.l.b16 %v55
  %v128 = vunpack.c.l.b16 %v56
  %v129 = vunpack.c.l.b16 %v57
  %v130 = vunpack.c.l.b16 %v58
  %v131 = vunpack.c.l.b16 %v59
  %v132 = vunpack.c.l.b16 %v60
  %v133 = vunpack.c.l.b16 %v61
  %v134 = vunpack.c.l.b16 %v62
  %v135 = vunpack.c.l.b16 %v63
  %v136 = vunpack.c.l.b16 %v64
  %v137 = vpack.c.b16 %v102, %v101
  %v138 = vpack.c.b16 %v104, %v103
  %v139 = vpack.c.b16 %v106, %v105
  %v140 = vpack.c.b16 %v108, %v107
  %v141 = vpack.c.b16 %v110, %v109
  %v142 = vpack.c.b16 %v112, %v111
  %v143 = vpack.c.b16 %v114, %v113
  %v144 = vpack.c.b16 %v116, %v115
  %v145 = vpack.c.b16 %v118, %v117
  %v146 = vpack.c.b16 %v120, %v119
  %v147 = vpack.c.b16 %v122, %v121
  %v148 = vpack.c.b16 %v124, %v123
  %v149 = vpack.c.b16 %v126, %v125
  %v150 = vpack.c.b16 %v128, %v127
  %v151 = vpack.c.b16 %v130, %v129
  %v152 = vpack.c.b16 %v132, %v131
  %v153 = vpack.c.b16 %v134, %v133
  %v154 = vpack.c.b16 %v136, %v135
  %v159 = vunpack.c.l.b16 %v25
  %v160 = vunpack.c.l.b16 %v26
  %v161 = vunpack.c.l.b16 %v27
  %v162 = vunpack.c.l.b16 %v28
  %v163 = vpack.c.b16 %v160, %v159
  %v164 = vpack.c.b16 %v162, %v161
  %vm167 = vcmask 261120
  %v169 = vsel %vm167, %v137, 0
  %v172 = vsel %vm167, %v138, 0
  %v175 = vsel %vm167, %v139, 0
  %v178 = vsel %vm167, %v140, 0
  %v181 = vsel %vm167, %v141, 0
  %v184 = vsel %vm167, %v142, 0
  %v187 = vsel %vm167, %v143, 0
  %v190 = vsel %vm167, %v144, 0
  %v193 = vsel %vm167, %v145, 0
  %v196 = vsel %vm167, %v146, 0
  %v199 = vsel %vm167, %v147, 0
  %v202 = vsel %vm167, %v148, 0
  %v205 = vsel %vm167, %v149, 0
  %v208 = vsel %vm167, %v150, 0
  %v211 = vsel %vm167, %v151, 0
  %v214 = vsel %vm167, %v152, 0
  %v217 = vsel %vm167, %v153, 0
  %v220 = vsel %vm167, %v154, 0
  %222 = vmatpush.bf16.msra.mxu0 0
  %223 = vmatpush.bf16.msra.mxu0 0
  %224 = vmatpush.bf16.msra.mxu0 0
  %225 = vmatpush.bf16.msra.mxu0 0
  %226 = vmatpush.bf16.msra.mxu0 0
  %227 = vmatpush.bf16.msra.mxu0 0
  %228 = vmatpush.bf16.msra.mxu0 %v164
  %229 = vmatpush.bf16.msra.mxu0 %v163
  %230 = vmatmul.bf16.gmra.mxu0 %v169
  %v231 = vpop.f32.mrf.mxu0
  %v232 = vadd.f32 0.0, %v231
  %v233 = vpop.f32.mrf.mxu0
  %v234 = vadd.f32 0.0, %v233
  %235 = vmatmul.bf16.gmra.mxu0 %v172
  %v236 = vpop.f32.mrf.mxu0
  %v237 = vadd.f32 0.0, %v236
  %v238 = vpop.f32.mrf.mxu0
  %v239 = vadd.f32 0.0, %v238
  %240 = vmatmul.bf16.gmra.mxu0 %v175
  %v241 = vpop.f32.mrf.mxu0
  %v242 = vadd.f32 0.0, %v241
  %v243 = vpop.f32.mrf.mxu0
  %v244 = vadd.f32 0.0, %v243
  %245 = vmatmul.bf16.gmra.mxu0 %v178
  %v246 = vpop.f32.mrf.mxu0
  %v247 = vadd.f32 0.0, %v246
  %v248 = vpop.f32.mrf.mxu0
  %v249 = vadd.f32 0.0, %v248
  %250 = vmatmul.bf16.gmra.mxu0 %v181
  %v251 = vpop.f32.mrf.mxu0
  %v252 = vadd.f32 0.0, %v251
  %v253 = vpop.f32.mrf.mxu0
  %v254 = vadd.f32 0.0, %v253
  %255 = vmatmul.bf16.gmra.mxu0 %v184
  %v256 = vpop.f32.mrf.mxu0
  %v257 = vadd.f32 0.0, %v256
  %v258 = vpop.f32.mrf.mxu0
  %v259 = vadd.f32 0.0, %v258
  %260 = vmatmul.bf16.gmra.mxu0 %v187
  %v261 = vpop.f32.mrf.mxu0
  %v262 = vadd.f32 0.0, %v261
  %v263 = vpop.f32.mrf.mxu0
  %v264 = vadd.f32 0.0, %v263
  %265 = vmatmul.bf16.gmra.mxu0 %v190
  %v266 = vpop.f32.mrf.mxu0
  %v267 = vadd.f32 0.0, %v266
  %v268 = vpop.f32.mrf.mxu0
  %v269 = vadd.f32 0.0, %v268
  %270 = vmatmul.bf16.gmra.mxu0 %v193
  %v271 = vpop.f32.mrf.mxu0
  %v272 = vadd.f32 0.0, %v271
  %v273 = vpop.f32.mrf.mxu0
  %v274 = vadd.f32 0.0, %v273
  %275 = vmatmul.bf16.gmra.mxu0 %v196
  %v276 = vpop.f32.mrf.mxu0
  %v277 = vadd.f32 0.0, %v276
  %v278 = vpop.f32.mrf.mxu0
  %v279 = vadd.f32 0.0, %v278
  %280 = vmatmul.bf16.gmra.mxu0 %v199
  %v281 = vpop.f32.mrf.mxu0
  %v282 = vadd.f32 0.0, %v281
  %v283 = vpop.f32.mrf.mxu0
  %v284 = vadd.f32 0.0, %v283
  %285 = vmatmul.bf16.gmra.mxu0 %v202
  %v286 = vpop.f32.mrf.mxu0
  %v287 = vadd.f32 0.0, %v286
  %v288 = vpop.f32.mrf.mxu0
  %v289 = vadd.f32 0.0, %v288
  %290 = vmatmul.bf16.gmra.mxu0 %v205
  %v291 = vpop.f32.mrf.mxu0
  %v292 = vadd.f32 0.0, %v291
  %v293 = vpop.f32.mrf.mxu0
  %v294 = vadd.f32 0.0, %v293
  %295 = vmatmul.bf16.gmra.mxu0 %v208
  %v296 = vpop.f32.mrf.mxu0
  %v297 = vadd.f32 0.0, %v296
  %v298 = vpop.f32.mrf.mxu0
  %v299 = vadd.f32 0.0, %v298
  %300 = vmatmul.bf16.gmra.mxu0 %v211
  %v301 = vpop.f32.mrf.mxu0
  %v302 = vadd.f32 0.0, %v301
  %v303 = vpop.f32.mrf.mxu0
  %v304 = vadd.f32 0.0, %v303
  %305 = vmatmul.bf16.gmra.mxu0 %v214
  %v306 = vpop.f32.mrf.mxu0
  %v307 = vadd.f32 0.0, %v306
  %v308 = vpop.f32.mrf.mxu0
  %v309 = vadd.f32 0.0, %v308
  %310 = vmatmul.bf16.gmra.mxu0 %v217
  %v311 = vpop.f32.mrf.mxu0
  %v312 = vadd.f32 0.0, %v311
  %v313 = vpop.f32.mrf.mxu0
  %v314 = vadd.f32 0.0, %v313
  %315 = vmatmul.bf16.gmra.mxu0 %v220
  %v316 = vpop.f32.mrf.mxu0
  %v317 = vadd.f32 0.0, %v316
  %v318 = vpop.f32.mrf.mxu0
  %v319 = vadd.f32 0.0, %v318
  %320 = vdwg.mxu0
  %v321 = vld [vmem:[%s0 + $0x90] sm:$0xf]
  %v322 = vld [vmem:[%s0 + $0x94] sm:$0xf]
  %v323 = vld [vmem:[%s0 + $0x98] sm:$0xf]
  %v324 = vld [vmem:[%s0 + $0x9c] sm:$0xf]
  %v325 = vld [vmem:[%s0 + $0xa0] sm:$0xf]
  %v326 = vld [vmem:[%s0 + $0xa4] sm:$0xf]
  %v327 = vld [vmem:[%s0 + $0xa8] sm:$0xf]
  %v328 = vld [vmem:[%s0 + $0xac] sm:$0xf]
  %v329 = vld [vmem:[%s0 + $0xb0] sm:$0xf]
  %v330 = vld [vmem:[%s0 + $0xb4] sm:$0xf]
  %v331 = vld [vmem:[%s0 + $0xb8] sm:$0xf]
  %v332 = vld [vmem:[%s0 + $0xbc] sm:$0xf]
  %v333 = vld [vmem:[%s0 + $0xc0] sm:$0xf]
  %v334 = vld [vmem:[%s0 + $0xc4] sm:$0xf]
  %v335 = vld [vmem:[%s0 + $0xc8] sm:$0xf]
  %v336 = vld [vmem:[%s0 + $0xcc] sm:$0xf]
  %v337 = vld [vmem:[%s0 + $0xd0] sm:$0xf]
  %v338 = vld [vmem:[%s0 + $0xd4] sm:$0xf]
  %v339 = vld [vmem:[%s0 + $0xd8] sm:$0xf]
  %v340 = vld [vmem:[%s0 + $0xdc] sm:$0xf]
  %v341 = vld [vmem:[%s0 + $0xe0] sm:$0xf]
  %v342 = vld [vmem:[%s0 + $0xe4] sm:$0xf]
  %v343 = vld [vmem:[%s0 + $0xe8] sm:$0xf]
  %v344 = vld [vmem:[%s0 + $0xec] sm:$0xf]
  %v345 = vld [vmem:[%s0 + $0xf0] sm:$0xf]
  %v346 = vld [vmem:[%s0 + $0xf4] sm:$0xf]
  %v347 = vld [vmem:[%s0 + $0xf8] sm:$0xf]
  %v348 = vld [vmem:[%s0 + $0xfc] sm:$0xf]
  %v349 = vld [vmem:[%s0 + $0x100] sm:$0xf]
  %v350 = vld [vmem:[%s0 + $0x104] sm:$0xf]
  %v351 = vld [vmem:[%s0 + $0x108] sm:$0xf]
  %v352 = vld [vmem:[%s0 + $0x10c] sm:$0xf]
  %v353 = vld [vmem:[%s0 + $0x110] sm:$0xf]
  %v354 = vld [vmem:[%s0 + $0x114] sm:$0xf]
  %v355 = vld [vmem:[%s0 + $0x118] sm:$0xf]
  %v356 = vld [vmem:[%s0 + $0x11c] sm:$0xf]
  %v393 = vunpack.c.l.b16 %v321
  %v394 = vunpack.c.l.b16 %v322
  %v395 = vunpack.c.l.b16 %v323
  %v396 = vunpack.c.l.b16 %v324
  %v397 = vunpack.c.l.b16 %v325
  %v398 = vunpack.c.l.b16 %v326
  %v399 = vunpack.c.l.b16 %v327
  %v400 = vunpack.c.l.b16 %v328
  %v401 = vunpack.c.l.b16 %v329
  %v402 = vunpack.c.l.b16 %v330
  %v403 = vunpack.c.l.b16 %v331
  %v404 = vunpack.c.l.b16 %v332
  %v405 = vunpack.c.l.b16 %v333
  %v406 = vunpack.c.l.b16 %v334
  %v407 = vunpack.c.l.b16 %v335
  %v408 = vunpack.c.l.b16 %v336
  %v409 = vunpack.c.l.b16 %v337
  %v410 = vunpack.c.l.b16 %v338
  %v411 = vunpack.c.l.b16 %v339
  %v412 = vunpack.c.l.b16 %v340
  %v413 = vunpack.c.l.b16 %v341
  %v414 = vunpack.c.l.b16 %v342
  %v415 = vunpack.c.l.b16 %v343
  %v416 = vunpack.c.l.b16 %v344
  %v417 = vunpack.c.l.b16 %v345
  %v418 = vunpack.c.l.b16 %v346
  %v419 = vunpack.c.l.b16 %v347
  %v420 = vunpack.c.l.b16 %v348
  %v421 = vunpack.c.l.b16 %v349
  %v422 = vunpack.c.l.b16 %v350
  %v423 = vunpack.c.l.b16 %v351
  %v424 = vunpack.c.l.b16 %v352
  %v425 = vunpack.c.l.b16 %v353
  %v426 = vunpack.c.l.b16 %v354
  %v427 = vunpack.c.l.b16 %v355
  %v428 = vunpack.c.l.b16 %v356
  %v429 = vpack.c.b16 %v394, %v393
  %v430 = vpack.c.b16 %v396, %v395
  %v431 = vpack.c.b16 %v398, %v397
  %v432 = vpack.c.b16 %v400, %v399
  %v433 = vpack.c.b16 %v402, %v401
  %v434 = vpack.c.b16 %v404, %v403
  %v435 = vpack.c.b16 %v406, %v405
  %v436 = vpack.c.b16 %v408, %v407
  %v437 = vpack.c.b16 %v410, %v409
  %v438 = vpack.c.b16 %v412, %v411
  %v439 = vpack.c.b16 %v414, %v413
  %v440 = vpack.c.b16 %v416, %v415
  %v441 = vpack.c.b16 %v418, %v417
  %v442 = vpack.c.b16 %v420, %v419
  %v443 = vpack.c.b16 %v422, %v421
  %v444 = vpack.c.b16 %v424, %v423
  %v445 = vpack.c.b16 %v426, %v425
  %v446 = vpack.c.b16 %v428, %v427
  %v448 = vsel %vm167, %v429, 0
  %v451 = vsel %vm167, %v430, 0
  %v454 = vsel %vm167, %v431, 0
  %v457 = vsel %vm167, %v432, 0
  %v460 = vsel %vm167, %v433, 0
  %v463 = vsel %vm167, %v434, 0
  %v466 = vsel %vm167, %v435, 0
  %v469 = vsel %vm167, %v436, 0
  %v472 = vsel %vm167, %v437, 0
  %v475 = vsel %vm167, %v438, 0
  %v478 = vsel %vm167, %v439, 0
  %v481 = vsel %vm167, %v440, 0
  %v484 = vsel %vm167, %v441, 0
  %v487 = vsel %vm167, %v442, 0
  %v490 = vsel %vm167, %v443, 0
  %v493 = vsel %vm167, %v444, 0
  %v496 = vsel %vm167, %v445, 0
  %v499 = vsel %vm167, %v446, 0
  %501 = vmatpush.bf16.msra.mxu0 0
  %502 = vmatpush.bf16.msra.mxu0 0
  %503 = vmatpush.bf16.msra.mxu0 0
  %504 = vmatpush.bf16.msra.mxu0 0
  %505 = vmatpush.bf16.msra.mxu0 0
  %506 = vmatpush.bf16.msra.mxu0 0
  %507 = vmatpush.bf16.msra.mxu0 %v164
  %508 = vmatpush.bf16.msra.mxu0 %v163
  %509 = vmatmul.bf16.gmra.mxu0 %v448
  %v510 = vpop.f32.mrf.mxu0
  %v511 = vadd.f32 0.0, %v510
  %v512 = vpop.f32.mrf.mxu0
  %v513 = vadd.f32 0.0, %v512
  %514 = vmatmul.bf16.gmra.mxu0 %v451
  %v515 = vpop.f32.mrf.mxu0
  %v516 = vadd.f32 0.0, %v515
  %v517 = vpop.f32.mrf.mxu0
  %v518 = vadd.f32 0.0, %v517
  %519 = vmatmul.bf16.gmra.mxu0 %v454
  %v520 = vpop.f32.mrf.mxu0
  %v521 = vadd.f32 0.0, %v520
  %v522 = vpop.f32.mrf.mxu0
  %v523 = vadd.f32 0.0, %v522
  %524 = vmatmul.bf16.gmra.mxu0 %v457
  %v525 = vpop.f32.mrf.mxu0
  %v526 = vadd.f32 0.0, %v525
  %v527 = vpop.f32.mrf.mxu0
  %v528 = vadd.f32 0.0, %v527
  %529 = vmatmul.bf16.gmra.mxu0 %v460
  %v530 = vpop.f32.mrf.mxu0
  %v531 = vadd.f32 0.0, %v530
  %v532 = vpop.f32.mrf.mxu0
  %v533 = vadd.f32 0.0, %v532
  %534 = vmatmul.bf16.gmra.mxu0 %v463
  %v535 = vpop.f32.mrf.mxu0
  %v536 = vadd.f32 0.0, %v535
  %v537 = vpop.f32.mrf.mxu0
  %v538 = vadd.f32 0.0, %v537
  %539 = vmatmul.bf16.gmra.mxu0 %v466
  %v540 = vpop.f32.mrf.mxu0
  %v541 = vadd.f32 0.0, %v540
  %v542 = vpop.f32.mrf.mxu0
  %v543 = vadd.f32 0.0, %v542
  %544 = vmatmul.bf16.gmra.mxu0 %v469
  %v545 = vpop.f32.mrf.mxu0
  %v546 = vadd.f32 0.0, %v545
  %v547 = vpop.f32.mrf.mxu0
  %v548 = vadd.f32 0.0, %v547
  %549 = vmatmul.bf16.gmra.mxu0 %v472
  %v550 = vpop.f32.mrf.mxu0
  %v551 = vadd.f32 0.0, %v550
  %v552 = vpop.f32.mrf.mxu0
  %v553 = vadd.f32 0.0, %v552
  %554 = vmatmul.bf16.gmra.mxu0 %v475
  %v555 = vpop.f32.mrf.mxu0
  %v556 = vadd.f32 0.0, %v555
  %v557 = vpop.f32.mrf.mxu0
  %v558 = vadd.f32 0.0, %v557
  %559 = vmatmul.bf16.gmra.mxu0 %v478
  %v560 = vpop.f32.mrf.mxu0
  %v561 = vadd.f32 0.0, %v560
  %v562 = vpop.f32.mrf.mxu0
  %v563 = vadd.f32 0.0, %v562
  %564 = vmatmul.bf16.gmra.mxu0 %v481
  %v565 = vpop.f32.mrf.mxu0
  %v566 = vadd.f32 0.0, %v565
  %v567 = vpop.f32.mrf.mxu0
  %v568 = vadd.f32 0.0, %v567
  %569 = vmatmul.bf16.gmra.mxu0 %v484
  %v570 = vpop.f32.mrf.mxu0
  %v571 = vadd.f32 0.0, %v570
  %v572 = vpop.f32.mrf.mxu0
  %v573 = vadd.f32 0.0, %v572
  %574 = vmatmul.bf16.gmra.mxu0 %v487
  %v575 = vpop.f32.mrf.mxu0
  %v576 = vadd.f32 0.0, %v575
  %v577 = vpop.f32.mrf.mxu0
  %v578 = vadd.f32 0.0, %v577
  %579 = vmatmul.bf16.gmra.mxu0 %v490
  %v580 = vpop.f32.mrf.mxu0
  %v581 = vadd.f32 0.0, %v580
  %v582 = vpop.f32.mrf.mxu0
  %v583 = vadd.f32 0.0, %v582
  %584 = vmatmul.bf16.gmra.mxu0 %v493
  %v585 = vpop.f32.mrf.mxu0
  %v586 = vadd.f32 0.0, %v585
  %v587 = vpop.f32.mrf.mxu0
  %v588 = vadd.f32 0.0, %v587
  %589 = vmatmul.bf16.gmra.mxu0 %v496
  %v590 = vpop.f32.mrf.mxu0
  %v591 = vadd.f32 0.0, %v590
  %v592 = vpop.f32.mrf.mxu0
  %v593 = vadd.f32 0.0, %v592
  %594 = vmatmul.bf16.gmra.mxu0 %v499
  %v595 = vpop.f32.mrf.mxu0
  %v596 = vadd.f32 0.0, %v595
  %v597 = vpop.f32.mrf.mxu0
  %v598 = vadd.f32 0.0, %v597
  %599 = vdwg.mxu0
  %v600 = vmax.f32 %v232, %v511
  %v601 = vmax.f32 %v234, %v513
  %v602 = vmax.f32 %v237, %v516
  %v603 = vmax.f32 %v239, %v518
  %v604 = vmax.f32 %v242, %v521
  %v605 = vmax.f32 %v244, %v523
  %v606 = vmax.f32 %v247, %v526
  %v607 = vmax.f32 %v249, %v528
  %v608 = vmax.f32 %v252, %v531
  %v609 = vmax.f32 %v254, %v533
  %v610 = vmax.f32 %v257, %v536
  %v611 = vmax.f32 %v259, %v538
  %v612 = vmax.f32 %v262, %v541
  %v613 = vmax.f32 %v264, %v543
  %v614 = vmax.f32 %v267, %v546
  %v615 = vmax.f32 %v269, %v548
  %v616 = vmax.f32 %v272, %v551
  %v617 = vmax.f32 %v274, %v553
  %v618 = vmax.f32 %v277, %v556
  %v619 = vmax.f32 %v279, %v558
  %v620 = vmax.f32 %v282, %v561
  %v621 = vmax.f32 %v284, %v563
  %v622 = vmax.f32 %v287, %v566
  %v623 = vmax.f32 %v289, %v568
  %v624 = vmax.f32 %v292, %v571
  %v625 = vmax.f32 %v294, %v573
  %v626 = vmax.f32 %v297, %v576
  %v627 = vmax.f32 %v299, %v578
  %v628 = vmax.f32 %v302, %v581
  %v629 = vmax.f32 %v304, %v583
  %v630 = vmax.f32 %v307, %v586
  %v631 = vmax.f32 %v309, %v588
  %v632 = vmax.f32 %v312, %v591
  %v633 = vmax.f32 %v314, %v593
  %v634 = vmax.f32 %v317, %v596
  %v635 = vmax.f32 %v319, %v598
  %v636 = vld [vmem:[%s0 + $0x120] sm:$0xf]
  %v637 = vld [vmem:[%s0 + $0x124] sm:$0xf]
  %v638 = vld [vmem:[%s0 + $0x128] sm:$0xf]
  %v639 = vld [vmem:[%s0 + $0x12c] sm:$0xf]
  %v640 = vld [vmem:[%s0 + $0x130] sm:$0xf]
  %v641 = vld [vmem:[%s0 + $0x134] sm:$0xf]
  %v642 = vld [vmem:[%s0 + $0x138] sm:$0xf]
  %v643 = vld [vmem:[%s0 + $0x13c] sm:$0xf]
  %v644 = vld [vmem:[%s0 + $0x140] sm:$0xf]
  %v645 = vld [vmem:[%s0 + $0x144] sm:$0xf]
  %v646 = vld [vmem:[%s0 + $0x148] sm:$0xf]
  %v647 = vld [vmem:[%s0 + $0x14c] sm:$0xf]
  %v648 = vld [vmem:[%s0 + $0x150] sm:$0xf]
  %v649 = vld [vmem:[%s0 + $0x154] sm:$0xf]
  %v650 = vld [vmem:[%s0 + $0x158] sm:$0xf]
  %v651 = vld [vmem:[%s0 + $0x15c] sm:$0xf]
  %v652 = vld [vmem:[%s0 + $0x160] sm:$0xf]
  %v653 = vld [vmem:[%s0 + $0x164] sm:$0xf]
  %v654 = vld [vmem:[%s0 + $0x168] sm:$0xf]
  %v655 = vld [vmem:[%s0 + $0x16c] sm:$0xf]
  %v656 = vld [vmem:[%s0 + $0x170] sm:$0xf]
  %v657 = vld [vmem:[%s0 + $0x174] sm:$0xf]
  %v658 = vld [vmem:[%s0 + $0x178] sm:$0xf]
  %v659 = vld [vmem:[%s0 + $0x17c] sm:$0xf]
  %v660 = vld [vmem:[%s0 + $0x180] sm:$0xf]
  %v661 = vld [vmem:[%s0 + $0x184] sm:$0xf]
  %v662 = vld [vmem:[%s0 + $0x188] sm:$0xf]
  %v663 = vld [vmem:[%s0 + $0x18c] sm:$0xf]
  %v664 = vld [vmem:[%s0 + $0x190] sm:$0xf]
  %v665 = vld [vmem:[%s0 + $0x194] sm:$0xf]
  %v666 = vld [vmem:[%s0 + $0x198] sm:$0xf]
  %v667 = vld [vmem:[%s0 + $0x19c] sm:$0xf]
  %v668 = vld [vmem:[%s0 + $0x1a0] sm:$0xf]
  %v669 = vld [vmem:[%s0 + $0x1a4] sm:$0xf]
  %v670 = vld [vmem:[%s0 + $0x1a8] sm:$0xf]
  %v671 = vld [vmem:[%s0 + $0x1ac] sm:$0xf]
  %v708 = vunpack.c.l.b16 %v636
  %v709 = vunpack.c.l.b16 %v637
  %v710 = vunpack.c.l.b16 %v638
  %v711 = vunpack.c.l.b16 %v639
  %v712 = vunpack.c.l.b16 %v640
  %v713 = vunpack.c.l.b16 %v641
  %v714 = vunpack.c.l.b16 %v642
  %v715 = vunpack.c.l.b16 %v643
  %v716 = vunpack.c.l.b16 %v644
  %v717 = vunpack.c.l.b16 %v645
  %v718 = vunpack.c.l.b16 %v646
  %v719 = vunpack.c.l.b16 %v647
  %v720 = vunpack.c.l.b16 %v648
  %v721 = vunpack.c.l.b16 %v649
  %v722 = vunpack.c.l.b16 %v650
  %v723 = vunpack.c.l.b16 %v651
  %v724 = vunpack.c.l.b16 %v652
  %v725 = vunpack.c.l.b16 %v653
  %v726 = vunpack.c.l.b16 %v654
  %v727 = vunpack.c.l.b16 %v655
  %v728 = vunpack.c.l.b16 %v656
  %v729 = vunpack.c.l.b16 %v657
  %v730 = vunpack.c.l.b16 %v658
  %v731 = vunpack.c.l.b16 %v659
  %v732 = vunpack.c.l.b16 %v660
  %v733 = vunpack.c.l.b16 %v661
  %v734 = vunpack.c.l.b16 %v662
  %v735 = vunpack.c.l.b16 %v663
  %v736 = vunpack.c.l.b16 %v664
  %v737 = vunpack.c.l.b16 %v665
  %v738 = vunpack.c.l.b16 %v666
  %v739 = vunpack.c.l.b16 %v667
  %v740 = vunpack.c.l.b16 %v668
  %v741 = vunpack.c.l.b16 %v669
  %v742 = vunpack.c.l.b16 %v670
  %v743 = vunpack.c.l.b16 %v671
  %v744 = vpack.c.b16 %v709, %v708
  %v745 = vpack.c.b16 %v711, %v710
  %v746 = vpack.c.b16 %v713, %v712
  %v747 = vpack.c.b16 %v715, %v714
  %v748 = vpack.c.b16 %v717, %v716
  %v749 = vpack.c.b16 %v719, %v718
  %v750 = vpack.c.b16 %v721, %v720
  %v751 = vpack.c.b16 %v723, %v722
  %v752 = vpack.c.b16 %v725, %v724
  %v753 = vpack.c.b16 %v727, %v726
  %v754 = vpack.c.b16 %v729, %v728
  %v755 = vpack.c.b16 %v731, %v730
  %v756 = vpack.c.b16 %v733, %v732
  %v757 = vpack.c.b16 %v735, %v734
  %v758 = vpack.c.b16 %v737, %v736
  %v759 = vpack.c.b16 %v739, %v738
  %v760 = vpack.c.b16 %v741, %v740
  %v761 = vpack.c.b16 %v743, %v742
  %v763 = vsel %vm167, %v744, 0
  %v766 = vsel %vm167, %v745, 0
  %v769 = vsel %vm167, %v746, 0
  %v772 = vsel %vm167, %v747, 0
  %v775 = vsel %vm167, %v748, 0
  %v778 = vsel %vm167, %v749, 0
  %v781 = vsel %vm167, %v750, 0
  %v784 = vsel %vm167, %v751, 0
  %v787 = vsel %vm167, %v752, 0
  %v790 = vsel %vm167, %v753, 0
  %v793 = vsel %vm167, %v754, 0
  %v796 = vsel %vm167, %v755, 0
  %v799 = vsel %vm167, %v756, 0
  %v802 = vsel %vm167, %v757, 0
  %v805 = vsel %vm167, %v758, 0
  %v808 = vsel %vm167, %v759, 0
  %v811 = vsel %vm167, %v760, 0
  %v814 = vsel %vm167, %v761, 0
  %816 = vmatpush.bf16.msra.mxu0 0
  %817 = vmatpush.bf16.msra.mxu0 0
  %818 = vmatpush.bf16.msra.mxu0 0
  %819 = vmatpush.bf16.msra.mxu0 0
  %820 = vmatpush.bf16.msra.mxu0 0
  %821 = vmatpush.bf16.msra.mxu0 0
  %822 = vmatpush.bf16.msra.mxu0 %v164
  %823 = vmatpush.bf16.msra.mxu0 %v163
  %824 = vmatmul.bf16.gmra.mxu0 %v763
  %v825 = vpop.f32.mrf.mxu0
  %v826 = vadd.f32 0.0, %v825
  %v827 = vpop.f32.mrf.mxu0
  %v828 = vadd.f32 0.0, %v827
  %829 = vmatmul.bf16.gmra.mxu0 %v766
  %v830 = vpop.f32.mrf.mxu0
  %v831 = vadd.f32 0.0, %v830
  %v832 = vpop.f32.mrf.mxu0
  %v833 = vadd.f32 0.0, %v832
  %834 = vmatmul.bf16.gmra.mxu0 %v769
  %v835 = vpop.f32.mrf.mxu0
  %v836 = vadd.f32 0.0, %v835
  %v837 = vpop.f32.mrf.mxu0
  %v838 = vadd.f32 0.0, %v837
  %839 = vmatmul.bf16.gmra.mxu0 %v772
  %v840 = vpop.f32.mrf.mxu0
  %v841 = vadd.f32 0.0, %v840
  %v842 = vpop.f32.mrf.mxu0
  %v843 = vadd.f32 0.0, %v842
  %844 = vmatmul.bf16.gmra.mxu0 %v775
  %v845 = vpop.f32.mrf.mxu0
  %v846 = vadd.f32 0.0, %v845
  %v847 = vpop.f32.mrf.mxu0
  %v848 = vadd.f32 0.0, %v847
  %849 = vmatmul.bf16.gmra.mxu0 %v778
  %v850 = vpop.f32.mrf.mxu0
  %v851 = vadd.f32 0.0, %v850
  %v852 = vpop.f32.mrf.mxu0
  %v853 = vadd.f32 0.0, %v852
  %854 = vmatmul.bf16.gmra.mxu0 %v781
  %v855 = vpop.f32.mrf.mxu0
  %v856 = vadd.f32 0.0, %v855
  %v857 = vpop.f32.mrf.mxu0
  %v858 = vadd.f32 0.0, %v857
  %859 = vmatmul.bf16.gmra.mxu0 %v784
  %v860 = vpop.f32.mrf.mxu0
  %v861 = vadd.f32 0.0, %v860
  %v862 = vpop.f32.mrf.mxu0
  %v863 = vadd.f32 0.0, %v862
  %864 = vmatmul.bf16.gmra.mxu0 %v787
  %v865 = vpop.f32.mrf.mxu0
  %v866 = vadd.f32 0.0, %v865
  %v867 = vpop.f32.mrf.mxu0
  %v868 = vadd.f32 0.0, %v867
  %869 = vmatmul.bf16.gmra.mxu0 %v790
  %v870 = vpop.f32.mrf.mxu0
  %v871 = vadd.f32 0.0, %v870
  %v872 = vpop.f32.mrf.mxu0
  %v873 = vadd.f32 0.0, %v872
  %874 = vmatmul.bf16.gmra.mxu0 %v793
  %v875 = vpop.f32.mrf.mxu0
  %v876 = vadd.f32 0.0, %v875
  %v877 = vpop.f32.mrf.mxu0
  %v878 = vadd.f32 0.0, %v877
  %879 = vmatmul.bf16.gmra.mxu0 %v796
  %v880 = vpop.f32.mrf.mxu0
  %v881 = vadd.f32 0.0, %v880
  %v882 = vpop.f32.mrf.mxu0
  %v883 = vadd.f32 0.0, %v882
  %884 = vmatmul.bf16.gmra.mxu0 %v799
  %v885 = vpop.f32.mrf.mxu0
  %v886 = vadd.f32 0.0, %v885
  %v887 = vpop.f32.mrf.mxu0
  %v888 = vadd.f32 0.0, %v887
  %889 = vmatmul.bf16.gmra.mxu0 %v802
  %v890 = vpop.f32.mrf.mxu0
  %v891 = vadd.f32 0.0, %v890
  %v892 = vpop.f32.mrf.mxu0
  %v893 = vadd.f32 0.0, %v892
  %894 = vmatmul.bf16.gmra.mxu0 %v805
  %v895 = vpop.f32.mrf.mxu0
  %v896 = vadd.f32 0.0, %v895
  %v897 = vpop.f32.mrf.mxu0
  %v898 = vadd.f32 0.0, %v897
  %899 = vmatmul.bf16.gmra.mxu0 %v808
  %v900 = vpop.f32.mrf.mxu0
  %v901 = vadd.f32 0.0, %v900
  %v902 = vpop.f32.mrf.mxu0
  %v903 = vadd.f32 0.0, %v902
  %904 = vmatmul.bf16.gmra.mxu0 %v811
  %v905 = vpop.f32.mrf.mxu0
  %v906 = vadd.f32 0.0, %v905
  %v907 = vpop.f32.mrf.mxu0
  %v908 = vadd.f32 0.0, %v907
  %909 = vmatmul.bf16.gmra.mxu0 %v814
  %v910 = vpop.f32.mrf.mxu0
  %v911 = vadd.f32 0.0, %v910
  %v912 = vpop.f32.mrf.mxu0
  %v913 = vadd.f32 0.0, %v912
  %914 = vdwg.mxu0
  %v915 = vmax.f32 %v600, %v826
  %v916 = vmax.f32 %v601, %v828
  %v917 = vmax.f32 %v602, %v831
  %v918 = vmax.f32 %v603, %v833
  %v919 = vmax.f32 %v604, %v836
  %v920 = vmax.f32 %v605, %v838
  %v921 = vmax.f32 %v606, %v841
  %v922 = vmax.f32 %v607, %v843
  %v923 = vmax.f32 %v608, %v846
  %v924 = vmax.f32 %v609, %v848
  %v925 = vmax.f32 %v610, %v851
  %v926 = vmax.f32 %v611, %v853
  %v927 = vmax.f32 %v612, %v856
  %v928 = vmax.f32 %v613, %v858
  %v929 = vmax.f32 %v614, %v861
  %v930 = vmax.f32 %v615, %v863
  %v931 = vmax.f32 %v616, %v866
  %v932 = vmax.f32 %v617, %v868
  %v933 = vmax.f32 %v618, %v871
  %v934 = vmax.f32 %v619, %v873
  %v935 = vmax.f32 %v620, %v876
  %v936 = vmax.f32 %v621, %v878
  %v937 = vmax.f32 %v622, %v881
  %v938 = vmax.f32 %v623, %v883
  %v939 = vmax.f32 %v624, %v886
  %v940 = vmax.f32 %v625, %v888
  %v941 = vmax.f32 %v626, %v891
  %v942 = vmax.f32 %v627, %v893
  %v943 = vmax.f32 %v628, %v896
  %v944 = vmax.f32 %v629, %v898
  %v945 = vmax.f32 %v630, %v901
  %v946 = vmax.f32 %v631, %v903
  %v947 = vmax.f32 %v632, %v906
  %v948 = vmax.f32 %v633, %v908
  %v949 = vmax.f32 %v634, %v911
  %v950 = vmax.f32 %v635, %v913
  %v951 = vld [vmem:[%s0 + $0x1b0] sm:$0xf]
  %v952 = vld [vmem:[%s0 + $0x1b4] sm:$0xf]
  %v953 = vld [vmem:[%s0 + $0x1b8] sm:$0xf]
  %v954 = vld [vmem:[%s0 + $0x1bc] sm:$0xf]
  %v955 = vld [vmem:[%s0 + $0x1c0] sm:$0xf]
  %v956 = vld [vmem:[%s0 + $0x1c4] sm:$0xf]
  %v957 = vld [vmem:[%s0 + $0x1c8] sm:$0xf]
  %v958 = vld [vmem:[%s0 + $0x1cc] sm:$0xf]
  %v959 = vld [vmem:[%s0 + $0x1d0] sm:$0xf]
  %v960 = vld [vmem:[%s0 + $0x1d4] sm:$0xf]
  %v961 = vld [vmem:[%s0 + $0x1d8] sm:$0xf]
  %v962 = vld [vmem:[%s0 + $0x1dc] sm:$0xf]
  %v963 = vld [vmem:[%s0 + $0x1e0] sm:$0xf]
  %v964 = vld [vmem:[%s0 + $0x1e4] sm:$0xf]
  %v965 = vld [vmem:[%s0 + $0x1e8] sm:$0xf]
  %v966 = vld [vmem:[%s0 + $0x1ec] sm:$0xf]
  %v967 = vld [vmem:[%s0 + $0x1f0] sm:$0xf]
  %v968 = vld [vmem:[%s0 + $0x1f4] sm:$0xf]
  %v969 = vld [vmem:[%s0 + $0x1f8] sm:$0xf]
  %v970 = vld [vmem:[%s0 + $0x1fc] sm:$0xf]
  %v971 = vld [vmem:[%s0 + $0x200] sm:$0xf]
  %v972 = vld [vmem:[%s0 + $0x204] sm:$0xf]
  %v973 = vld [vmem:[%s0 + $0x208] sm:$0xf]
  %v974 = vld [vmem:[%s0 + $0x20c] sm:$0xf]
  %v975 = vld [vmem:[%s0 + $0x210] sm:$0xf]
  %v976 = vld [vmem:[%s0 + $0x214] sm:$0xf]
  %v977 = vld [vmem:[%s0 + $0x218] sm:$0xf]
  %v978 = vld [vmem:[%s0 + $0x21c] sm:$0xf]
  %v979 = vld [vmem:[%s0 + $0x220] sm:$0xf]
  %v980 = vld [vmem:[%s0 + $0x224] sm:$0xf]
  %v981 = vld [vmem:[%s0 + $0x228] sm:$0xf]
  %v982 = vld [vmem:[%s0 + $0x22c] sm:$0xf]
  %v983 = vld [vmem:[%s0 + $0x230] sm:$0xf]
  %v984 = vld [vmem:[%s0 + $0x234] sm:$0xf]
  %v985 = vld [vmem:[%s0 + $0x238] sm:$0xf]
  %v986 = vld [vmem:[%s0 + $0x23c] sm:$0xf]
  %v1023 = vunpack.c.l.b16 %v951
  %v1024 = vunpack.c.l.b16 %v952
  %v1025 = vunpack.c.l.b16 %v953
  %v1026 = vunpack.c.l.b16 %v954
  %v1027 = vunpack.c.l.b16 %v955
  %v1028 = vunpack.c.l.b16 %v956
  %v1029 = vunpack.c.l.b16 %v957
  %v1030 = vunpack.c.l.b16 %v958
  %v1031 = vunpack.c.l.b16 %v959
  %v1032 = vunpack.c.l.b16 %v960
  %v1033 = vunpack.c.l.b16 %v961
  %v1034 = vunpack.c.l.b16 %v962
  %v1035 = vunpack.c.l.b16 %v963
  %v1036 = vunpack.c.l.b16 %v964
  %v1037 = vunpack.c.l.b16 %v965
  %v1038 = vunpack.c.l.b16 %v966
  %v1039 = vunpack.c.l.b16 %v967
  %v1040 = vunpack.c.l.b16 %v968
  %v1041 = vunpack.c.l.b16 %v969
  %v1042 = vunpack.c.l.b16 %v970
  %v1043 = vunpack.c.l.b16 %v971
  %v1044 = vunpack.c.l.b16 %v972
  %v1045 = vunpack.c.l.b16 %v973
  %v1046 = vunpack.c.l.b16 %v974
  %v1047 = vunpack.c.l.b16 %v975
  %v1048 = vunpack.c.l.b16 %v976
  %v1049 = vunpack.c.l.b16 %v977
  %v1050 = vunpack.c.l.b16 %v978
  %v1051 = vunpack.c.l.b16 %v979
  %v1052 = vunpack.c.l.b16 %v980
  %v1053 = vunpack.c.l.b16 %v981
  %v1054 = vunpack.c.l.b16 %v982
  %v1055 = vunpack.c.l.b16 %v983
  %v1056 = vunpack.c.l.b16 %v984
  %v1057 = vunpack.c.l.b16 %v985
  %v1058 = vunpack.c.l.b16 %v986
  %v1059 = vpack.c.b16 %v1024, %v1023
  %v1060 = vpack.c.b16 %v1026, %v1025
  %v1061 = vpack.c.b16 %v1028, %v1027
  %v1062 = vpack.c.b16 %v1030, %v1029
  %v1063 = vpack.c.b16 %v1032, %v1031
  %v1064 = vpack.c.b16 %v1034, %v1033
  %v1065 = vpack.c.b16 %v1036, %v1035
  %v1066 = vpack.c.b16 %v1038, %v1037
  %v1067 = vpack.c.b16 %v1040, %v1039
  %v1068 = vpack.c.b16 %v1042, %v1041
  %v1069 = vpack.c.b16 %v1044, %v1043
  %v1070 = vpack.c.b16 %v1046, %v1045
  %v1071 = vpack.c.b16 %v1048, %v1047
  %v1072 = vpack.c.b16 %v1050, %v1049
  %v1073 = vpack.c.b16 %v1052, %v1051
  %v1074 = vpack.c.b16 %v1054, %v1053
  %v1075 = vpack.c.b16 %v1056, %v1055
  %v1076 = vpack.c.b16 %v1058, %v1057
  %v1078 = vsel %vm167, %v1059, 0
  %v1081 = vsel %vm167, %v1060, 0
  %v1084 = vsel %vm167, %v1061, 0
  %v1087 = vsel %vm167, %v1062, 0
  %v1090 = vsel %vm167, %v1063, 0
  %v1093 = vsel %vm167, %v1064, 0
  %v1096 = vsel %vm167, %v1065, 0
  %v1099 = vsel %vm167, %v1066, 0
  %v1102 = vsel %vm167, %v1067, 0
  %v1105 = vsel %vm167, %v1068, 0
  %v1108 = vsel %vm167, %v1069, 0
  %v1111 = vsel %vm167, %v1070, 0
  %v1114 = vsel %vm167, %v1071, 0
  %v1117 = vsel %vm167, %v1072, 0
  %v1120 = vsel %vm167, %v1073, 0
  %v1123 = vsel %vm167, %v1074, 0
  %v1126 = vsel %vm167, %v1075, 0
  %v1129 = vsel %vm167, %v1076, 0
  %1131 = vmatpush.bf16.msra.mxu0 0
  %1132 = vmatpush.bf16.msra.mxu0 0
  %1133 = vmatpush.bf16.msra.mxu0 0
  %1134 = vmatpush.bf16.msra.mxu0 0
  %1135 = vmatpush.bf16.msra.mxu0 0
  %1136 = vmatpush.bf16.msra.mxu0 0
  %1137 = vmatpush.bf16.msra.mxu0 %v164
  %1138 = vmatpush.bf16.msra.mxu0 %v163
  %1139 = vmatmul.bf16.gmra.mxu0 %v1078
  %v1140 = vpop.f32.mrf.mxu0
  %v1141 = vadd.f32 0.0, %v1140
  %v1142 = vpop.f32.mrf.mxu0
  %v1143 = vadd.f32 0.0, %v1142
  %1144 = vmatmul.bf16.gmra.mxu0 %v1081
  %v1145 = vpop.f32.mrf.mxu0
  %v1146 = vadd.f32 0.0, %v1145
  %v1147 = vpop.f32.mrf.mxu0
  %v1148 = vadd.f32 0.0, %v1147
  %1149 = vmatmul.bf16.gmra.mxu0 %v1084
  %v1150 = vpop.f32.mrf.mxu0
  %v1151 = vadd.f32 0.0, %v1150
  %v1152 = vpop.f32.mrf.mxu0
  %v1153 = vadd.f32 0.0, %v1152
  %1154 = vmatmul.bf16.gmra.mxu0 %v1087
  %v1155 = vpop.f32.mrf.mxu0
  %v1156 = vadd.f32 0.0, %v1155
  %v1157 = vpop.f32.mrf.mxu0
  %v1158 = vadd.f32 0.0, %v1157
  %1159 = vmatmul.bf16.gmra.mxu0 %v1090
  %v1160 = vpop.f32.mrf.mxu0
  %v1161 = vadd.f32 0.0, %v1160
  %v1162 = vpop.f32.mrf.mxu0
  %v1163 = vadd.f32 0.0, %v1162
  %1164 = vmatmul.bf16.gmra.mxu0 %v1093
  %v1165 = vpop.f32.mrf.mxu0
  %v1166 = vadd.f32 0.0, %v1165
  %v1167 = vpop.f32.mrf.mxu0
  %v1168 = vadd.f32 0.0, %v1167
  %1169 = vmatmul.bf16.gmra.mxu0 %v1096
  %v1170 = vpop.f32.mrf.mxu0
  %v1171 = vadd.f32 0.0, %v1170
  %v1172 = vpop.f32.mrf.mxu0
  %v1173 = vadd.f32 0.0, %v1172
  %1174 = vmatmul.bf16.gmra.mxu0 %v1099
  %v1175 = vpop.f32.mrf.mxu0
  %v1176 = vadd.f32 0.0, %v1175
  %v1177 = vpop.f32.mrf.mxu0
  %v1178 = vadd.f32 0.0, %v1177
  %1179 = vmatmul.bf16.gmra.mxu0 %v1102
  %v1180 = vpop.f32.mrf.mxu0
  %v1181 = vadd.f32 0.0, %v1180
  %v1182 = vpop.f32.mrf.mxu0
  %v1183 = vadd.f32 0.0, %v1182
  %1184 = vmatmul.bf16.gmra.mxu0 %v1105
  %v1185 = vpop.f32.mrf.mxu0
  %v1186 = vadd.f32 0.0, %v1185
  %v1187 = vpop.f32.mrf.mxu0
  %v1188 = vadd.f32 0.0, %v1187
  %1189 = vmatmul.bf16.gmra.mxu0 %v1108
  %v1190 = vpop.f32.mrf.mxu0
  %v1191 = vadd.f32 0.0, %v1190
  %v1192 = vpop.f32.mrf.mxu0
  %v1193 = vadd.f32 0.0, %v1192
  %1194 = vmatmul.bf16.gmra.mxu0 %v1111
  %v1195 = vpop.f32.mrf.mxu0
  %v1196 = vadd.f32 0.0, %v1195
  %v1197 = vpop.f32.mrf.mxu0
  %v1198 = vadd.f32 0.0, %v1197
  %1199 = vmatmul.bf16.gmra.mxu0 %v1114
  %v1200 = vpop.f32.mrf.mxu0
  %v1201 = vadd.f32 0.0, %v1200
  %v1202 = vpop.f32.mrf.mxu0
  %v1203 = vadd.f32 0.0, %v1202
  %1204 = vmatmul.bf16.gmra.mxu0 %v1117
  %v1205 = vpop.f32.mrf.mxu0
  %v1206 = vadd.f32 0.0, %v1205
  %v1207 = vpop.f32.mrf.mxu0
  %v1208 = vadd.f32 0.0, %v1207
  %1209 = vmatmul.bf16.gmra.mxu0 %v1120
  %v1210 = vpop.f32.mrf.mxu0
  %v1211 = vadd.f32 0.0, %v1210
  %v1212 = vpop.f32.mrf.mxu0
  %v1213 = vadd.f32 0.0, %v1212
  %1214 = vmatmul.bf16.gmra.mxu0 %v1123
  %v1215 = vpop.f32.mrf.mxu0
  %v1216 = vadd.f32 0.0, %v1215
  %v1217 = vpop.f32.mrf.mxu0
  %v1218 = vadd.f32 0.0, %v1217
  %1219 = vmatmul.bf16.gmra.mxu0 %v1126
  %v1220 = vpop.f32.mrf.mxu0
  %v1221 = vadd.f32 0.0, %v1220
  %v1222 = vpop.f32.mrf.mxu0
  %v1223 = vadd.f32 0.0, %v1222
  %1224 = vmatmul.bf16.gmra.mxu0 %v1129
  %v1225 = vpop.f32.mrf.mxu0
  %v1226 = vadd.f32 0.0, %v1225
  %v1227 = vpop.f32.mrf.mxu0
  %v1228 = vadd.f32 0.0, %v1227
  %1229 = vdwg.mxu0
  %v1230 = vmax.f32 %v915, %v1141
  %v1231 = vmax.f32 %v916, %v1143
  %v1232 = vmax.f32 %v917, %v1146
  %v1233 = vmax.f32 %v918, %v1148
  %v1234 = vmax.f32 %v919, %v1151
  %v1235 = vmax.f32 %v920, %v1153
  %v1236 = vmax.f32 %v921, %v1156
  %v1237 = vmax.f32 %v922, %v1158
  %v1238 = vmax.f32 %v923, %v1161
  %v1239 = vmax.f32 %v924, %v1163
  %v1240 = vmax.f32 %v925, %v1166
  %v1241 = vmax.f32 %v926, %v1168
  %v1242 = vmax.f32 %v927, %v1171
  %v1243 = vmax.f32 %v928, %v1173
  %v1244 = vmax.f32 %v929, %v1176
  %v1245 = vmax.f32 %v930, %v1178
  %v1246 = vmax.f32 %v931, %v1181
  %v1247 = vmax.f32 %v932, %v1183
  %v1248 = vmax.f32 %v933, %v1186
  %v1249 = vmax.f32 %v934, %v1188
  %v1250 = vmax.f32 %v935, %v1191
  %v1251 = vmax.f32 %v936, %v1193
  %v1252 = vmax.f32 %v937, %v1196
  %v1253 = vmax.f32 %v938, %v1198
  %v1254 = vmax.f32 %v939, %v1201
  %v1255 = vmax.f32 %v940, %v1203
  %v1256 = vmax.f32 %v941, %v1206
  %v1257 = vmax.f32 %v942, %v1208
  %v1258 = vmax.f32 %v943, %v1211
  %v1259 = vmax.f32 %v944, %v1213
  %v1260 = vmax.f32 %v945, %v1216
  %v1261 = vmax.f32 %v946, %v1218
  %v1262 = vmax.f32 %v947, %v1221
  %v1263 = vmax.f32 %v948, %v1223
  %v1264 = vmax.f32 %v949, %v1226
  %v1265 = vmax.f32 %v950, %v1228
  %v1266 = vperm.slane %v24, 0
  %v1267 = vadd.f32 %v1230, %v1266
  %v1268 = vadd.f32 %v1231, %v1266
  %v1269 = vadd.f32 %v1232, %v1266
  %v1270 = vadd.f32 %v1233, %v1266
  %v1271 = vadd.f32 %v1234, %v1266
  %v1272 = vadd.f32 %v1235, %v1266
  %v1273 = vadd.f32 %v1236, %v1266
  %v1274 = vadd.f32 %v1237, %v1266
  %v1275 = vadd.f32 %v1238, %v1266
  %v1276 = vadd.f32 %v1239, %v1266
  %v1277 = vadd.f32 %v1240, %v1266
  %v1278 = vadd.f32 %v1241, %v1266
  %v1279 = vadd.f32 %v1242, %v1266
  %v1280 = vadd.f32 %v1243, %v1266
  %v1281 = vadd.f32 %v1244, %v1266
  %v1282 = vadd.f32 %v1245, %v1266
  %v1283 = vadd.f32 %v1246, %v1266
  %v1284 = vadd.f32 %v1247, %v1266
  %v1285 = vadd.f32 %v1248, %v1266
  %v1286 = vadd.f32 %v1249, %v1266
  %v1287 = vadd.f32 %v1250, %v1266
  %v1288 = vadd.f32 %v1251, %v1266
  %v1289 = vadd.f32 %v1252, %v1266
  %v1290 = vadd.f32 %v1253, %v1266
  %v1291 = vadd.f32 %v1254, %v1266
  %v1292 = vadd.f32 %v1255, %v1266
  %v1293 = vadd.f32 %v1256, %v1266
  %v1294 = vadd.f32 %v1257, %v1266
  %v1295 = vadd.f32 %v1258, %v1266
  %v1296 = vadd.f32 %v1259, %v1266
  %v1297 = vadd.f32 %v1260, %v1266
  %v1298 = vadd.f32 %v1261, %v1266
  %v1299 = vadd.f32 %v1262, %v1266
  %v1300 = vadd.f32 %v1263, %v1266
  %v1301 = vadd.f32 %v1264, %v1266
  %v1302 = vadd.f32 %v1265, %v1266
  %v1303 = vmax.f32 %v1267, 0.0
  %v1304 = vmax.f32 %v1268, 0.0
  %v1305 = vmax.f32 %v1269, 0.0
  %v1306 = vmax.f32 %v1270, 0.0
  %v1307 = vmax.f32 %v1271, 0.0
  %v1308 = vmax.f32 %v1272, 0.0
  %v1309 = vmax.f32 %v1273, 0.0
  %v1310 = vmax.f32 %v1274, 0.0
  %v1311 = vmax.f32 %v1275, 0.0
  %v1312 = vmax.f32 %v1276, 0.0
  %v1313 = vmax.f32 %v1277, 0.0
  %v1314 = vmax.f32 %v1278, 0.0
  %v1315 = vmax.f32 %v1279, 0.0
  %v1316 = vmax.f32 %v1280, 0.0
  %v1317 = vmax.f32 %v1281, 0.0
  %v1318 = vmax.f32 %v1282, 0.0
  %v1319 = vmax.f32 %v1283, 0.0
  %v1320 = vmax.f32 %v1284, 0.0
  %v1321 = vmax.f32 %v1285, 0.0
  %v1322 = vmax.f32 %v1286, 0.0
  %v1323 = vmax.f32 %v1287, 0.0
  %v1324 = vmax.f32 %v1288, 0.0
  %v1325 = vmax.f32 %v1289, 0.0
  %v1326 = vmax.f32 %v1290, 0.0
  %v1327 = vmax.f32 %v1291, 0.0
  %v1328 = vmax.f32 %v1292, 0.0
  %v1329 = vmax.f32 %v1293, 0.0
  %v1330 = vmax.f32 %v1294, 0.0
  %v1331 = vmax.f32 %v1295, 0.0
  %v1332 = vmax.f32 %v1296, 0.0
  %v1333 = vmax.f32 %v1297, 0.0
  %v1334 = vmax.f32 %v1298, 0.0
  %v1335 = vmax.f32 %v1299, 0.0
  %v1336 = vmax.f32 %v1300, 0.0
  %v1337 = vmax.f32 %v1301, 0.0
  %v1338 = vmax.f32 %v1302, 0.0
  %v1339 = vpack.c.bf16 %v1304, %v1303
  %v1340 = vpack.c.bf16 %v1310, %v1309
  %v1341 = vld [vmem:[%s2] sm:$0xf]
  %v1342 = vld [vmem:[%s2 + $0x4] sm:$0xf]
  %v1343 = vld [vmem:[%s2 + $0x8] sm:$0xf]
  %v1344 = vld [vmem:[%s2 + $0xc] sm:$0xf]
  %v1345 = vld [vmem:[%s2 + $0x10] sm:$0xf]
  %v1346 = vld [vmem:[%s2 + $0x14] sm:$0xf]
  %v1347 = vld [vmem:[%s2 + $0x18] sm:$0xf]
  %v1348 = vld [vmem:[%s2 + $0x1c] sm:$0xf]
  %v1349 = vld [vmem:[%s2 + $0x20] sm:$0xf]
  %v1350 = vld [vmem:[%s2 + $0x24] sm:$0xf]
  %v1351 = vld [vmem:[%s2 + $0x28] sm:$0xf]
  %v1352 = vld [vmem:[%s2 + $0x2c] sm:$0xf]
  %v1353 = vld [vmem:[%s2 + $0x30] sm:$0xf]
  %v1354 = vld [vmem:[%s2 + $0x34] sm:$0xf]
  %v1355 = vld [vmem:[%s2 + $0x38] sm:$0xf]
  %v1356 = vld [vmem:[%s2 + $0x3c] sm:$0xf]
  %v1357 = vpack.c.bf16 %v1305, %v1304
  %v1358 = vpack.c.bf16 %v1311, %v1310
  %s1359 = scalar_lea.vmem %s2, 64
  %v1360 = vld [vmem:[%s1359] sm:$0xf]
  %v1361 = vld [vmem:[%s1359 + $0x4] sm:$0xf]
  %v1362 = vld [vmem:[%s1359 + $0x8] sm:$0xf]
  %v1363 = vld [vmem:[%s1359 + $0xc] sm:$0xf]
  %v1364 = vld [vmem:[%s1359 + $0x10] sm:$0xf]
  %v1365 = vld [vmem:[%s1359 + $0x14] sm:$0xf]
  %v1366 = vld [vmem:[%s1359 + $0x18] sm:$0xf]
  %v1367 = vld [vmem:[%s1359 + $0x1c] sm:$0xf]
  %v1368 = vld [vmem:[%s1359 + $0x20] sm:$0xf]
  %v1369 = vld [vmem:[%s1359 + $0x24] sm:$0xf]
  %v1370 = vld [vmem:[%s1359 + $0x28] sm:$0xf]
  %v1371 = vld [vmem:[%s1359 + $0x2c] sm:$0xf]
  %v1372 = vld [vmem:[%s1359 + $0x30] sm:$0xf]
  %v1373 = vld [vmem:[%s1359 + $0x34] sm:$0xf]
  %v1374 = vld [vmem:[%s1359 + $0x38] sm:$0xf]
  %v1375 = vld [vmem:[%s1359 + $0x3c] sm:$0xf]
  %v1392 = vunpack.c.l.b16 %v1360
  %v1393 = vunpack.c.l.b16 %v1361
  %v1394 = vunpack.c.l.b16 %v1362
  %v1395 = vunpack.c.l.b16 %v1363
  %v1396 = vunpack.c.l.b16 %v1364
  %v1397 = vunpack.c.l.b16 %v1365
  %v1398 = vunpack.c.l.b16 %v1366
  %v1399 = vunpack.c.l.b16 %v1367
  %v1400 = vunpack.c.l.b16 %v1368
  %v1401 = vunpack.c.l.b16 %v1369
  %v1402 = vunpack.c.l.b16 %v1370
  %v1403 = vunpack.c.l.b16 %v1371
  %v1404 = vunpack.c.l.b16 %v1372
  %v1405 = vunpack.c.l.b16 %v1373
  %v1406 = vunpack.c.l.b16 %v1374
  %v1407 = vunpack.c.l.b16 %v1375
  %v1408 = vpack.c.b16 %v1393, %v1392
  %v1409 = vpack.c.b16 %v1395, %v1394
  %v1410 = vpack.c.b16 %v1397, %v1396
  %v1411 = vpack.c.b16 %v1399, %v1398
  %v1412 = vpack.c.b16 %v1401, %v1400
  %v1413 = vpack.c.b16 %v1403, %v1402
  %v1414 = vpack.c.b16 %v1405, %v1404
  %v1415 = vpack.c.b16 %v1407, %v1406
  %1424 = vmatpush.bf16.msra.mxu0 %v1415
  %1425 = vmatpush.bf16.msra.mxu0 %v1414
  %1426 = vmatpush.bf16.msra.mxu0 %v1413
  %1427 = vmatpush.bf16.msra.mxu0 %v1412
  %1428 = vmatpush.bf16.msra.mxu0 %v1411
  %1429 = vmatpush.bf16.msra.mxu0 %v1410
  %1430 = vmatpush.bf16.msra.mxu0 %v1409
  %1431 = vmatpush.bf16.msra.mxu0 %v1408
  %1432 = vmatmul.bf16.gmra.mxu0 %v1357
  %v1433 = vpop.f32.mrf.mxu0
  %v1434 = vadd.f32 0.0, %v1433
  %v1435 = vpop.f32.mrf.mxu0
  %v1436 = vadd.f32 0.0, %v1435
  %1437 = vmatmul.bf16.gmra.mxu0 %v1358
  %v1438 = vpop.f32.mrf.mxu0
  %v1439 = vadd.f32 0.0, %v1438
  %v1440 = vpop.f32.mrf.mxu0
  %v1441 = vadd.f32 0.0, %v1440
  %1442 = vdwg.mxu0
  %v1459 = vunpack.c.l.b16 %v1341
  %v1460 = vunpack.c.l.b16 %v1342
  %v1461 = vunpack.c.l.b16 %v1343
  %v1462 = vunpack.c.l.b16 %v1344
  %v1463 = vunpack.c.l.b16 %v1345
  %v1464 = vunpack.c.l.b16 %v1346
  %v1465 = vunpack.c.l.b16 %v1347
  %v1466 = vunpack.c.l.b16 %v1348
  %v1467 = vunpack.c.l.b16 %v1349
  %v1468 = vunpack.c.l.b16 %v1350
  %v1469 = vunpack.c.l.b16 %v1351
  %v1470 = vunpack.c.l.b16 %v1352
  %v1471 = vunpack.c.l.b16 %v1353
  %v1472 = vunpack.c.l.b16 %v1354
  %v1473 = vunpack.c.l.b16 %v1355
  %v1474 = vunpack.c.l.b16 %v1356
  %v1475 = vpack.c.b16 %v1460, %v1459
  %v1476 = vpack.c.b16 %v1462, %v1461
  %v1477 = vpack.c.b16 %v1464, %v1463
  %v1478 = vpack.c.b16 %v1466, %v1465
  %v1479 = vpack.c.b16 %v1468, %v1467
  %v1480 = vpack.c.b16 %v1470, %v1469
  %v1481 = vpack.c.b16 %v1472, %v1471
  %v1482 = vpack.c.b16 %v1474, %v1473
  %1491 = vmatpush.bf16.msra.mxu0 %v1482
  %1492 = vmatpush.bf16.msra.mxu0 %v1481
  %1493 = vmatpush.bf16.msra.mxu0 %v1480
  %1494 = vmatpush.bf16.msra.mxu0 %v1479
  %1495 = vmatpush.bf16.msra.mxu0 %v1478
  %1496 = vmatpush.bf16.msra.mxu0 %v1477
  %1497 = vmatpush.bf16.msra.mxu0 %v1476
  %1498 = vmatpush.bf16.msra.mxu0 %v1475
  %1499 = vmatmul.bf16.gmra.mxu0 %v1339
  %v1500 = vpop.f32.mrf.mxu0
  %v1501 = vadd.f32 %v1434, %v1500
  %v1502 = vpop.f32.mrf.mxu0
  %v1503 = vadd.f32 %v1436, %v1502
  %1504 = vmatmul.bf16.gmra.mxu0 %v1340
  %v1505 = vpop.f32.mrf.mxu0
  %v1506 = vadd.f32 %v1439, %v1505
  %v1507 = vpop.f32.mrf.mxu0
  %v1508 = vadd.f32 %v1441, %v1507
  %1509 = vdwg.mxu0
  %v1510 = vpack.c.bf16 %v1306, %v1305
  %v1511 = vpack.c.bf16 %v1312, %v1311
  %s1512 = scalar_lea.vmem %s2, 128
  %v1513 = vld [vmem:[%s1512] sm:$0xf]
  %v1514 = vld [vmem:[%s1512 + $0x4] sm:$0xf]
  %v1515 = vld [vmem:[%s1512 + $0x8] sm:$0xf]
  %v1516 = vld [vmem:[%s1512 + $0xc] sm:$0xf]
  %v1517 = vld [vmem:[%s1512 + $0x10] sm:$0xf]
  %v1518 = vld [vmem:[%s1512 + $0x14] sm:$0xf]
  %v1519 = vld [vmem:[%s1512 + $0x18] sm:$0xf]
  %v1520 = vld [vmem:[%s1512 + $0x1c] sm:$0xf]
  %v1521 = vld [vmem:[%s1512 + $0x20] sm:$0xf]
  %v1522 = vld [vmem:[%s1512 + $0x24] sm:$0xf]
  %v1523 = vld [vmem:[%s1512 + $0x28] sm:$0xf]
  %v1524 = vld [vmem:[%s1512 + $0x2c] sm:$0xf]
  %v1525 = vld [vmem:[%s1512 + $0x30] sm:$0xf]
  %v1526 = vld [vmem:[%s1512 + $0x34] sm:$0xf]
  %v1527 = vld [vmem:[%s1512 + $0x38] sm:$0xf]
  %v1528 = vld [vmem:[%s1512 + $0x3c] sm:$0xf]
  %v1545 = vunpack.c.l.b16 %v1513
  %v1546 = vunpack.c.l.b16 %v1514
  %v1547 = vunpack.c.l.b16 %v1515
  %v1548 = vunpack.c.l.b16 %v1516
  %v1549 = vunpack.c.l.b16 %v1517
  %v1550 = vunpack.c.l.b16 %v1518
  %v1551 = vunpack.c.l.b16 %v1519
  %v1552 = vunpack.c.l.b16 %v1520
  %v1553 = vunpack.c.l.b16 %v1521
  %v1554 = vunpack.c.l.b16 %v1522
  %v1555 = vunpack.c.l.b16 %v1523
  %v1556 = vunpack.c.l.b16 %v1524
  %v1557 = vunpack.c.l.b16 %v1525
  %v1558 = vunpack.c.l.b16 %v1526
  %v1559 = vunpack.c.l.b16 %v1527
  %v1560 = vunpack.c.l.b16 %v1528
  %v1561 = vpack.c.b16 %v1546, %v1545
  %v1562 = vpack.c.b16 %v1548, %v1547
  %v1563 = vpack.c.b16 %v1550, %v1549
  %v1564 = vpack.c.b16 %v1552, %v1551
  %v1565 = vpack.c.b16 %v1554, %v1553
  %v1566 = vpack.c.b16 %v1556, %v1555
  %v1567 = vpack.c.b16 %v1558, %v1557
  %v1568 = vpack.c.b16 %v1560, %v1559
  %1577 = vmatpush.bf16.msra.mxu0 %v1568
  %1578 = vmatpush.bf16.msra.mxu0 %v1567
  %1579 = vmatpush.bf16.msra.mxu0 %v1566
  %1580 = vmatpush.bf16.msra.mxu0 %v1565
  %1581 = vmatpush.bf16.msra.mxu0 %v1564
  %1582 = vmatpush.bf16.msra.mxu0 %v1563
  %1583 = vmatpush.bf16.msra.mxu0 %v1562
  %1584 = vmatpush.bf16.msra.mxu0 %v1561
  %1585 = vmatmul.bf16.gmra.mxu0 %v1510
  %v1586 = vpop.f32.mrf.mxu0
  %v1587 = vadd.f32 0.0, %v1586
  %v1588 = vpop.f32.mrf.mxu0
  %v1589 = vadd.f32 0.0, %v1588
  %1590 = vmatmul.bf16.gmra.mxu0 %v1511
  %v1591 = vpop.f32.mrf.mxu0
  %v1592 = vadd.f32 0.0, %v1591
  %v1593 = vpop.f32.mrf.mxu0
  %v1594 = vadd.f32 0.0, %v1593
  %1595 = vdwg.mxu0
  %v1596 = vadd.f32 %v1501, %v1587
  %v1597 = vadd.f32 %v1503, %v1589
  %v1598 = vadd.f32 %v1506, %v1592
  %v1599 = vadd.f32 %v1508, %v1594
  %v1600 = vpack.c.bf16 %v1307, %v1306
  %v1601 = vpack.c.bf16 %v1313, %v1312
  %s1602 = scalar_lea.vmem %s2, 192
  %v1603 = vld [vmem:[%s1602] sm:$0xf]
  %v1604 = vld [vmem:[%s1602 + $0x4] sm:$0xf]
  %v1605 = vld [vmem:[%s1602 + $0x8] sm:$0xf]
  %v1606 = vld [vmem:[%s1602 + $0xc] sm:$0xf]
  %v1607 = vld [vmem:[%s1602 + $0x10] sm:$0xf]
  %v1608 = vld [vmem:[%s1602 + $0x14] sm:$0xf]
  %v1609 = vld [vmem:[%s1602 + $0x18] sm:$0xf]
  %v1610 = vld [vmem:[%s1602 + $0x1c] sm:$0xf]
  %v1611 = vld [vmem:[%s1602 + $0x20] sm:$0xf]
  %v1612 = vld [vmem:[%s1602 + $0x24] sm:$0xf]
  %v1613 = vld [vmem:[%s1602 + $0x28] sm:$0xf]
  %v1614 = vld [vmem:[%s1602 + $0x2c] sm:$0xf]
  %v1615 = vld [vmem:[%s1602 + $0x30] sm:$0xf]
  %v1616 = vld [vmem:[%s1602 + $0x34] sm:$0xf]
  %v1617 = vld [vmem:[%s1602 + $0x38] sm:$0xf]
  %v1618 = vld [vmem:[%s1602 + $0x3c] sm:$0xf]
  %v1635 = vunpack.c.l.b16 %v1603
  %v1636 = vunpack.c.l.b16 %v1604
  %v1637 = vunpack.c.l.b16 %v1605
  %v1638 = vunpack.c.l.b16 %v1606
  %v1639 = vunpack.c.l.b16 %v1607
  %v1640 = vunpack.c.l.b16 %v1608
  %v1641 = vunpack.c.l.b16 %v1609
  %v1642 = vunpack.c.l.b16 %v1610
  %v1643 = vunpack.c.l.b16 %v1611
  %v1644 = vunpack.c.l.b16 %v1612
  %v1645 = vunpack.c.l.b16 %v1613
  %v1646 = vunpack.c.l.b16 %v1614
  %v1647 = vunpack.c.l.b16 %v1615
  %v1648 = vunpack.c.l.b16 %v1616
  %v1649 = vunpack.c.l.b16 %v1617
  %v1650 = vunpack.c.l.b16 %v1618
  %v1651 = vpack.c.b16 %v1636, %v1635
  %v1652 = vpack.c.b16 %v1638, %v1637
  %v1653 = vpack.c.b16 %v1640, %v1639
  %v1654 = vpack.c.b16 %v1642, %v1641
  %v1655 = vpack.c.b16 %v1644, %v1643
  %v1656 = vpack.c.b16 %v1646, %v1645
  %v1657 = vpack.c.b16 %v1648, %v1647
  %v1658 = vpack.c.b16 %v1650, %v1649
  %1667 = vmatpush.bf16.msra.mxu0 %v1658
  %1668 = vmatpush.bf16.msra.mxu0 %v1657
  %1669 = vmatpush.bf16.msra.mxu0 %v1656
  %1670 = vmatpush.bf16.msra.mxu0 %v1655
  %1671 = vmatpush.bf16.msra.mxu0 %v1654
  %1672 = vmatpush.bf16.msra.mxu0 %v1653
  %1673 = vmatpush.bf16.msra.mxu0 %v1652
  %1674 = vmatpush.bf16.msra.mxu0 %v1651
  %1675 = vmatmul.bf16.gmra.mxu0 %v1600
  %v1676 = vpop.f32.mrf.mxu0
  %v1677 = vadd.f32 0.0, %v1676
  %v1678 = vpop.f32.mrf.mxu0
  %v1679 = vadd.f32 0.0, %v1678
  %1680 = vmatmul.bf16.gmra.mxu0 %v1601
  %v1681 = vpop.f32.mrf.mxu0
  %v1682 = vadd.f32 0.0, %v1681
  %v1683 = vpop.f32.mrf.mxu0
  %v1684 = vadd.f32 0.0, %v1683
  %1685 = vdwg.mxu0
  %v1686 = vadd.f32 %v1596, %v1677
  %v1687 = vadd.f32 %v1597, %v1679
  %v1688 = vadd.f32 %v1598, %v1682
  %v1689 = vadd.f32 %v1599, %v1684
  %v1690 = vpack.c.bf16 %v1308, %v1307
  %v1691 = vpack.c.bf16 %v1314, %v1313
  %s1692 = scalar_lea.vmem %s2, 256
  %v1693 = vld [vmem:[%s1692] sm:$0xf]
  %v1694 = vld [vmem:[%s1692 + $0x4] sm:$0xf]
  %v1695 = vld [vmem:[%s1692 + $0x8] sm:$0xf]
  %v1696 = vld [vmem:[%s1692 + $0xc] sm:$0xf]
  %v1697 = vld [vmem:[%s1692 + $0x10] sm:$0xf]
  %v1698 = vld [vmem:[%s1692 + $0x14] sm:$0xf]
  %v1699 = vld [vmem:[%s1692 + $0x18] sm:$0xf]
  %v1700 = vld [vmem:[%s1692 + $0x1c] sm:$0xf]
  %v1701 = vld [vmem:[%s1692 + $0x20] sm:$0xf]
  %v1702 = vld [vmem:[%s1692 + $0x24] sm:$0xf]
  %v1703 = vld [vmem:[%s1692 + $0x28] sm:$0xf]
  %v1704 = vld [vmem:[%s1692 + $0x2c] sm:$0xf]
  %v1705 = vld [vmem:[%s1692 + $0x30] sm:$0xf]
  %v1706 = vld [vmem:[%s1692 + $0x34] sm:$0xf]
  %v1707 = vld [vmem:[%s1692 + $0x38] sm:$0xf]
  %v1708 = vld [vmem:[%s1692 + $0x3c] sm:$0xf]
  %v1725 = vunpack.c.l.b16 %v1693
  %v1726 = vunpack.c.l.b16 %v1694
  %v1727 = vunpack.c.l.b16 %v1695
  %v1728 = vunpack.c.l.b16 %v1696
  %v1729 = vunpack.c.l.b16 %v1697
  %v1730 = vunpack.c.l.b16 %v1698
  %v1731 = vunpack.c.l.b16 %v1699
  %v1732 = vunpack.c.l.b16 %v1700
  %v1733 = vunpack.c.l.b16 %v1701
  %v1734 = vunpack.c.l.b16 %v1702
  %v1735 = vunpack.c.l.b16 %v1703
  %v1736 = vunpack.c.l.b16 %v1704
  %v1737 = vunpack.c.l.b16 %v1705
  %v1738 = vunpack.c.l.b16 %v1706
  %v1739 = vunpack.c.l.b16 %v1707
  %v1740 = vunpack.c.l.b16 %v1708
  %v1741 = vpack.c.b16 %v1726, %v1725
  %v1742 = vpack.c.b16 %v1728, %v1727
  %v1743 = vpack.c.b16 %v1730, %v1729
  %v1744 = vpack.c.b16 %v1732, %v1731
  %v1745 = vpack.c.b16 %v1734, %v1733
  %v1746 = vpack.c.b16 %v1736, %v1735
  %v1747 = vpack.c.b16 %v1738, %v1737
  %v1748 = vpack.c.b16 %v1740, %v1739
  %1757 = vmatpush.bf16.msra.mxu0 %v1748
  %1758 = vmatpush.bf16.msra.mxu0 %v1747
  %1759 = vmatpush.bf16.msra.mxu0 %v1746
  %1760 = vmatpush.bf16.msra.mxu0 %v1745
  %1761 = vmatpush.bf16.msra.mxu0 %v1744
  %1762 = vmatpush.bf16.msra.mxu0 %v1743
  %1763 = vmatpush.bf16.msra.mxu0 %v1742
  %1764 = vmatpush.bf16.msra.mxu0 %v1741
  %1765 = vmatmul.bf16.gmra.mxu0 %v1690
  %v1766 = vpop.f32.mrf.mxu0
  %v1767 = vadd.f32 0.0, %v1766
  %v1768 = vpop.f32.mrf.mxu0
  %v1769 = vadd.f32 0.0, %v1768
  %1770 = vmatmul.bf16.gmra.mxu0 %v1691
  %v1771 = vpop.f32.mrf.mxu0
  %v1772 = vadd.f32 0.0, %v1771
  %v1773 = vpop.f32.mrf.mxu0
  %v1774 = vadd.f32 0.0, %v1773
  %1775 = vdwg.mxu0
  %v1776 = vadd.f32 %v1686, %v1767
  %v1777 = vadd.f32 %v1687, %v1769
  %v1778 = vadd.f32 %v1688, %v1772
  %v1779 = vadd.f32 %v1689, %v1774
  %v1780 = vpack.c.bf16 %v1316, %v1315
  %s1781 = scalar_lea.vmem %s2, 320
  %v1782 = vld [vmem:[%s1781] sm:$0xf]
  %v1783 = vld [vmem:[%s1781 + $0x4] sm:$0xf]
  %v1784 = vld [vmem:[%s1781 + $0x8] sm:$0xf]
  %v1785 = vld [vmem:[%s1781 + $0xc] sm:$0xf]
  %v1786 = vld [vmem:[%s1781 + $0x10] sm:$0xf]
  %v1787 = vld [vmem:[%s1781 + $0x14] sm:$0xf]
  %v1788 = vld [vmem:[%s1781 + $0x18] sm:$0xf]
  %v1789 = vld [vmem:[%s1781 + $0x1c] sm:$0xf]
  %v1790 = vld [vmem:[%s1781 + $0x20] sm:$0xf]
  %v1791 = vld [vmem:[%s1781 + $0x24] sm:$0xf]
  %v1792 = vld [vmem:[%s1781 + $0x28] sm:$0xf]
  %v1793 = vld [vmem:[%s1781 + $0x2c] sm:$0xf]
  %v1794 = vld [vmem:[%s1781 + $0x30] sm:$0xf]
  %v1795 = vld [vmem:[%s1781 + $0x34] sm:$0xf]
  %v1796 = vld [vmem:[%s1781 + $0x38] sm:$0xf]
  %v1797 = vld [vmem:[%s1781 + $0x3c] sm:$0xf]
  %v1814 = vunpack.c.l.b16 %v1782
  %v1815 = vunpack.c.l.b16 %v1783
  %v1816 = vunpack.c.l.b16 %v1784
  %v1817 = vunpack.c.l.b16 %v1785
  %v1818 = vunpack.c.l.b16 %v1786
  %v1819 = vunpack.c.l.b16 %v1787
  %v1820 = vunpack.c.l.b16 %v1788
  %v1821 = vunpack.c.l.b16 %v1789
  %v1822 = vunpack.c.l.b16 %v1790
  %v1823 = vunpack.c.l.b16 %v1791
  %v1824 = vunpack.c.l.b16 %v1792
  %v1825 = vunpack.c.l.b16 %v1793
  %v1826 = vunpack.c.l.b16 %v1794
  %v1827 = vunpack.c.l.b16 %v1795
  %v1828 = vunpack.c.l.b16 %v1796
  %v1829 = vunpack.c.l.b16 %v1797
  %v1830 = vpack.c.b16 %v1815, %v1814
  %v1831 = vpack.c.b16 %v1817, %v1816
  %v1832 = vpack.c.b16 %v1819, %v1818
  %v1833 = vpack.c.b16 %v1821, %v1820
  %v1834 = vpack.c.b16 %v1823, %v1822
  %v1835 = vpack.c.b16 %v1825, %v1824
  %v1836 = vpack.c.b16 %v1827, %v1826
  %v1837 = vpack.c.b16 %v1829, %v1828
  %1846 = vmatpush.bf16.msra.mxu0 %v1837
  %1847 = vmatpush.bf16.msra.mxu0 %v1836
  %1848 = vmatpush.bf16.msra.mxu0 %v1835
  %1849 = vmatpush.bf16.msra.mxu0 %v1834
  %1850 = vmatpush.bf16.msra.mxu0 %v1833
  %1851 = vmatpush.bf16.msra.mxu0 %v1832
  %1852 = vmatpush.bf16.msra.mxu0 %v1831
  %1853 = vmatpush.bf16.msra.mxu0 %v1830
  %1854 = vmatmul.bf16.gmra.mxu0 %v1340
  %v1855 = vpop.f32.mrf.mxu0
  %v1856 = vadd.f32 0.0, %v1855
  %v1857 = vpop.f32.mrf.mxu0
  %v1858 = vadd.f32 0.0, %v1857
  %1859 = vmatmul.bf16.gmra.mxu0 %v1780
  %v1860 = vpop.f32.mrf.mxu0
  %v1861 = vadd.f32 0.0, %v1860
  %v1862 = vpop.f32.mrf.mxu0
  %v1863 = vadd.f32 0.0, %v1862
  %1864 = vdwg.mxu0
  %v1865 = vadd.f32 %v1776, %v1856
  %v1866 = vadd.f32 %v1777, %v1858
  %v1867 = vadd.f32 %v1778, %v1861
  %v1868 = vadd.f32 %v1779, %v1863
  %v1869 = vpack.c.bf16 %v1317, %v1316
  %s1870 = scalar_lea.vmem %s2, 384
  %v1871 = vld [vmem:[%s1870] sm:$0xf]
  %v1872 = vld [vmem:[%s1870 + $0x4] sm:$0xf]
  %v1873 = vld [vmem:[%s1870 + $0x8] sm:$0xf]
  %v1874 = vld [vmem:[%s1870 + $0xc] sm:$0xf]
  %v1875 = vld [vmem:[%s1870 + $0x10] sm:$0xf]
  %v1876 = vld [vmem:[%s1870 + $0x14] sm:$0xf]
  %v1877 = vld [vmem:[%s1870 + $0x18] sm:$0xf]
  %v1878 = vld [vmem:[%s1870 + $0x1c] sm:$0xf]
  %v1879 = vld [vmem:[%s1870 + $0x20] sm:$0xf]
  %v1880 = vld [vmem:[%s1870 + $0x24] sm:$0xf]
  %v1881 = vld [vmem:[%s1870 + $0x28] sm:$0xf]
  %v1882 = vld [vmem:[%s1870 + $0x2c] sm:$0xf]
  %v1883 = vld [vmem:[%s1870 + $0x30] sm:$0xf]
  %v1884 = vld [vmem:[%s1870 + $0x34] sm:$0xf]
  %v1885 = vld [vmem:[%s1870 + $0x38] sm:$0xf]
  %v1886 = vld [vmem:[%s1870 + $0x3c] sm:$0xf]
  %v1903 = vunpack.c.l.b16 %v1871
  %v1904 = vunpack.c.l.b16 %v1872
  %v1905 = vunpack.c.l.b16 %v1873
  %v1906 = vunpack.c.l.b16 %v1874
  %v1907 = vunpack.c.l.b16 %v1875
  %v1908 = vunpack.c.l.b16 %v1876
  %v1909 = vunpack.c.l.b16 %v1877
  %v1910 = vunpack.c.l.b16 %v1878
  %v1911 = vunpack.c.l.b16 %v1879
  %v1912 = vunpack.c.l.b16 %v1880
  %v1913 = vunpack.c.l.b16 %v1881
  %v1914 = vunpack.c.l.b16 %v1882
  %v1915 = vunpack.c.l.b16 %v1883
  %v1916 = vunpack.c.l.b16 %v1884
  %v1917 = vunpack.c.l.b16 %v1885
  %v1918 = vunpack.c.l.b16 %v1886
  %v1919 = vpack.c.b16 %v1904, %v1903
  %v1920 = vpack.c.b16 %v1906, %v1905
  %v1921 = vpack.c.b16 %v1908, %v1907
  %v1922 = vpack.c.b16 %v1910, %v1909
  %v1923 = vpack.c.b16 %v1912, %v1911
  %v1924 = vpack.c.b16 %v1914, %v1913
  %v1925 = vpack.c.b16 %v1916, %v1915
  %v1926 = vpack.c.b16 %v1918, %v1917
  %1935 = vmatpush.bf16.msra.mxu0 %v1926
  %1936 = vmatpush.bf16.msra.mxu0 %v1925
  %1937 = vmatpush.bf16.msra.mxu0 %v1924
  %1938 = vmatpush.bf16.msra.mxu0 %v1923
  %1939 = vmatpush.bf16.msra.mxu0 %v1922
  %1940 = vmatpush.bf16.msra.mxu0 %v1921
  %1941 = vmatpush.bf16.msra.mxu0 %v1920
  %1942 = vmatpush.bf16.msra.mxu0 %v1919
  %1943 = vmatmul.bf16.gmra.mxu0 %v1358
  %v1944 = vpop.f32.mrf.mxu0
  %v1945 = vadd.f32 0.0, %v1944
  %v1946 = vpop.f32.mrf.mxu0
  %v1947 = vadd.f32 0.0, %v1946
  %1948 = vmatmul.bf16.gmra.mxu0 %v1869
  %v1949 = vpop.f32.mrf.mxu0
  %v1950 = vadd.f32 0.0, %v1949
  %v1951 = vpop.f32.mrf.mxu0
  %v1952 = vadd.f32 0.0, %v1951
  %1953 = vdwg.mxu0
  %v1954 = vadd.f32 %v1865, %v1945
  %v1955 = vadd.f32 %v1866, %v1947
  %v1956 = vadd.f32 %v1867, %v1950
  %v1957 = vadd.f32 %v1868, %v1952
  %v1958 = vpack.c.bf16 %v1318, %v1317
  %s1959 = scalar_lea.vmem %s2, 448
  %v1960 = vld [vmem:[%s1959] sm:$0xf]
  %v1961 = vld [vmem:[%s1959 + $0x4] sm:$0xf]
  %v1962 = vld [vmem:[%s1959 + $0x8] sm:$0xf]
  %v1963 = vld [vmem:[%s1959 + $0xc] sm:$0xf]
  %v1964 = vld [vmem:[%s1959 + $0x10] sm:$0xf]
  %v1965 = vld [vmem:[%s1959 + $0x14] sm:$0xf]
  %v1966 = vld [vmem:[%s1959 + $0x18] sm:$0xf]
  %v1967 = vld [vmem:[%s1959 + $0x1c] sm:$0xf]
  %v1968 = vld [vmem:[%s1959 + $0x20] sm:$0xf]
  %v1969 = vld [vmem:[%s1959 + $0x24] sm:$0xf]
  %v1970 = vld [vmem:[%s1959 + $0x28] sm:$0xf]
  %v1971 = vld [vmem:[%s1959 + $0x2c] sm:$0xf]
  %v1972 = vld [vmem:[%s1959 + $0x30] sm:$0xf]
  %v1973 = vld [vmem:[%s1959 + $0x34] sm:$0xf]
  %v1974 = vld [vmem:[%s1959 + $0x38] sm:$0xf]
  %v1975 = vld [vmem:[%s1959 + $0x3c] sm:$0xf]
  %v1992 = vunpack.c.l.b16 %v1960
  %v1993 = vunpack.c.l.b16 %v1961
  %v1994 = vunpack.c.l.b16 %v1962
  %v1995 = vunpack.c.l.b16 %v1963
  %v1996 = vunpack.c.l.b16 %v1964
  %v1997 = vunpack.c.l.b16 %v1965
  %v1998 = vunpack.c.l.b16 %v1966
  %v1999 = vunpack.c.l.b16 %v1967
  %v2000 = vunpack.c.l.b16 %v1968
  %v2001 = vunpack.c.l.b16 %v1969
  %v2002 = vunpack.c.l.b16 %v1970
  %v2003 = vunpack.c.l.b16 %v1971
  %v2004 = vunpack.c.l.b16 %v1972
  %v2005 = vunpack.c.l.b16 %v1973
  %v2006 = vunpack.c.l.b16 %v1974
  %v2007 = vunpack.c.l.b16 %v1975
  %v2008 = vpack.c.b16 %v1993, %v1992
  %v2009 = vpack.c.b16 %v1995, %v1994
  %v2010 = vpack.c.b16 %v1997, %v1996
  %v2011 = vpack.c.b16 %v1999, %v1998
  %v2012 = vpack.c.b16 %v2001, %v2000
  %v2013 = vpack.c.b16 %v2003, %v2002
  %v2014 = vpack.c.b16 %v2005, %v2004
  %v2015 = vpack.c.b16 %v2007, %v2006
  %2024 = vmatpush.bf16.msra.mxu0 %v2015
  %2025 = vmatpush.bf16.msra.mxu0 %v2014
  %2026 = vmatpush.bf16.msra.mxu0 %v2013
  %2027 = vmatpush.bf16.msra.mxu0 %v2012
  %2028 = vmatpush.bf16.msra.mxu0 %v2011
  %2029 = vmatpush.bf16.msra.mxu0 %v2010
  %2030 = vmatpush.bf16.msra.mxu0 %v2009
  %2031 = vmatpush.bf16.msra.mxu0 %v2008
  %2032 = vmatmul.bf16.gmra.mxu0 %v1511
  %v2033 = vpop.f32.mrf.mxu0
  %v2034 = vadd.f32 0.0, %v2033
  %v2035 = vpop.f32.mrf.mxu0
  %v2036 = vadd.f32 0.0, %v2035
  %2037 = vmatmul.bf16.gmra.mxu0 %v1958
  %v2038 = vpop.f32.mrf.mxu0
  %v2039 = vadd.f32 0.0, %v2038
  %v2040 = vpop.f32.mrf.mxu0
  %v2041 = vadd.f32 0.0, %v2040
  %2042 = vdwg.mxu0
  %v2043 = vadd.f32 %v1954, %v2034
  %v2044 = vadd.f32 %v1955, %v2036
  %v2045 = vadd.f32 %v1956, %v2039
  %v2046 = vadd.f32 %v1957, %v2041
  %v2047 = vpack.c.bf16 %v1319, %v1318
  %s2048 = scalar_lea.vmem %s2, 512
  %v2049 = vld [vmem:[%s2048] sm:$0xf]
  %v2050 = vld [vmem:[%s2048 + $0x4] sm:$0xf]
  %v2051 = vld [vmem:[%s2048 + $0x8] sm:$0xf]
  %v2052 = vld [vmem:[%s2048 + $0xc] sm:$0xf]
  %v2053 = vld [vmem:[%s2048 + $0x10] sm:$0xf]
  %v2054 = vld [vmem:[%s2048 + $0x14] sm:$0xf]
  %v2055 = vld [vmem:[%s2048 + $0x18] sm:$0xf]
  %v2056 = vld [vmem:[%s2048 + $0x1c] sm:$0xf]
  %v2057 = vld [vmem:[%s2048 + $0x20] sm:$0xf]
  %v2058 = vld [vmem:[%s2048 + $0x24] sm:$0xf]
  %v2059 = vld [vmem:[%s2048 + $0x28] sm:$0xf]
  %v2060 = vld [vmem:[%s2048 + $0x2c] sm:$0xf]
  %v2061 = vld [vmem:[%s2048 + $0x30] sm:$0xf]
  %v2062 = vld [vmem:[%s2048 + $0x34] sm:$0xf]
  %v2063 = vld [vmem:[%s2048 + $0x38] sm:$0xf]
  %v2064 = vld [vmem:[%s2048 + $0x3c] sm:$0xf]
  %v2081 = vunpack.c.l.b16 %v2049
  %v2082 = vunpack.c.l.b16 %v2050
  %v2083 = vunpack.c.l.b16 %v2051
  %v2084 = vunpack.c.l.b16 %v2052
  %v2085 = vunpack.c.l.b16 %v2053
  %v2086 = vunpack.c.l.b16 %v2054
  %v2087 = vunpack.c.l.b16 %v2055
  %v2088 = vunpack.c.l.b16 %v2056
  %v2089 = vunpack.c.l.b16 %v2057
  %v2090 = vunpack.c.l.b16 %v2058
  %v2091 = vunpack.c.l.b16 %v2059
  %v2092 = vunpack.c.l.b16 %v2060
  %v2093 = vunpack.c.l.b16 %v2061
  %v2094 = vunpack.c.l.b16 %v2062
  %v2095 = vunpack.c.l.b16 %v2063
  %v2096 = vunpack.c.l.b16 %v2064
  %v2097 = vpack.c.b16 %v2082, %v2081
  %v2098 = vpack.c.b16 %v2084, %v2083
  %v2099 = vpack.c.b16 %v2086, %v2085
  %v2100 = vpack.c.b16 %v2088, %v2087
  %v2101 = vpack.c.b16 %v2090, %v2089
  %v2102 = vpack.c.b16 %v2092, %v2091
  %v2103 = vpack.c.b16 %v2094, %v2093
  %v2104 = vpack.c.b16 %v2096, %v2095
  %2113 = vmatpush.bf16.msra.mxu0 %v2104
  %2114 = vmatpush.bf16.msra.mxu0 %v2103
  %2115 = vmatpush.bf16.msra.mxu0 %v2102
  %2116 = vmatpush.bf16.msra.mxu0 %v2101
  %2117 = vmatpush.bf16.msra.mxu0 %v2100
  %2118 = vmatpush.bf16.msra.mxu0 %v2099
  %2119 = vmatpush.bf16.msra.mxu0 %v2098
  %2120 = vmatpush.bf16.msra.mxu0 %v2097
  %2121 = vmatmul.bf16.gmra.mxu0 %v1601
  %v2122 = vpop.f32.mrf.mxu0
  %v2123 = vadd.f32 0.0, %v2122
  %v2124 = vpop.f32.mrf.mxu0
  %v2125 = vadd.f32 0.0, %v2124
  %2126 = vmatmul.bf16.gmra.mxu0 %v2047
  %v2127 = vpop.f32.mrf.mxu0
  %v2128 = vadd.f32 0.0, %v2127
  %v2129 = vpop.f32.mrf.mxu0
  %v2130 = vadd.f32 0.0, %v2129
  %2131 = vdwg.mxu0
  %v2132 = vadd.f32 %v2043, %v2123
  %v2133 = vadd.f32 %v2044, %v2125
  %v2134 = vadd.f32 %v2045, %v2128
  %v2135 = vadd.f32 %v2046, %v2130
  %v2136 = vpack.c.bf16 %v1320, %v1319
  %s2137 = scalar_lea.vmem %s2, 576
  %v2138 = vld [vmem:[%s2137] sm:$0xf]
  %v2139 = vld [vmem:[%s2137 + $0x4] sm:$0xf]
  %v2140 = vld [vmem:[%s2137 + $0x8] sm:$0xf]
  %v2141 = vld [vmem:[%s2137 + $0xc] sm:$0xf]
  %v2142 = vld [vmem:[%s2137 + $0x10] sm:$0xf]
  %v2143 = vld [vmem:[%s2137 + $0x14] sm:$0xf]
  %v2144 = vld [vmem:[%s2137 + $0x18] sm:$0xf]
  %v2145 = vld [vmem:[%s2137 + $0x1c] sm:$0xf]
  %v2146 = vld [vmem:[%s2137 + $0x20] sm:$0xf]
  %v2147 = vld [vmem:[%s2137 + $0x24] sm:$0xf]
  %v2148 = vld [vmem:[%s2137 + $0x28] sm:$0xf]
  %v2149 = vld [vmem:[%s2137 + $0x2c] sm:$0xf]
  %v2150 = vld [vmem:[%s2137 + $0x30] sm:$0xf]
  %v2151 = vld [vmem:[%s2137 + $0x34] sm:$0xf]
  %v2152 = vld [vmem:[%s2137 + $0x38] sm:$0xf]
  %v2153 = vld [vmem:[%s2137 + $0x3c] sm:$0xf]
  %v2170 = vunpack.c.l.b16 %v2138
  %v2171 = vunpack.c.l.b16 %v2139
  %v2172 = vunpack.c.l.b16 %v2140
  %v2173 = vunpack.c.l.b16 %v2141
  %v2174 = vunpack.c.l.b16 %v2142
  %v2175 = vunpack.c.l.b16 %v2143
  %v2176 = vunpack.c.l.b16 %v2144
  %v2177 = vunpack.c.l.b16 %v2145
  %v2178 = vunpack.c.l.b16 %v2146
  %v2179 = vunpack.c.l.b16 %v2147
  %v2180 = vunpack.c.l.b16 %v2148
  %v2181 = vunpack.c.l.b16 %v2149
  %v2182 = vunpack.c.l.b16 %v2150
  %v2183 = vunpack.c.l.b16 %v2151
  %v2184 = vunpack.c.l.b16 %v2152
  %v2185 = vunpack.c.l.b16 %v2153
  %v2186 = vpack.c.b16 %v2171, %v2170
  %v2187 = vpack.c.b16 %v2173, %v2172
  %v2188 = vpack.c.b16 %v2175, %v2174
  %v2189 = vpack.c.b16 %v2177, %v2176
  %v2190 = vpack.c.b16 %v2179, %v2178
  %v2191 = vpack.c.b16 %v2181, %v2180
  %v2192 = vpack.c.b16 %v2183, %v2182
  %v2193 = vpack.c.b16 %v2185, %v2184
  %2202 = vmatpush.bf16.msra.mxu0 %v2193
  %2203 = vmatpush.bf16.msra.mxu0 %v2192
  %2204 = vmatpush.bf16.msra.mxu0 %v2191
  %2205 = vmatpush.bf16.msra.mxu0 %v2190
  %2206 = vmatpush.bf16.msra.mxu0 %v2189
  %2207 = vmatpush.bf16.msra.mxu0 %v2188
  %2208 = vmatpush.bf16.msra.mxu0 %v2187
  %2209 = vmatpush.bf16.msra.mxu0 %v2186
  %2210 = vmatmul.bf16.gmra.mxu0 %v1691
  %v2211 = vpop.f32.mrf.mxu0
  %v2212 = vadd.f32 0.0, %v2211
  %v2213 = vpop.f32.mrf.mxu0
  %v2214 = vadd.f32 0.0, %v2213
  %2215 = vmatmul.bf16.gmra.mxu0 %v2136
  %v2216 = vpop.f32.mrf.mxu0
  %v2217 = vadd.f32 0.0, %v2216
  %v2218 = vpop.f32.mrf.mxu0
  %v2219 = vadd.f32 0.0, %v2218
  %2220 = vdwg.mxu0
  %v2221 = vadd.f32 %v2132, %v2212
  %v2222 = vadd.f32 %v2133, %v2214
  %v2223 = vadd.f32 %v2134, %v2217
  %v2224 = vadd.f32 %v2135, %v2219
  %v2225 = vpack.c.bf16 %v1322, %v1321
  %s2226 = scalar_lea.vmem %s2, 640
  %v2227 = vld [vmem:[%s2226] sm:$0xf]
  %v2228 = vld [vmem:[%s2226 + $0x4] sm:$0xf]
  %v2229 = vld [vmem:[%s2226 + $0x8] sm:$0xf]
  %v2230 = vld [vmem:[%s2226 + $0xc] sm:$0xf]
  %v2231 = vld [vmem:[%s2226 + $0x10] sm:$0xf]
  %v2232 = vld [vmem:[%s2226 + $0x14] sm:$0xf]
  %v2233 = vld [vmem:[%s2226 + $0x18] sm:$0xf]
  %v2234 = vld [vmem:[%s2226 + $0x1c] sm:$0xf]
  %v2235 = vld [vmem:[%s2226 + $0x20] sm:$0xf]
  %v2236 = vld [vmem:[%s2226 + $0x24] sm:$0xf]
  %v2237 = vld [vmem:[%s2226 + $0x28] sm:$0xf]
  %v2238 = vld [vmem:[%s2226 + $0x2c] sm:$0xf]
  %v2239 = vld [vmem:[%s2226 + $0x30] sm:$0xf]
  %v2240 = vld [vmem:[%s2226 + $0x34] sm:$0xf]
  %v2241 = vld [vmem:[%s2226 + $0x38] sm:$0xf]
  %v2242 = vld [vmem:[%s2226 + $0x3c] sm:$0xf]
  %v2259 = vunpack.c.l.b16 %v2227
  %v2260 = vunpack.c.l.b16 %v2228
  %v2261 = vunpack.c.l.b16 %v2229
  %v2262 = vunpack.c.l.b16 %v2230
  %v2263 = vunpack.c.l.b16 %v2231
  %v2264 = vunpack.c.l.b16 %v2232
  %v2265 = vunpack.c.l.b16 %v2233
  %v2266 = vunpack.c.l.b16 %v2234
  %v2267 = vunpack.c.l.b16 %v2235
  %v2268 = vunpack.c.l.b16 %v2236
  %v2269 = vunpack.c.l.b16 %v2237
  %v2270 = vunpack.c.l.b16 %v2238
  %v2271 = vunpack.c.l.b16 %v2239
  %v2272 = vunpack.c.l.b16 %v2240
  %v2273 = vunpack.c.l.b16 %v2241
  %v2274 = vunpack.c.l.b16 %v2242
  %v2275 = vpack.c.b16 %v2260, %v2259
  %v2276 = vpack.c.b16 %v2262, %v2261
  %v2277 = vpack.c.b16 %v2264, %v2263
  %v2278 = vpack.c.b16 %v2266, %v2265
  %v2279 = vpack.c.b16 %v2268, %v2267
  %v2280 = vpack.c.b16 %v2270, %v2269
  %v2281 = vpack.c.b16 %v2272, %v2271
  %v2282 = vpack.c.b16 %v2274, %v2273
  %2291 = vmatpush.bf16.msra.mxu0 %v2282
  %2292 = vmatpush.bf16.msra.mxu0 %v2281
  %2293 = vmatpush.bf16.msra.mxu0 %v2280
  %2294 = vmatpush.bf16.msra.mxu0 %v2279
  %2295 = vmatpush.bf16.msra.mxu0 %v2278
  %2296 = vmatpush.bf16.msra.mxu0 %v2277
  %2297 = vmatpush.bf16.msra.mxu0 %v2276
  %2298 = vmatpush.bf16.msra.mxu0 %v2275
  %2299 = vmatmul.bf16.gmra.mxu0 %v1780
  %v2300 = vpop.f32.mrf.mxu0
  %v2301 = vadd.f32 0.0, %v2300
  %v2302 = vpop.f32.mrf.mxu0
  %v2303 = vadd.f32 0.0, %v2302
  %2304 = vmatmul.bf16.gmra.mxu0 %v2225
  %v2305 = vpop.f32.mrf.mxu0
  %v2306 = vadd.f32 0.0, %v2305
  %v2307 = vpop.f32.mrf.mxu0
  %v2308 = vadd.f32 0.0, %v2307
  %2309 = vdwg.mxu0
  %v2310 = vadd.f32 %v2221, %v2301
  %v2311 = vadd.f32 %v2222, %v2303
  %v2312 = vadd.f32 %v2223, %v2306
  %v2313 = vadd.f32 %v2224, %v2308
  %v2314 = vpack.c.bf16 %v1323, %v1322
  %s2315 = scalar_lea.vmem %s2, 704
  %v2316 = vld [vmem:[%s2315] sm:$0xf]
  %v2317 = vld [vmem:[%s2315 + $0x4] sm:$0xf]
  %v2318 = vld [vmem:[%s2315 + $0x8] sm:$0xf]
  %v2319 = vld [vmem:[%s2315 + $0xc] sm:$0xf]
  %v2320 = vld [vmem:[%s2315 + $0x10] sm:$0xf]
  %v2321 = vld [vmem:[%s2315 + $0x14] sm:$0xf]
  %v2322 = vld [vmem:[%s2315 + $0x18] sm:$0xf]
  %v2323 = vld [vmem:[%s2315 + $0x1c] sm:$0xf]
  %v2324 = vld [vmem:[%s2315 + $0x20] sm:$0xf]
  %v2325 = vld [vmem:[%s2315 + $0x24] sm:$0xf]
  %v2326 = vld [vmem:[%s2315 + $0x28] sm:$0xf]
  %v2327 = vld [vmem:[%s2315 + $0x2c] sm:$0xf]
  %v2328 = vld [vmem:[%s2315 + $0x30] sm:$0xf]
  %v2329 = vld [vmem:[%s2315 + $0x34] sm:$0xf]
  %v2330 = vld [vmem:[%s2315 + $0x38] sm:$0xf]
  %v2331 = vld [vmem:[%s2315 + $0x3c] sm:$0xf]
  %v2348 = vunpack.c.l.b16 %v2316
  %v2349 = vunpack.c.l.b16 %v2317
  %v2350 = vunpack.c.l.b16 %v2318
  %v2351 = vunpack.c.l.b16 %v2319
  %v2352 = vunpack.c.l.b16 %v2320
  %v2353 = vunpack.c.l.b16 %v2321
  %v2354 = vunpack.c.l.b16 %v2322
  %v2355 = vunpack.c.l.b16 %v2323
  %v2356 = vunpack.c.l.b16 %v2324
  %v2357 = vunpack.c.l.b16 %v2325
  %v2358 = vunpack.c.l.b16 %v2326
  %v2359 = vunpack.c.l.b16 %v2327
  %v2360 = vunpack.c.l.b16 %v2328
  %v2361 = vunpack.c.l.b16 %v2329
  %v2362 = vunpack.c.l.b16 %v2330
  %v2363 = vunpack.c.l.b16 %v2331
  %v2364 = vpack.c.b16 %v2349, %v2348
  %v2365 = vpack.c.b16 %v2351, %v2350
  %v2366 = vpack.c.b16 %v2353, %v2352
  %v2367 = vpack.c.b16 %v2355, %v2354
  %v2368 = vpack.c.b16 %v2357, %v2356
  %v2369 = vpack.c.b16 %v2359, %v2358
  %v2370 = vpack.c.b16 %v2361, %v2360
  %v2371 = vpack.c.b16 %v2363, %v2362
  %2380 = vmatpush.bf16.msra.mxu0 %v2371
  %2381 = vmatpush.bf16.msra.mxu0 %v2370
  %2382 = vmatpush.bf16.msra.mxu0 %v2369
  %2383 = vmatpush.bf16.msra.mxu0 %v2368
  %2384 = vmatpush.bf16.msra.mxu0 %v2367
  %2385 = vmatpush.bf16.msra.mxu0 %v2366
  %2386 = vmatpush.bf16.msra.mxu0 %v2365
  %2387 = vmatpush.bf16.msra.mxu0 %v2364
  %2388 = vmatmul.bf16.gmra.mxu0 %v1869
  %v2389 = vpop.f32.mrf.mxu0
  %v2390 = vadd.f32 0.0, %v2389
  %v2391 = vpop.f32.mrf.mxu0
  %v2392 = vadd.f32 0.0, %v2391
  %2393 = vmatmul.bf16.gmra.mxu0 %v2314
  %v2394 = vpop.f32.mrf.mxu0
  %v2395 = vadd.f32 0.0, %v2394
  %v2396 = vpop.f32.mrf.mxu0
  %v2397 = vadd.f32 0.0, %v2396
  %2398 = vdwg.mxu0
  %v2399 = vadd.f32 %v2310, %v2390
  %v2400 = vadd.f32 %v2311, %v2392
  %v2401 = vadd.f32 %v2312, %v2395
  %v2402 = vadd.f32 %v2313, %v2397
  %v2403 = vpack.c.bf16 %v1324, %v1323
  %s2404 = scalar_lea.vmem %s2, 768
  %v2405 = vld [vmem:[%s2404] sm:$0xf]
  %v2406 = vld [vmem:[%s2404 + $0x4] sm:$0xf]
  %v2407 = vld [vmem:[%s2404 + $0x8] sm:$0xf]
  %v2408 = vld [vmem:[%s2404 + $0xc] sm:$0xf]
  %v2409 = vld [vmem:[%s2404 + $0x10] sm:$0xf]
  %v2410 = vld [vmem:[%s2404 + $0x14] sm:$0xf]
  %v2411 = vld [vmem:[%s2404 + $0x18] sm:$0xf]
  %v2412 = vld [vmem:[%s2404 + $0x1c] sm:$0xf]
  %v2413 = vld [vmem:[%s2404 + $0x20] sm:$0xf]
  %v2414 = vld [vmem:[%s2404 + $0x24] sm:$0xf]
  %v2415 = vld [vmem:[%s2404 + $0x28] sm:$0xf]
  %v2416 = vld [vmem:[%s2404 + $0x2c] sm:$0xf]
  %v2417 = vld [vmem:[%s2404 + $0x30] sm:$0xf]
  %v2418 = vld [vmem:[%s2404 + $0x34] sm:$0xf]
  %v2419 = vld [vmem:[%s2404 + $0x38] sm:$0xf]
  %v2420 = vld [vmem:[%s2404 + $0x3c] sm:$0xf]
  %v2437 = vunpack.c.l.b16 %v2405
  %v2438 = vunpack.c.l.b16 %v2406
  %v2439 = vunpack.c.l.b16 %v2407
  %v2440 = vunpack.c.l.b16 %v2408
  %v2441 = vunpack.c.l.b16 %v2409
  %v2442 = vunpack.c.l.b16 %v2410
  %v2443 = vunpack.c.l.b16 %v2411
  %v2444 = vunpack.c.l.b16 %v2412
  %v2445 = vunpack.c.l.b16 %v2413
  %v2446 = vunpack.c.l.b16 %v2414
  %v2447 = vunpack.c.l.b16 %v2415
  %v2448 = vunpack.c.l.b16 %v2416
  %v2449 = vunpack.c.l.b16 %v2417
  %v2450 = vunpack.c.l.b16 %v2418
  %v2451 = vunpack.c.l.b16 %v2419
  %v2452 = vunpack.c.l.b16 %v2420
  %v2453 = vpack.c.b16 %v2438, %v2437
  %v2454 = vpack.c.b16 %v2440, %v2439
  %v2455 = vpack.c.b16 %v2442, %v2441
  %v2456 = vpack.c.b16 %v2444, %v2443
  %v2457 = vpack.c.b16 %v2446, %v2445
  %v2458 = vpack.c.b16 %v2448, %v2447
  %v2459 = vpack.c.b16 %v2450, %v2449
  %v2460 = vpack.c.b16 %v2452, %v2451
  %2469 = vmatpush.bf16.msra.mxu0 %v2460
  %2470 = vmatpush.bf16.msra.mxu0 %v2459
  %2471 = vmatpush.bf16.msra.mxu0 %v2458
  %2472 = vmatpush.bf16.msra.mxu0 %v2457
  %2473 = vmatpush.bf16.msra.mxu0 %v2456
  %2474 = vmatpush.bf16.msra.mxu0 %v2455
  %2475 = vmatpush.bf16.msra.mxu0 %v2454
  %2476 = vmatpush.bf16.msra.mxu0 %v2453
  %2477 = vmatmul.bf16.gmra.mxu0 %v1958
  %v2478 = vpop.f32.mrf.mxu0
  %v2479 = vadd.f32 0.0, %v2478
  %v2480 = vpop.f32.mrf.mxu0
  %v2481 = vadd.f32 0.0, %v2480
  %2482 = vmatmul.bf16.gmra.mxu0 %v2403
  %v2483 = vpop.f32.mrf.mxu0
  %v2484 = vadd.f32 0.0, %v2483
  %v2485 = vpop.f32.mrf.mxu0
  %v2486 = vadd.f32 0.0, %v2485
  %2487 = vdwg.mxu0
  %v2488 = vadd.f32 %v2399, %v2479
  %v2489 = vadd.f32 %v2400, %v2481
  %v2490 = vadd.f32 %v2401, %v2484
  %v2491 = vadd.f32 %v2402, %v2486
  %v2492 = vpack.c.bf16 %v1325, %v1324
  %s2493 = scalar_lea.vmem %s2, 832
  %v2494 = vld [vmem:[%s2493] sm:$0xf]
  %v2495 = vld [vmem:[%s2493 + $0x4] sm:$0xf]
  %v2496 = vld [vmem:[%s2493 + $0x8] sm:$0xf]
  %v2497 = vld [vmem:[%s2493 + $0xc] sm:$0xf]
  %v2498 = vld [vmem:[%s2493 + $0x10] sm:$0xf]
  %v2499 = vld [vmem:[%s2493 + $0x14] sm:$0xf]
  %v2500 = vld [vmem:[%s2493 + $0x18] sm:$0xf]
  %v2501 = vld [vmem:[%s2493 + $0x1c] sm:$0xf]
  %v2502 = vld [vmem:[%s2493 + $0x20] sm:$0xf]
  %v2503 = vld [vmem:[%s2493 + $0x24] sm:$0xf]
  %v2504 = vld [vmem:[%s2493 + $0x28] sm:$0xf]
  %v2505 = vld [vmem:[%s2493 + $0x2c] sm:$0xf]
  %v2506 = vld [vmem:[%s2493 + $0x30] sm:$0xf]
  %v2507 = vld [vmem:[%s2493 + $0x34] sm:$0xf]
  %v2508 = vld [vmem:[%s2493 + $0x38] sm:$0xf]
  %v2509 = vld [vmem:[%s2493 + $0x3c] sm:$0xf]
  %v2526 = vunpack.c.l.b16 %v2494
  %v2527 = vunpack.c.l.b16 %v2495
  %v2528 = vunpack.c.l.b16 %v2496
  %v2529 = vunpack.c.l.b16 %v2497
  %v2530 = vunpack.c.l.b16 %v2498
  %v2531 = vunpack.c.l.b16 %v2499
  %v2532 = vunpack.c.l.b16 %v2500
  %v2533 = vunpack.c.l.b16 %v2501
  %v2534 = vunpack.c.l.b16 %v2502
  %v2535 = vunpack.c.l.b16 %v2503
  %v2536 = vunpack.c.l.b16 %v2504
  %v2537 = vunpack.c.l.b16 %v2505
  %v2538 = vunpack.c.l.b16 %v2506
  %v2539 = vunpack.c.l.b16 %v2507
  %v2540 = vunpack.c.l.b16 %v2508
  %v2541 = vunpack.c.l.b16 %v2509
  %v2542 = vpack.c.b16 %v2527, %v2526
  %v2543 = vpack.c.b16 %v2529, %v2528
  %v2544 = vpack.c.b16 %v2531, %v2530
  %v2545 = vpack.c.b16 %v2533, %v2532
  %v2546 = vpack.c.b16 %v2535, %v2534
  %v2547 = vpack.c.b16 %v2537, %v2536
  %v2548 = vpack.c.b16 %v2539, %v2538
  %v2549 = vpack.c.b16 %v2541, %v2540
  %2558 = vmatpush.bf16.msra.mxu0 %v2549
  %2559 = vmatpush.bf16.msra.mxu0 %v2548
  %2560 = vmatpush.bf16.msra.mxu0 %v2547
  %2561 = vmatpush.bf16.msra.mxu0 %v2546
  %2562 = vmatpush.bf16.msra.mxu0 %v2545
  %2563 = vmatpush.bf16.msra.mxu0 %v2544
  %2564 = vmatpush.bf16.msra.mxu0 %v2543
  %2565 = vmatpush.bf16.msra.mxu0 %v2542
  %2566 = vmatmul.bf16.gmra.mxu0 %v2047
  %v2567 = vpop.f32.mrf.mxu0
  %v2568 = vadd.f32 0.0, %v2567
  %v2569 = vpop.f32.mrf.mxu0
  %v2570 = vadd.f32 0.0, %v2569
  %2571 = vmatmul.bf16.gmra.mxu0 %v2492
  %v2572 = vpop.f32.mrf.mxu0
  %v2573 = vadd.f32 0.0, %v2572
  %v2574 = vpop.f32.mrf.mxu0
  %v2575 = vadd.f32 0.0, %v2574
  %2576 = vdwg.mxu0
  %v2577 = vadd.f32 %v2488, %v2568
  %v2578 = vadd.f32 %v2489, %v2570
  %v2579 = vadd.f32 %v2490, %v2573
  %v2580 = vadd.f32 %v2491, %v2575
  %v2581 = vpack.c.bf16 %v1326, %v1325
  %s2582 = scalar_lea.vmem %s2, 896
  %v2583 = vld [vmem:[%s2582] sm:$0xf]
  %v2584 = vld [vmem:[%s2582 + $0x4] sm:$0xf]
  %v2585 = vld [vmem:[%s2582 + $0x8] sm:$0xf]
  %v2586 = vld [vmem:[%s2582 + $0xc] sm:$0xf]
  %v2587 = vld [vmem:[%s2582 + $0x10] sm:$0xf]
  %v2588 = vld [vmem:[%s2582 + $0x14] sm:$0xf]
  %v2589 = vld [vmem:[%s2582 + $0x18] sm:$0xf]
  %v2590 = vld [vmem:[%s2582 + $0x1c] sm:$0xf]
  %v2591 = vld [vmem:[%s2582 + $0x20] sm:$0xf]
  %v2592 = vld [vmem:[%s2582 + $0x24] sm:$0xf]
  %v2593 = vld [vmem:[%s2582 + $0x28] sm:$0xf]
  %v2594 = vld [vmem:[%s2582 + $0x2c] sm:$0xf]
  %v2595 = vld [vmem:[%s2582 + $0x30] sm:$0xf]
  %v2596 = vld [vmem:[%s2582 + $0x34] sm:$0xf]
  %v2597 = vld [vmem:[%s2582 + $0x38] sm:$0xf]
  %v2598 = vld [vmem:[%s2582 + $0x3c] sm:$0xf]
  %v2615 = vunpack.c.l.b16 %v2583
  %v2616 = vunpack.c.l.b16 %v2584
  %v2617 = vunpack.c.l.b16 %v2585
  %v2618 = vunpack.c.l.b16 %v2586
  %v2619 = vunpack.c.l.b16 %v2587
  %v2620 = vunpack.c.l.b16 %v2588
  %v2621 = vunpack.c.l.b16 %v2589
  %v2622 = vunpack.c.l.b16 %v2590
  %v2623 = vunpack.c.l.b16 %v2591
  %v2624 = vunpack.c.l.b16 %v2592
  %v2625 = vunpack.c.l.b16 %v2593
  %v2626 = vunpack.c.l.b16 %v2594
  %v2627 = vunpack.c.l.b16 %v2595
  %v2628 = vunpack.c.l.b16 %v2596
  %v2629 = vunpack.c.l.b16 %v2597
  %v2630 = vunpack.c.l.b16 %v2598
  %v2631 = vpack.c.b16 %v2616, %v2615
  %v2632 = vpack.c.b16 %v2618, %v2617
  %v2633 = vpack.c.b16 %v2620, %v2619
  %v2634 = vpack.c.b16 %v2622, %v2621
  %v2635 = vpack.c.b16 %v2624, %v2623
  %v2636 = vpack.c.b16 %v2626, %v2625
  %v2637 = vpack.c.b16 %v2628, %v2627
  %v2638 = vpack.c.b16 %v2630, %v2629
  %2647 = vmatpush.bf16.msra.mxu0 %v2638
  %2648 = vmatpush.bf16.msra.mxu0 %v2637
  %2649 = vmatpush.bf16.msra.mxu0 %v2636
  %2650 = vmatpush.bf16.msra.mxu0 %v2635
  %2651 = vmatpush.bf16.msra.mxu0 %v2634
  %2652 = vmatpush.bf16.msra.mxu0 %v2633
  %2653 = vmatpush.bf16.msra.mxu0 %v2632
  %2654 = vmatpush.bf16.msra.mxu0 %v2631
  %2655 = vmatmul.bf16.gmra.mxu0 %v2136
  %v2656 = vpop.f32.mrf.mxu0
  %v2657 = vadd.f32 0.0, %v2656
  %v2658 = vpop.f32.mrf.mxu0
  %v2659 = vadd.f32 0.0, %v2658
  %2660 = vmatmul.bf16.gmra.mxu0 %v2581
  %v2661 = vpop.f32.mrf.mxu0
  %v2662 = vadd.f32 0.0, %v2661
  %v2663 = vpop.f32.mrf.mxu0
  %v2664 = vadd.f32 0.0, %v2663
  %2665 = vdwg.mxu0
  %v2666 = vadd.f32 %v2577, %v2657
  %v2667 = vadd.f32 %v2578, %v2659
  %v2668 = vadd.f32 %v2579, %v2662
  %v2669 = vadd.f32 %v2580, %v2664
  %v2670 = vpack.c.bf16 %v1328, %v1327
  %s2671 = scalar_lea.vmem %s2, 960
  %v2672 = vld [vmem:[%s2671] sm:$0xf]
  %v2673 = vld [vmem:[%s2671 + $0x4] sm:$0xf]
  %v2674 = vld [vmem:[%s2671 + $0x8] sm:$0xf]
  %v2675 = vld [vmem:[%s2671 + $0xc] sm:$0xf]
  %v2676 = vld [vmem:[%s2671 + $0x10] sm:$0xf]
  %v2677 = vld [vmem:[%s2671 + $0x14] sm:$0xf]
  %v2678 = vld [vmem:[%s2671 + $0x18] sm:$0xf]
  %v2679 = vld [vmem:[%s2671 + $0x1c] sm:$0xf]
  %v2680 = vld [vmem:[%s2671 + $0x20] sm:$0xf]
  %v2681 = vld [vmem:[%s2671 + $0x24] sm:$0xf]
  %v2682 = vld [vmem:[%s2671 + $0x28] sm:$0xf]
  %v2683 = vld [vmem:[%s2671 + $0x2c] sm:$0xf]
  %v2684 = vld [vmem:[%s2671 + $0x30] sm:$0xf]
  %v2685 = vld [vmem:[%s2671 + $0x34] sm:$0xf]
  %v2686 = vld [vmem:[%s2671 + $0x38] sm:$0xf]
  %v2687 = vld [vmem:[%s2671 + $0x3c] sm:$0xf]
  %v2704 = vunpack.c.l.b16 %v2672
  %v2705 = vunpack.c.l.b16 %v2673
  %v2706 = vunpack.c.l.b16 %v2674
  %v2707 = vunpack.c.l.b16 %v2675
  %v2708 = vunpack.c.l.b16 %v2676
  %v2709 = vunpack.c.l.b16 %v2677
  %v2710 = vunpack.c.l.b16 %v2678
  %v2711 = vunpack.c.l.b16 %v2679
  %v2712 = vunpack.c.l.b16 %v2680
  %v2713 = vunpack.c.l.b16 %v2681
  %v2714 = vunpack.c.l.b16 %v2682
  %v2715 = vunpack.c.l.b16 %v2683
  %v2716 = vunpack.c.l.b16 %v2684
  %v2717 = vunpack.c.l.b16 %v2685
  %v2718 = vunpack.c.l.b16 %v2686
  %v2719 = vunpack.c.l.b16 %v2687
  %v2720 = vpack.c.b16 %v2705, %v2704
  %v2721 = vpack.c.b16 %v2707, %v2706
  %v2722 = vpack.c.b16 %v2709, %v2708
  %v2723 = vpack.c.b16 %v2711, %v2710
  %v2724 = vpack.c.b16 %v2713, %v2712
  %v2725 = vpack.c.b16 %v2715, %v2714
  %v2726 = vpack.c.b16 %v2717, %v2716
  %v2727 = vpack.c.b16 %v2719, %v2718
  %2736 = vmatpush.bf16.msra.mxu0 %v2727
  %2737 = vmatpush.bf16.msra.mxu0 %v2726
  %2738 = vmatpush.bf16.msra.mxu0 %v2725
  %2739 = vmatpush.bf16.msra.mxu0 %v2724
  %2740 = vmatpush.bf16.msra.mxu0 %v2723
  %2741 = vmatpush.bf16.msra.mxu0 %v2722
  %2742 = vmatpush.bf16.msra.mxu0 %v2721
  %2743 = vmatpush.bf16.msra.mxu0 %v2720
  %2744 = vmatmul.bf16.gmra.mxu0 %v2225
  %v2745 = vpop.f32.mrf.mxu0
  %v2746 = vadd.f32 0.0, %v2745
  %v2747 = vpop.f32.mrf.mxu0
  %v2748 = vadd.f32 0.0, %v2747
  %2749 = vmatmul.bf16.gmra.mxu0 %v2670
  %v2750 = vpop.f32.mrf.mxu0
  %v2751 = vadd.f32 0.0, %v2750
  %v2752 = vpop.f32.mrf.mxu0
  %v2753 = vadd.f32 0.0, %v2752
  %2754 = vdwg.mxu0
  %v2755 = vadd.f32 %v2666, %v2746
  %v2756 = vadd.f32 %v2667, %v2748
  %v2757 = vadd.f32 %v2668, %v2751
  %v2758 = vadd.f32 %v2669, %v2753
  %v2759 = vpack.c.bf16 %v1329, %v1328
  %s2760 = scalar_lea.vmem %s2, 1024
  %v2761 = vld [vmem:[%s2760] sm:$0xf]
  %v2762 = vld [vmem:[%s2760 + $0x4] sm:$0xf]
  %v2763 = vld [vmem:[%s2760 + $0x8] sm:$0xf]
  %v2764 = vld [vmem:[%s2760 + $0xc] sm:$0xf]
  %v2765 = vld [vmem:[%s2760 + $0x10] sm:$0xf]
  %v2766 = vld [vmem:[%s2760 + $0x14] sm:$0xf]
  %v2767 = vld [vmem:[%s2760 + $0x18] sm:$0xf]
  %v2768 = vld [vmem:[%s2760 + $0x1c] sm:$0xf]
  %v2769 = vld [vmem:[%s2760 + $0x20] sm:$0xf]
  %v2770 = vld [vmem:[%s2760 + $0x24] sm:$0xf]
  %v2771 = vld [vmem:[%s2760 + $0x28] sm:$0xf]
  %v2772 = vld [vmem:[%s2760 + $0x2c] sm:$0xf]
  %v2773 = vld [vmem:[%s2760 + $0x30] sm:$0xf]
  %v2774 = vld [vmem:[%s2760 + $0x34] sm:$0xf]
  %v2775 = vld [vmem:[%s2760 + $0x38] sm:$0xf]
  %v2776 = vld [vmem:[%s2760 + $0x3c] sm:$0xf]
  %v2793 = vunpack.c.l.b16 %v2761
  %v2794 = vunpack.c.l.b16 %v2762
  %v2795 = vunpack.c.l.b16 %v2763
  %v2796 = vunpack.c.l.b16 %v2764
  %v2797 = vunpack.c.l.b16 %v2765
  %v2798 = vunpack.c.l.b16 %v2766
  %v2799 = vunpack.c.l.b16 %v2767
  %v2800 = vunpack.c.l.b16 %v2768
  %v2801 = vunpack.c.l.b16 %v2769
  %v2802 = vunpack.c.l.b16 %v2770
  %v2803 = vunpack.c.l.b16 %v2771
  %v2804 = vunpack.c.l.b16 %v2772
  %v2805 = vunpack.c.l.b16 %v2773
  %v2806 = vunpack.c.l.b16 %v2774
  %v2807 = vunpack.c.l.b16 %v2775
  %v2808 = vunpack.c.l.b16 %v2776
  %v2809 = vpack.c.b16 %v2794, %v2793
  %v2810 = vpack.c.b16 %v2796, %v2795
  %v2811 = vpack.c.b16 %v2798, %v2797
  %v2812 = vpack.c.b16 %v2800, %v2799
  %v2813 = vpack.c.b16 %v2802, %v2801
  %v2814 = vpack.c.b16 %v2804, %v2803
  %v2815 = vpack.c.b16 %v2806, %v2805
  %v2816 = vpack.c.b16 %v2808, %v2807
  %2825 = vmatpush.bf16.msra.mxu0 %v2816
  %2826 = vmatpush.bf16.msra.mxu0 %v2815
  %2827 = vmatpush.bf16.msra.mxu0 %v2814
  %2828 = vmatpush.bf16.msra.mxu0 %v2813
  %2829 = vmatpush.bf16.msra.mxu0 %v2812
  %2830 = vmatpush.bf16.msra.mxu0 %v2811
  %2831 = vmatpush.bf16.msra.mxu0 %v2810
  %2832 = vmatpush.bf16.msra.mxu0 %v2809
  %2833 = vmatmul.bf16.gmra.mxu0 %v2314
  %v2834 = vpop.f32.mrf.mxu0
  %v2835 = vadd.f32 0.0, %v2834
  %v2836 = vpop.f32.mrf.mxu0
  %v2837 = vadd.f32 0.0, %v2836
  %2838 = vmatmul.bf16.gmra.mxu0 %v2759
  %v2839 = vpop.f32.mrf.mxu0
  %v2840 = vadd.f32 0.0, %v2839
  %v2841 = vpop.f32.mrf.mxu0
  %v2842 = vadd.f32 0.0, %v2841
  %2843 = vdwg.mxu0
  %v2844 = vadd.f32 %v2755, %v2835
  %v2845 = vadd.f32 %v2756, %v2837
  %v2846 = vadd.f32 %v2757, %v2840
  %v2847 = vadd.f32 %v2758, %v2842
  %v2848 = vpack.c.bf16 %v1330, %v1329
  %s2849 = scalar_lea.vmem %s2, 1088
  %v2850 = vld [vmem:[%s2849] sm:$0xf]
  %v2851 = vld [vmem:[%s2849 + $0x4] sm:$0xf]
  %v2852 = vld [vmem:[%s2849 + $0x8] sm:$0xf]
  %v2853 = vld [vmem:[%s2849 + $0xc] sm:$0xf]
  %v2854 = vld [vmem:[%s2849 + $0x10] sm:$0xf]
  %v2855 = vld [vmem:[%s2849 + $0x14] sm:$0xf]
  %v2856 = vld [vmem:[%s2849 + $0x18] sm:$0xf]
  %v2857 = vld [vmem:[%s2849 + $0x1c] sm:$0xf]
  %v2858 = vld [vmem:[%s2849 + $0x20] sm:$0xf]
  %v2859 = vld [vmem:[%s2849 + $0x24] sm:$0xf]
  %v2860 = vld [vmem:[%s2849 + $0x28] sm:$0xf]
  %v2861 = vld [vmem:[%s2849 + $0x2c] sm:$0xf]
  %v2862 = vld [vmem:[%s2849 + $0x30] sm:$0xf]
  %v2863 = vld [vmem:[%s2849 + $0x34] sm:$0xf]
  %v2864 = vld [vmem:[%s2849 + $0x38] sm:$0xf]
  %v2865 = vld [vmem:[%s2849 + $0x3c] sm:$0xf]
  %v2882 = vunpack.c.l.b16 %v2850
  %v2883 = vunpack.c.l.b16 %v2851
  %v2884 = vunpack.c.l.b16 %v2852
  %v2885 = vunpack.c.l.b16 %v2853
  %v2886 = vunpack.c.l.b16 %v2854
  %v2887 = vunpack.c.l.b16 %v2855
  %v2888 = vunpack.c.l.b16 %v2856
  %v2889 = vunpack.c.l.b16 %v2857
  %v2890 = vunpack.c.l.b16 %v2858
  %v2891 = vunpack.c.l.b16 %v2859
  %v2892 = vunpack.c.l.b16 %v2860
  %v2893 = vunpack.c.l.b16 %v2861
  %v2894 = vunpack.c.l.b16 %v2862
  %v2895 = vunpack.c.l.b16 %v2863
  %v2896 = vunpack.c.l.b16 %v2864
  %v2897 = vunpack.c.l.b16 %v2865
  %v2898 = vpack.c.b16 %v2883, %v2882
  %v2899 = vpack.c.b16 %v2885, %v2884
  %v2900 = vpack.c.b16 %v2887, %v2886
  %v2901 = vpack.c.b16 %v2889, %v2888
  %v2902 = vpack.c.b16 %v2891, %v2890
  %v2903 = vpack.c.b16 %v2893, %v2892
  %v2904 = vpack.c.b16 %v2895, %v2894
  %v2905 = vpack.c.b16 %v2897, %v2896
  %2914 = vmatpush.bf16.msra.mxu0 %v2905
  %2915 = vmatpush.bf16.msra.mxu0 %v2904
  %2916 = vmatpush.bf16.msra.mxu0 %v2903
  %2917 = vmatpush.bf16.msra.mxu0 %v2902
  %2918 = vmatpush.bf16.msra.mxu0 %v2901
  %2919 = vmatpush.bf16.msra.mxu0 %v2900
  %2920 = vmatpush.bf16.msra.mxu0 %v2899
  %2921 = vmatpush.bf16.msra.mxu0 %v2898
  %2922 = vmatmul.bf16.gmra.mxu0 %v2403
  %v2923 = vpop.f32.mrf.mxu0
  %v2924 = vadd.f32 0.0, %v2923
  %v2925 = vpop.f32.mrf.mxu0
  %v2926 = vadd.f32 0.0, %v2925
  %2927 = vmatmul.bf16.gmra.mxu0 %v2848
  %v2928 = vpop.f32.mrf.mxu0
  %v2929 = vadd.f32 0.0, %v2928
  %v2930 = vpop.f32.mrf.mxu0
  %v2931 = vadd.f32 0.0, %v2930
  %2932 = vdwg.mxu0
  %v2933 = vadd.f32 %v2844, %v2924
  %v2934 = vadd.f32 %v2845, %v2926
  %v2935 = vadd.f32 %v2846, %v2929
  %v2936 = vadd.f32 %v2847, %v2931
  %v2937 = vpack.c.bf16 %v1331, %v1330
  %s2938 = scalar_lea.vmem %s2, 1152
  %v2939 = vld [vmem:[%s2938] sm:$0xf]
  %v2940 = vld [vmem:[%s2938 + $0x4] sm:$0xf]
  %v2941 = vld [vmem:[%s2938 + $0x8] sm:$0xf]
  %v2942 = vld [vmem:[%s2938 + $0xc] sm:$0xf]
  %v2943 = vld [vmem:[%s2938 + $0x10] sm:$0xf]
  %v2944 = vld [vmem:[%s2938 + $0x14] sm:$0xf]
  %v2945 = vld [vmem:[%s2938 + $0x18] sm:$0xf]
  %v2946 = vld [vmem:[%s2938 + $0x1c] sm:$0xf]
  %v2947 = vld [vmem:[%s2938 + $0x20] sm:$0xf]
  %v2948 = vld [vmem:[%s2938 + $0x24] sm:$0xf]
  %v2949 = vld [vmem:[%s2938 + $0x28] sm:$0xf]
  %v2950 = vld [vmem:[%s2938 + $0x2c] sm:$0xf]
  %v2951 = vld [vmem:[%s2938 + $0x30] sm:$0xf]
  %v2952 = vld [vmem:[%s2938 + $0x34] sm:$0xf]
  %v2953 = vld [vmem:[%s2938 + $0x38] sm:$0xf]
  %v2954 = vld [vmem:[%s2938 + $0x3c] sm:$0xf]
  %v2971 = vunpack.c.l.b16 %v2939
  %v2972 = vunpack.c.l.b16 %v2940
  %v2973 = vunpack.c.l.b16 %v2941
  %v2974 = vunpack.c.l.b16 %v2942
  %v2975 = vunpack.c.l.b16 %v2943
  %v2976 = vunpack.c.l.b16 %v2944
  %v2977 = vunpack.c.l.b16 %v2945
  %v2978 = vunpack.c.l.b16 %v2946
  %v2979 = vunpack.c.l.b16 %v2947
  %v2980 = vunpack.c.l.b16 %v2948
  %v2981 = vunpack.c.l.b16 %v2949
  %v2982 = vunpack.c.l.b16 %v2950
  %v2983 = vunpack.c.l.b16 %v2951
  %v2984 = vunpack.c.l.b16 %v2952
  %v2985 = vunpack.c.l.b16 %v2953
  %v2986 = vunpack.c.l.b16 %v2954
  %v2987 = vpack.c.b16 %v2972, %v2971
  %v2988 = vpack.c.b16 %v2974, %v2973
  %v2989 = vpack.c.b16 %v2976, %v2975
  %v2990 = vpack.c.b16 %v2978, %v2977
  %v2991 = vpack.c.b16 %v2980, %v2979
  %v2992 = vpack.c.b16 %v2982, %v2981
  %v2993 = vpack.c.b16 %v2984, %v2983
  %v2994 = vpack.c.b16 %v2986, %v2985
  %3003 = vmatpush.bf16.msra.mxu0 %v2994
  %3004 = vmatpush.bf16.msra.mxu0 %v2993
  %3005 = vmatpush.bf16.msra.mxu0 %v2992
  %3006 = vmatpush.bf16.msra.mxu0 %v2991
  %3007 = vmatpush.bf16.msra.mxu0 %v2990
  %3008 = vmatpush.bf16.msra.mxu0 %v2989
  %3009 = vmatpush.bf16.msra.mxu0 %v2988
  %3010 = vmatpush.bf16.msra.mxu0 %v2987
  %3011 = vmatmul.bf16.gmra.mxu0 %v2492
  %v3012 = vpop.f32.mrf.mxu0
  %v3013 = vadd.f32 0.0, %v3012
  %v3014 = vpop.f32.mrf.mxu0
  %v3015 = vadd.f32 0.0, %v3014
  %3016 = vmatmul.bf16.gmra.mxu0 %v2937
  %v3017 = vpop.f32.mrf.mxu0
  %v3018 = vadd.f32 0.0, %v3017
  %v3019 = vpop.f32.mrf.mxu0
  %v3020 = vadd.f32 0.0, %v3019
  %3021 = vdwg.mxu0
  %v3022 = vadd.f32 %v2933, %v3013
  %v3023 = vadd.f32 %v2934, %v3015
  %v3024 = vadd.f32 %v2935, %v3018
  %v3025 = vadd.f32 %v2936, %v3020
  %v3026 = vpack.c.bf16 %v1332, %v1331
  %s3027 = scalar_lea.vmem %s2, 1216
  %v3028 = vld [vmem:[%s3027] sm:$0xf]
  %v3029 = vld [vmem:[%s3027 + $0x4] sm:$0xf]
  %v3030 = vld [vmem:[%s3027 + $0x8] sm:$0xf]
  %v3031 = vld [vmem:[%s3027 + $0xc] sm:$0xf]
  %v3032 = vld [vmem:[%s3027 + $0x10] sm:$0xf]
  %v3033 = vld [vmem:[%s3027 + $0x14] sm:$0xf]
  %v3034 = vld [vmem:[%s3027 + $0x18] sm:$0xf]
  %v3035 = vld [vmem:[%s3027 + $0x1c] sm:$0xf]
  %v3036 = vld [vmem:[%s3027 + $0x20] sm:$0xf]
  %v3037 = vld [vmem:[%s3027 + $0x24] sm:$0xf]
  %v3038 = vld [vmem:[%s3027 + $0x28] sm:$0xf]
  %v3039 = vld [vmem:[%s3027 + $0x2c] sm:$0xf]
  %v3040 = vld [vmem:[%s3027 + $0x30] sm:$0xf]
  %v3041 = vld [vmem:[%s3027 + $0x34] sm:$0xf]
  %v3042 = vld [vmem:[%s3027 + $0x38] sm:$0xf]
  %v3043 = vld [vmem:[%s3027 + $0x3c] sm:$0xf]
  %v3060 = vunpack.c.l.b16 %v3028
  %v3061 = vunpack.c.l.b16 %v3029
  %v3062 = vunpack.c.l.b16 %v3030
  %v3063 = vunpack.c.l.b16 %v3031
  %v3064 = vunpack.c.l.b16 %v3032
  %v3065 = vunpack.c.l.b16 %v3033
  %v3066 = vunpack.c.l.b16 %v3034
  %v3067 = vunpack.c.l.b16 %v3035
  %v3068 = vunpack.c.l.b16 %v3036
  %v3069 = vunpack.c.l.b16 %v3037
  %v3070 = vunpack.c.l.b16 %v3038
  %v3071 = vunpack.c.l.b16 %v3039
  %v3072 = vunpack.c.l.b16 %v3040
  %v3073 = vunpack.c.l.b16 %v3041
  %v3074 = vunpack.c.l.b16 %v3042
  %v3075 = vunpack.c.l.b16 %v3043
  %v3076 = vpack.c.b16 %v3061, %v3060
  %v3077 = vpack.c.b16 %v3063, %v3062
  %v3078 = vpack.c.b16 %v3065, %v3064
  %v3079 = vpack.c.b16 %v3067, %v3066
  %v3080 = vpack.c.b16 %v3069, %v3068
  %v3081 = vpack.c.b16 %v3071, %v3070
  %v3082 = vpack.c.b16 %v3073, %v3072
  %v3083 = vpack.c.b16 %v3075, %v3074
  %3092 = vmatpush.bf16.msra.mxu0 %v3083
  %3093 = vmatpush.bf16.msra.mxu0 %v3082
  %3094 = vmatpush.bf16.msra.mxu0 %v3081
  %3095 = vmatpush.bf16.msra.mxu0 %v3080
  %3096 = vmatpush.bf16.msra.mxu0 %v3079
  %3097 = vmatpush.bf16.msra.mxu0 %v3078
  %3098 = vmatpush.bf16.msra.mxu0 %v3077
  %3099 = vmatpush.bf16.msra.mxu0 %v3076
  %3100 = vmatmul.bf16.gmra.mxu0 %v2581
  %v3101 = vpop.f32.mrf.mxu0
  %v3102 = vadd.f32 0.0, %v3101
  %v3103 = vpop.f32.mrf.mxu0
  %v3104 = vadd.f32 0.0, %v3103
  %3105 = vmatmul.bf16.gmra.mxu0 %v3026
  %v3106 = vpop.f32.mrf.mxu0
  %v3107 = vadd.f32 0.0, %v3106
  %v3108 = vpop.f32.mrf.mxu0
  %v3109 = vadd.f32 0.0, %v3108
  %3110 = vdwg.mxu0
  %v3111 = vadd.f32 %v3022, %v3102
  %v3112 = vadd.f32 %v3023, %v3104
  %v3113 = vadd.f32 %v3024, %v3107
  %v3114 = vadd.f32 %v3025, %v3109
  %v3115 = vpack.c.bf16 %v1334, %v1333
  %s3116 = scalar_lea.vmem %s2, 1280
  %v3117 = vld [vmem:[%s3116] sm:$0xf]
  %v3118 = vld [vmem:[%s3116 + $0x4] sm:$0xf]
  %v3119 = vld [vmem:[%s3116 + $0x8] sm:$0xf]
  %v3120 = vld [vmem:[%s3116 + $0xc] sm:$0xf]
  %v3121 = vld [vmem:[%s3116 + $0x10] sm:$0xf]
  %v3122 = vld [vmem:[%s3116 + $0x14] sm:$0xf]
  %v3123 = vld [vmem:[%s3116 + $0x18] sm:$0xf]
  %v3124 = vld [vmem:[%s3116 + $0x1c] sm:$0xf]
  %v3125 = vld [vmem:[%s3116 + $0x20] sm:$0xf]
  %v3126 = vld [vmem:[%s3116 + $0x24] sm:$0xf]
  %v3127 = vld [vmem:[%s3116 + $0x28] sm:$0xf]
  %v3128 = vld [vmem:[%s3116 + $0x2c] sm:$0xf]
  %v3129 = vld [vmem:[%s3116 + $0x30] sm:$0xf]
  %v3130 = vld [vmem:[%s3116 + $0x34] sm:$0xf]
  %v3131 = vld [vmem:[%s3116 + $0x38] sm:$0xf]
  %v3132 = vld [vmem:[%s3116 + $0x3c] sm:$0xf]
  %v3149 = vunpack.c.l.b16 %v3117
  %v3150 = vunpack.c.l.b16 %v3118
  %v3151 = vunpack.c.l.b16 %v3119
  %v3152 = vunpack.c.l.b16 %v3120
  %v3153 = vunpack.c.l.b16 %v3121
  %v3154 = vunpack.c.l.b16 %v3122
  %v3155 = vunpack.c.l.b16 %v3123
  %v3156 = vunpack.c.l.b16 %v3124
  %v3157 = vunpack.c.l.b16 %v3125
  %v3158 = vunpack.c.l.b16 %v3126
  %v3159 = vunpack.c.l.b16 %v3127
  %v3160 = vunpack.c.l.b16 %v3128
  %v3161 = vunpack.c.l.b16 %v3129
  %v3162 = vunpack.c.l.b16 %v3130
  %v3163 = vunpack.c.l.b16 %v3131
  %v3164 = vunpack.c.l.b16 %v3132
  %v3165 = vpack.c.b16 %v3150, %v3149
  %v3166 = vpack.c.b16 %v3152, %v3151
  %v3167 = vpack.c.b16 %v3154, %v3153
  %v3168 = vpack.c.b16 %v3156, %v3155
  %v3169 = vpack.c.b16 %v3158, %v3157
  %v3170 = vpack.c.b16 %v3160, %v3159
  %v3171 = vpack.c.b16 %v3162, %v3161
  %v3172 = vpack.c.b16 %v3164, %v3163
  %3181 = vmatpush.bf16.msra.mxu0 %v3172
  %3182 = vmatpush.bf16.msra.mxu0 %v3171
  %3183 = vmatpush.bf16.msra.mxu0 %v3170
  %3184 = vmatpush.bf16.msra.mxu0 %v3169
  %3185 = vmatpush.bf16.msra.mxu0 %v3168
  %3186 = vmatpush.bf16.msra.mxu0 %v3167
  %3187 = vmatpush.bf16.msra.mxu0 %v3166
  %3188 = vmatpush.bf16.msra.mxu0 %v3165
  %3189 = vmatmul.bf16.gmra.mxu0 %v2670
  %v3190 = vpop.f32.mrf.mxu0
  %v3191 = vadd.f32 0.0, %v3190
  %v3192 = vpop.f32.mrf.mxu0
  %v3193 = vadd.f32 0.0, %v3192
  %3194 = vmatmul.bf16.gmra.mxu0 %v3115
  %v3195 = vpop.f32.mrf.mxu0
  %v3196 = vadd.f32 0.0, %v3195
  %v3197 = vpop.f32.mrf.mxu0
  %v3198 = vadd.f32 0.0, %v3197
  %3199 = vdwg.mxu0
  %v3200 = vadd.f32 %v3111, %v3191
  %v3201 = vadd.f32 %v3112, %v3193
  %v3202 = vadd.f32 %v3113, %v3196
  %v3203 = vadd.f32 %v3114, %v3198
  %v3204 = vpack.c.bf16 %v1335, %v1334
  %s3205 = scalar_lea.vmem %s2, 1344
  %v3206 = vld [vmem:[%s3205] sm:$0xf]
  %v3207 = vld [vmem:[%s3205 + $0x4] sm:$0xf]
  %v3208 = vld [vmem:[%s3205 + $0x8] sm:$0xf]
  %v3209 = vld [vmem:[%s3205 + $0xc] sm:$0xf]
  %v3210 = vld [vmem:[%s3205 + $0x10] sm:$0xf]
  %v3211 = vld [vmem:[%s3205 + $0x14] sm:$0xf]
  %v3212 = vld [vmem:[%s3205 + $0x18] sm:$0xf]
  %v3213 = vld [vmem:[%s3205 + $0x1c] sm:$0xf]
  %v3214 = vld [vmem:[%s3205 + $0x20] sm:$0xf]
  %v3215 = vld [vmem:[%s3205 + $0x24] sm:$0xf]
  %v3216 = vld [vmem:[%s3205 + $0x28] sm:$0xf]
  %v3217 = vld [vmem:[%s3205 + $0x2c] sm:$0xf]
  %v3218 = vld [vmem:[%s3205 + $0x30] sm:$0xf]
  %v3219 = vld [vmem:[%s3205 + $0x34] sm:$0xf]
  %v3220 = vld [vmem:[%s3205 + $0x38] sm:$0xf]
  %v3221 = vld [vmem:[%s3205 + $0x3c] sm:$0xf]
  %v3238 = vunpack.c.l.b16 %v3206
  %v3239 = vunpack.c.l.b16 %v3207
  %v3240 = vunpack.c.l.b16 %v3208
  %v3241 = vunpack.c.l.b16 %v3209
  %v3242 = vunpack.c.l.b16 %v3210
  %v3243 = vunpack.c.l.b16 %v3211
  %v3244 = vunpack.c.l.b16 %v3212
  %v3245 = vunpack.c.l.b16 %v3213
  %v3246 = vunpack.c.l.b16 %v3214
  %v3247 = vunpack.c.l.b16 %v3215
  %v3248 = vunpack.c.l.b16 %v3216
  %v3249 = vunpack.c.l.b16 %v3217
  %v3250 = vunpack.c.l.b16 %v3218
  %v3251 = vunpack.c.l.b16 %v3219
  %v3252 = vunpack.c.l.b16 %v3220
  %v3253 = vunpack.c.l.b16 %v3221
  %v3254 = vpack.c.b16 %v3239, %v3238
  %v3255 = vpack.c.b16 %v3241, %v3240
  %v3256 = vpack.c.b16 %v3243, %v3242
  %v3257 = vpack.c.b16 %v3245, %v3244
  %v3258 = vpack.c.b16 %v3247, %v3246
  %v3259 = vpack.c.b16 %v3249, %v3248
  %v3260 = vpack.c.b16 %v3251, %v3250
  %v3261 = vpack.c.b16 %v3253, %v3252
  %3270 = vmatpush.bf16.msra.mxu0 %v3261
  %3271 = vmatpush.bf16.msra.mxu0 %v3260
  %3272 = vmatpush.bf16.msra.mxu0 %v3259
  %3273 = vmatpush.bf16.msra.mxu0 %v3258
  %3274 = vmatpush.bf16.msra.mxu0 %v3257
  %3275 = vmatpush.bf16.msra.mxu0 %v3256
  %3276 = vmatpush.bf16.msra.mxu0 %v3255
  %3277 = vmatpush.bf16.msra.mxu0 %v3254
  %3278 = vmatmul.bf16.gmra.mxu0 %v2759
  %v3279 = vpop.f32.mrf.mxu0
  %v3280 = vadd.f32 0.0, %v3279
  %v3281 = vpop.f32.mrf.mxu0
  %v3282 = vadd.f32 0.0, %v3281
  %3283 = vmatmul.bf16.gmra.mxu0 %v3204
  %v3284 = vpop.f32.mrf.mxu0
  %v3285 = vadd.f32 0.0, %v3284
  %v3286 = vpop.f32.mrf.mxu0
  %v3287 = vadd.f32 0.0, %v3286
  %3288 = vdwg.mxu0
  %v3289 = vadd.f32 %v3200, %v3280
  %v3290 = vadd.f32 %v3201, %v3282
  %v3291 = vadd.f32 %v3202, %v3285
  %v3292 = vadd.f32 %v3203, %v3287
  %v3293 = vpack.c.bf16 %v1336, %v1335
  %s3294 = scalar_lea.vmem %s2, 1408
  %v3295 = vld [vmem:[%s3294] sm:$0xf]
  %v3296 = vld [vmem:[%s3294 + $0x4] sm:$0xf]
  %v3297 = vld [vmem:[%s3294 + $0x8] sm:$0xf]
  %v3298 = vld [vmem:[%s3294 + $0xc] sm:$0xf]
  %v3299 = vld [vmem:[%s3294 + $0x10] sm:$0xf]
  %v3300 = vld [vmem:[%s3294 + $0x14] sm:$0xf]
  %v3301 = vld [vmem:[%s3294 + $0x18] sm:$0xf]
  %v3302 = vld [vmem:[%s3294 + $0x1c] sm:$0xf]
  %v3303 = vld [vmem:[%s3294 + $0x20] sm:$0xf]
  %v3304 = vld [vmem:[%s3294 + $0x24] sm:$0xf]
  %v3305 = vld [vmem:[%s3294 + $0x28] sm:$0xf]
  %v3306 = vld [vmem:[%s3294 + $0x2c] sm:$0xf]
  %v3307 = vld [vmem:[%s3294 + $0x30] sm:$0xf]
  %v3308 = vld [vmem:[%s3294 + $0x34] sm:$0xf]
  %v3309 = vld [vmem:[%s3294 + $0x38] sm:$0xf]
  %v3310 = vld [vmem:[%s3294 + $0x3c] sm:$0xf]
  %v3327 = vunpack.c.l.b16 %v3295
  %v3328 = vunpack.c.l.b16 %v3296
  %v3329 = vunpack.c.l.b16 %v3297
  %v3330 = vunpack.c.l.b16 %v3298
  %v3331 = vunpack.c.l.b16 %v3299
  %v3332 = vunpack.c.l.b16 %v3300
  %v3333 = vunpack.c.l.b16 %v3301
  %v3334 = vunpack.c.l.b16 %v3302
  %v3335 = vunpack.c.l.b16 %v3303
  %v3336 = vunpack.c.l.b16 %v3304
  %v3337 = vunpack.c.l.b16 %v3305
  %v3338 = vunpack.c.l.b16 %v3306
  %v3339 = vunpack.c.l.b16 %v3307
  %v3340 = vunpack.c.l.b16 %v3308
  %v3341 = vunpack.c.l.b16 %v3309
  %v3342 = vunpack.c.l.b16 %v3310
  %v3343 = vpack.c.b16 %v3328, %v3327
  %v3344 = vpack.c.b16 %v3330, %v3329
  %v3345 = vpack.c.b16 %v3332, %v3331
  %v3346 = vpack.c.b16 %v3334, %v3333
  %v3347 = vpack.c.b16 %v3336, %v3335
  %v3348 = vpack.c.b16 %v3338, %v3337
  %v3349 = vpack.c.b16 %v3340, %v3339
  %v3350 = vpack.c.b16 %v3342, %v3341
  %3359 = vmatpush.bf16.msra.mxu0 %v3350
  %3360 = vmatpush.bf16.msra.mxu0 %v3349
  %3361 = vmatpush.bf16.msra.mxu0 %v3348
  %3362 = vmatpush.bf16.msra.mxu0 %v3347
  %3363 = vmatpush.bf16.msra.mxu0 %v3346
  %3364 = vmatpush.bf16.msra.mxu0 %v3345
  %3365 = vmatpush.bf16.msra.mxu0 %v3344
  %3366 = vmatpush.bf16.msra.mxu0 %v3343
  %3367 = vmatmul.bf16.gmra.mxu0 %v2848
  %v3368 = vpop.f32.mrf.mxu0
  %v3369 = vadd.f32 0.0, %v3368
  %v3370 = vpop.f32.mrf.mxu0
  %v3371 = vadd.f32 0.0, %v3370
  %3372 = vmatmul.bf16.gmra.mxu0 %v3293
  %v3373 = vpop.f32.mrf.mxu0
  %v3374 = vadd.f32 0.0, %v3373
  %v3375 = vpop.f32.mrf.mxu0
  %v3376 = vadd.f32 0.0, %v3375
  %3377 = vdwg.mxu0
  %v3378 = vadd.f32 %v3289, %v3369
  %v3379 = vadd.f32 %v3290, %v3371
  %v3380 = vadd.f32 %v3291, %v3374
  %v3381 = vadd.f32 %v3292, %v3376
  %v3382 = vpack.c.bf16 %v1337, %v1336
  %s3383 = scalar_lea.vmem %s2, 1472
  %v3384 = vld [vmem:[%s3383] sm:$0xf]
  %v3385 = vld [vmem:[%s3383 + $0x4] sm:$0xf]
  %v3386 = vld [vmem:[%s3383 + $0x8] sm:$0xf]
  %v3387 = vld [vmem:[%s3383 + $0xc] sm:$0xf]
  %v3388 = vld [vmem:[%s3383 + $0x10] sm:$0xf]
  %v3389 = vld [vmem:[%s3383 + $0x14] sm:$0xf]
  %v3390 = vld [vmem:[%s3383 + $0x18] sm:$0xf]
  %v3391 = vld [vmem:[%s3383 + $0x1c] sm:$0xf]
  %v3392 = vld [vmem:[%s3383 + $0x20] sm:$0xf]
  %v3393 = vld [vmem:[%s3383 + $0x24] sm:$0xf]
  %v3394 = vld [vmem:[%s3383 + $0x28] sm:$0xf]
  %v3395 = vld [vmem:[%s3383 + $0x2c] sm:$0xf]
  %v3396 = vld [vmem:[%s3383 + $0x30] sm:$0xf]
  %v3397 = vld [vmem:[%s3383 + $0x34] sm:$0xf]
  %v3398 = vld [vmem:[%s3383 + $0x38] sm:$0xf]
  %v3399 = vld [vmem:[%s3383 + $0x3c] sm:$0xf]
  %v3416 = vunpack.c.l.b16 %v3384
  %v3417 = vunpack.c.l.b16 %v3385
  %v3418 = vunpack.c.l.b16 %v3386
  %v3419 = vunpack.c.l.b16 %v3387
  %v3420 = vunpack.c.l.b16 %v3388
  %v3421 = vunpack.c.l.b16 %v3389
  %v3422 = vunpack.c.l.b16 %v3390
  %v3423 = vunpack.c.l.b16 %v3391
  %v3424 = vunpack.c.l.b16 %v3392
  %v3425 = vunpack.c.l.b16 %v3393
  %v3426 = vunpack.c.l.b16 %v3394
  %v3427 = vunpack.c.l.b16 %v3395
  %v3428 = vunpack.c.l.b16 %v3396
  %v3429 = vunpack.c.l.b16 %v3397
  %v3430 = vunpack.c.l.b16 %v3398
  %v3431 = vunpack.c.l.b16 %v3399
  %v3432 = vpack.c.b16 %v3417, %v3416
  %v3433 = vpack.c.b16 %v3419, %v3418
  %v3434 = vpack.c.b16 %v3421, %v3420
  %v3435 = vpack.c.b16 %v3423, %v3422
  %v3436 = vpack.c.b16 %v3425, %v3424
  %v3437 = vpack.c.b16 %v3427, %v3426
  %v3438 = vpack.c.b16 %v3429, %v3428
  %v3439 = vpack.c.b16 %v3431, %v3430
  %3448 = vmatpush.bf16.msra.mxu0 %v3439
  %3449 = vmatpush.bf16.msra.mxu0 %v3438
  %3450 = vmatpush.bf16.msra.mxu0 %v3437
  %3451 = vmatpush.bf16.msra.mxu0 %v3436
  %3452 = vmatpush.bf16.msra.mxu0 %v3435
  %3453 = vmatpush.bf16.msra.mxu0 %v3434
  %3454 = vmatpush.bf16.msra.mxu0 %v3433
  %3455 = vmatpush.bf16.msra.mxu0 %v3432
  %3456 = vmatmul.bf16.gmra.mxu0 %v2937
  %v3457 = vpop.f32.mrf.mxu0
  %v3458 = vadd.f32 0.0, %v3457
  %v3459 = vpop.f32.mrf.mxu0
  %v3460 = vadd.f32 0.0, %v3459
  %3461 = vmatmul.bf16.gmra.mxu0 %v3382
  %v3462 = vpop.f32.mrf.mxu0
  %v3463 = vadd.f32 0.0, %v3462
  %v3464 = vpop.f32.mrf.mxu0
  %v3465 = vadd.f32 0.0, %v3464
  %3466 = vdwg.mxu0
  %v3467 = vadd.f32 %v3378, %v3458
  %v3468 = vadd.f32 %v3379, %v3460
  %v3469 = vadd.f32 %v3380, %v3463
  %v3470 = vadd.f32 %v3381, %v3465
  %v3471 = vpack.c.bf16 %v1338, %v1337
  %s3472 = scalar_lea.vmem %s2, 1536
  %v3473 = vld [vmem:[%s3472] sm:$0xf]
  %v3474 = vld [vmem:[%s3472 + $0x4] sm:$0xf]
  %v3475 = vld [vmem:[%s3472 + $0x8] sm:$0xf]
  %v3476 = vld [vmem:[%s3472 + $0xc] sm:$0xf]
  %v3477 = vld [vmem:[%s3472 + $0x10] sm:$0xf]
  %v3478 = vld [vmem:[%s3472 + $0x14] sm:$0xf]
  %v3479 = vld [vmem:[%s3472 + $0x18] sm:$0xf]
  %v3480 = vld [vmem:[%s3472 + $0x1c] sm:$0xf]
  %v3481 = vld [vmem:[%s3472 + $0x20] sm:$0xf]
  %v3482 = vld [vmem:[%s3472 + $0x24] sm:$0xf]
  %v3483 = vld [vmem:[%s3472 + $0x28] sm:$0xf]
  %v3484 = vld [vmem:[%s3472 + $0x2c] sm:$0xf]
  %v3485 = vld [vmem:[%s3472 + $0x30] sm:$0xf]
  %v3486 = vld [vmem:[%s3472 + $0x34] sm:$0xf]
  %v3487 = vld [vmem:[%s3472 + $0x38] sm:$0xf]
  %v3488 = vld [vmem:[%s3472 + $0x3c] sm:$0xf]
  %v3505 = vunpack.c.l.b16 %v3473
  %v3506 = vunpack.c.l.b16 %v3474
  %v3507 = vunpack.c.l.b16 %v3475
  %v3508 = vunpack.c.l.b16 %v3476
  %v3509 = vunpack.c.l.b16 %v3477
  %v3510 = vunpack.c.l.b16 %v3478
  %v3511 = vunpack.c.l.b16 %v3479
  %v3512 = vunpack.c.l.b16 %v3480
  %v3513 = vunpack.c.l.b16 %v3481
  %v3514 = vunpack.c.l.b16 %v3482
  %v3515 = vunpack.c.l.b16 %v3483
  %v3516 = vunpack.c.l.b16 %v3484
  %v3517 = vunpack.c.l.b16 %v3485
  %v3518 = vunpack.c.l.b16 %v3486
  %v3519 = vunpack.c.l.b16 %v3487
  %v3520 = vunpack.c.l.b16 %v3488
  %v3521 = vpack.c.b16 %v3506, %v3505
  %v3522 = vpack.c.b16 %v3508, %v3507
  %v3523 = vpack.c.b16 %v3510, %v3509
  %v3524 = vpack.c.b16 %v3512, %v3511
  %v3525 = vpack.c.b16 %v3514, %v3513
  %v3526 = vpack.c.b16 %v3516, %v3515
  %v3527 = vpack.c.b16 %v3518, %v3517
  %v3528 = vpack.c.b16 %v3520, %v3519
  %3537 = vmatpush.bf16.msra.mxu0 %v3528
  %3538 = vmatpush.bf16.msra.mxu0 %v3527
  %3539 = vmatpush.bf16.msra.mxu0 %v3526
  %3540 = vmatpush.bf16.msra.mxu0 %v3525
  %3541 = vmatpush.bf16.msra.mxu0 %v3524
  %3542 = vmatpush.bf16.msra.mxu0 %v3523
  %3543 = vmatpush.bf16.msra.mxu0 %v3522
  %3544 = vmatpush.bf16.msra.mxu0 %v3521
  %3545 = vmatmul.bf16.gmra.mxu0 %v3026
  %v3546 = vpop.f32.mrf.mxu0
  %v3547 = vadd.f32 0.0, %v3546
  %v3548 = vpop.f32.mrf.mxu0
  %v3549 = vadd.f32 0.0, %v3548
  %3550 = vmatmul.bf16.gmra.mxu0 %v3471
  %v3551 = vpop.f32.mrf.mxu0
  %v3552 = vadd.f32 0.0, %v3551
  %v3553 = vpop.f32.mrf.mxu0
  %v3554 = vadd.f32 0.0, %v3553
  %3555 = vdwg.mxu0
  %v3556 = vadd.f32 %v3467, %v3547
  %v3557 = vadd.f32 %v3468, %v3549
  %v3558 = vadd.f32 %v3469, %v3552
  %v3559 = vadd.f32 %v3470, %v3554
  %v3560 = vmax.f32 %v3556, %v3557
  %v3561 = vmax.f32 %v3558, %v3559
  %v3562 = vmax.f32 %v3560, %v3561
  %v3563 = vperm.slane %v24, 1
  %v3564 = vadd.f32 %v3562, %v3563
  %v3565 = vmax.f32 %v3564, 0.0
  %v3566 = vpack.c.bf16 %v3565, %v3565
  %v3567 = vld [vmem:[%s3] sm:$0xf]
  %v3568 = vld [vmem:[%s3 + $0x4] sm:$0xf]
  %v3569 = vld [vmem:[%s3 + $0x8] sm:$0xf]
  %v3570 = vld [vmem:[%s3 + $0xc] sm:$0xf]
  %v3571 = vld [vmem:[%s3 + $0x10] sm:$0xf]
  %v3572 = vld [vmem:[%s3 + $0x14] sm:$0xf]
  %v3573 = vld [vmem:[%s3 + $0x18] sm:$0xf]
  %v3574 = vld [vmem:[%s3 + $0x1c] sm:$0xf]
  %v3575 = vld [vmem:[%s3 + $0x20] sm:$0xf]
  %v3576 = vld [vmem:[%s3 + $0x24] sm:$0xf]
  %v3577 = vld [vmem:[%s3 + $0x28] sm:$0xf]
  %v3578 = vld [vmem:[%s3 + $0x2c] sm:$0xf]
  %v3579 = vld [vmem:[%s3 + $0x30] sm:$0xf]
  %v3580 = vld [vmem:[%s3 + $0x34] sm:$0xf]
  %v3581 = vld [vmem:[%s3 + $0x38] sm:$0xf]
  %v3582 = vld [vmem:[%s3 + $0x3c] sm:$0xf]
  %v3583 = vperm.slane %v24, 2
  %v3600 = vunpack.c.l.b16 %v3567
  %v3601 = vunpack.c.l.b16 %v3568
  %v3602 = vunpack.c.l.b16 %v3569
  %v3603 = vunpack.c.l.b16 %v3570
  %v3604 = vunpack.c.l.b16 %v3571
  %v3605 = vunpack.c.l.b16 %v3572
  %v3606 = vunpack.c.l.b16 %v3573
  %v3607 = vunpack.c.l.b16 %v3574
  %v3608 = vunpack.c.l.b16 %v3575
  %v3609 = vunpack.c.l.b16 %v3576
  %v3610 = vunpack.c.l.b16 %v3577
  %v3611 = vunpack.c.l.b16 %v3578
  %v3612 = vunpack.c.l.b16 %v3579
  %v3613 = vunpack.c.l.b16 %v3580
  %v3614 = vunpack.c.l.b16 %v3581
  %v3615 = vunpack.c.l.b16 %v3582
  %v3616 = vpack.c.b16 %v3601, %v3600
  %v3617 = vpack.c.b16 %v3603, %v3602
  %v3618 = vpack.c.b16 %v3605, %v3604
  %v3619 = vpack.c.b16 %v3607, %v3606
  %v3620 = vpack.c.b16 %v3609, %v3608
  %v3621 = vpack.c.b16 %v3611, %v3610
  %v3622 = vpack.c.b16 %v3613, %v3612
  %v3623 = vpack.c.b16 %v3615, %v3614
  %3632 = vmatpush.bf16.msra.mxu0 %v3623
  %3633 = vmatpush.bf16.msra.mxu0 %v3622
  %3634 = vmatpush.bf16.msra.mxu0 %v3621
  %3635 = vmatpush.bf16.msra.mxu0 %v3620
  %3636 = vmatpush.bf16.msra.mxu0 %v3619
  %3637 = vmatpush.bf16.msra.mxu0 %v3618
  %3638 = vmatpush.bf16.msra.mxu0 %v3617
  %3639 = vmatpush.bf16.msra.mxu0 %v3616
  %3640 = vmatmul.bf16.gmra.mxu0 %v3566
  %v3641 = vpop.f32.mrf.mxu0
  %v3642 = vadd.f32 %v3583, %v3641
  %v3643 = vpop.f32.mrf.mxu0
  %3644 = vdwg.mxu0
  %v3645 = vmax.f32 %v3642, 0.0
  %v3646 = vpack.c.bf16 %v3645, %v3645
  %v3647 = vld [vmem:[%s4] sm:$0xf]
  %v3648 = vld [vmem:[%s4 + $0x4] sm:$0xf]
  %v3649 = vld [vmem:[%s4 + $0x8] sm:$0xf]
  %v3650 = vld [vmem:[%s4 + $0xc] sm:$0xf]
  %v3651 = vld [vmem:[%s4 + $0x10] sm:$0xf]
  %v3652 = vld [vmem:[%s4 + $0x14] sm:$0xf]
  %v3653 = vld [vmem:[%s4 + $0x18] sm:$0xf]
  %v3654 = vld [vmem:[%s4 + $0x1c] sm:$0xf]
  %v3655 = vld [vmem:[%s4 + $0x20] sm:$0xf]
  %v3656 = vld [vmem:[%s4 + $0x24] sm:$0xf]
  %v3657 = vld [vmem:[%s4 + $0x28] sm:$0xf]
  %v3658 = vld [vmem:[%s4 + $0x2c] sm:$0xf]
  %v3659 = vld [vmem:[%s4 + $0x30] sm:$0xf]
  %v3660 = vld [vmem:[%s4 + $0x34] sm:$0xf]
  %v3661 = vld [vmem:[%s4 + $0x38] sm:$0xf]
  %v3662 = vld [vmem:[%s4 + $0x3c] sm:$0xf]
  %v3663 = vperm.slane %v24, 3
  %v3680 = vunpack.c.l.b16 %v3647
  %v3681 = vunpack.c.l.b16 %v3648
  %v3682 = vunpack.c.l.b16 %v3649
  %v3683 = vunpack.c.l.b16 %v3650
  %v3684 = vunpack.c.l.b16 %v3651
  %v3685 = vunpack.c.l.b16 %v3652
  %v3686 = vunpack.c.l.b16 %v3653
  %v3687 = vunpack.c.l.b16 %v3654
  %v3688 = vunpack.c.l.b16 %v3655
  %v3689 = vunpack.c.l.b16 %v3656
  %v3690 = vunpack.c.l.b16 %v3657
  %v3691 = vunpack.c.l.b16 %v3658
  %v3692 = vunpack.c.l.b16 %v3659
  %v3693 = vunpack.c.l.b16 %v3660
  %v3694 = vunpack.c.l.b16 %v3661
  %v3695 = vunpack.c.l.b16 %v3662
  %v3696 = vpack.c.b16 %v3681, %v3680
  %v3697 = vpack.c.b16 %v3683, %v3682
  %v3698 = vpack.c.b16 %v3685, %v3684
  %v3699 = vpack.c.b16 %v3687, %v3686
  %v3700 = vpack.c.b16 %v3689, %v3688
  %v3701 = vpack.c.b16 %v3691, %v3690
  %v3702 = vpack.c.b16 %v3693, %v3692
  %v3703 = vpack.c.b16 %v3695, %v3694
  %3712 = vmatpush.bf16.msra.mxu0 %v3703
  %3713 = vmatpush.bf16.msra.mxu0 %v3702
  %3714 = vmatpush.bf16.msra.mxu0 %v3701
  %3715 = vmatpush.bf16.msra.mxu0 %v3700
  %3716 = vmatpush.bf16.msra.mxu0 %v3699
  %3717 = vmatpush.bf16.msra.mxu0 %v3698
  %3718 = vmatpush.bf16.msra.mxu0 %v3697
  %3719 = vmatpush.bf16.msra.mxu0 %v3696
  %3720 = vmatmul.bf16.gmra.mxu0 %v3646
  %v3721 = vpop.f32.mrf.mxu0
  %v3722 = vadd.f32 %v3663, %v3721
  %v3723 = vpop.f32.mrf.mxu0
  %3724 = vdwg.mxu0
  %3725 = vst [vmem:[%s6] sm:$0xff] %v3722
  // Predicated region
  $region26: #{l0_lenet5_forward.1} parent=0 // pred_check
    _
  $region27: #{l0_lenet5_forward.1} parent=0 // pred_check_branch
    %3727 = sbr.rel (0) target = $region29
  $region28: #{l0_lenet5_forward.1} parent=0 // pred_region
    _
  $region29: #{l0_lenet5_forward.1} parent=0 // pred_fallthru
    _
  // Predicated region
  $region30: #{l0_lenet5_forward.1} parent=0 // pred_check
    _
  $region31: #{l0_lenet5_forward.1} parent=0 // pred_check_branch
    %3729 = sbr.rel (0) target = $region33
  $region32: #{l0_lenet5_forward.1} parent=0 // pred_region
    _
  $region33: #{l0_lenet5_forward.1} parent=0 // pred_fallthru
    _

</llo_original>
